<compile_context>
chip_gen: v7x
topology: tpu7x:2x2x1
jax: 0.10.0
libtpu: 0.0.40
codegen_flags: <defaults>
</compile_context>

<pallas_src>
import functools

import jax
import jax.numpy as jnp
from jax import lax
from jax.experimental import pallas as pl
from jax.experimental.pallas import tpu as pltpu


# ---------------------------------------------------------------------------
# Fused CGLS Pallas kernel (grid-less, everything VMEM-resident)
# ---------------------------------------------------------------------------

def _cgls_kernel(a_ref, at_ref, m_ref, mt_ref, b_ref, x0_ref,   # inputs  (VMEM)
                 x_ref, r_ref,                                  # outputs (VMEM)
                 p_ref, gamma_ref, conv_s,                      # scratch
                 *, n_iter, eps_sq):
    f32 = jnp.float32

    def for_op(v):      # A @ V @ M
        t = jnp.dot(a_ref[...], v, preferred_element_type=f32)
        return jnp.dot(t, m_ref[...], preferred_element_type=f32)

    def adj_op(v):      # A^T @ V @ M^T
        t = jnp.dot(at_ref[...], v, preferred_element_type=f32)
        return jnp.dot(t, mt_ref[...], preferred_element_type=f32)

    def ssq_v(v):       # ||V||_F^2 as a (1,1) vreg value (stays vector-side)
        return jnp.sum(v * v, keepdims=True)

    # ----- initialization (matches reference pre-loop code) -----
    b = b_ref[...]
    x0 = x0_ref[...]
    x_ref[...] = x0
    r0 = b - for_op(x0)
    r_ref[...] = r0

    # eps^2 * ||b||^2  (avoids per-iteration divide); scalar form for the
    # convergence flag only, everything feeding vector math stays (1,1).
    thresh = f32(eps_sq) * jnp.sum(b * b)
    conv_s[0] = jnp.where(jnp.sum(r0 * r0) < thresh, jnp.int32(1), jnp.int32(0))

    s0 = adj_op(r0)
    p_ref[...] = s0
    gamma_ref[...] = ssq_v(s0)

    # ----- CGLS iterations, fully on-chip, fully unrolled -----
    def body(k, carry):
        # Reference early-returns are emulated by skipping the whole body once
        # converged (x/r already hold the values the reference would return).
        @pl.when(conv_s[0] == 0)
        def _():
            p = p_ref[...]
            gamma = gamma_ref[...]                       # (1,1) vector-side
            q = for_op(p)
            delta = ssq_v(q)                             # (1,1)
            # Like the PyTorch reference, no epsilon guard on the divides;
            # they only run on un-converged iterations.
            alpha = gamma / delta                        # (1,1) broadcast mult
            x_ref[...] = x_ref[...] + alpha * p
            r_new = r_ref[...] - alpha * q
            r_ref[...] = r_new

            # Unconditional p/gamma refresh: if the convergence test below
            # trips, conv_s flips and no later iteration reads p/gamma, so the
            # returned (x, r) match the reference exactly while the adjoint
            # matmuls overlap the residual reduction / compare.
            s = adj_op(r_new)
            gamma_new = ssq_v(s)                         # (1,1)
            beta = gamma_new / gamma                     # (1,1)
            p_ref[...] = s + beta * p
            gamma_ref[...] = gamma_new

            conv_s[0] = jnp.where(jnp.sum(r_new * r_new) < thresh,
                                  jnp.int32(1), jnp.int32(0))
        return carry

    lax.fori_loop(0, n_iter, body, None, unroll=True)


# ---------------------------------------------------------------------------
# graph_CGLS.forward wrapper
# ---------------------------------------------------------------------------

@functools.partial(jax.jit, static_argnames=("n_cgls_iter", "eps"))
def graph_cgls_forward(b, xref, edge_index, edge_weights, mix,
                       n_cgls_iter=10, eps=0.01):
    """Replicates graph_CGLS.forward (emb=False path).

    The reference's data-dependent early returns are reproduced by an SMEM
    convergence flag that gates (skips) the whole iteration body once
    ||r||^2 < eps^2 * ||b||^2, which yields identical returned (x, r).
    """
    n, f = xref.shape
    fp = ((f + 127) // 128) * 128            # lane-dense feature padding

    # glue (plain JAX): adjacency scatter, hoisted transposes, zero-padding
    a = jnp.zeros((n, n), jnp.float32).at[edge_index[0], edge_index[1]].add(
        edge_weights.astype(jnp.float32))
    at = a.T
    m_pad = jnp.zeros((fp, fp), jnp.float32).at[:f, :f].set(mix.astype(jnp.float32))
    mt_pad = m_pad.T
    b_pad = jnp.zeros((n, fp), jnp.float32).at[:, :f].set(b.astype(jnp.float32))
    x0_pad = jnp.zeros((n, fp), jnp.float32).at[:, :f].set(xref.astype(jnp.float32))

    kernel = functools.partial(_cgls_kernel,
                               n_iter=int(n_cgls_iter),
                               eps_sq=float(eps) ** 2)

    vmem = pl.BlockSpec(memory_space=pltpu.MemorySpace.VMEM)

    x_pad, r_pad = pl.pallas_call(
        kernel,
        out_shape=(jax.ShapeDtypeStruct((n, fp), jnp.float32),
                   jax.ShapeDtypeStruct((n, fp), jnp.float32)),
        in_specs=[vmem] * 6,                 # A, A^T, M, M^T, b, x0  (single-buffered)
        out_specs=(vmem, vmem),              # x, r
        scratch_shapes=[
            pltpu.VMEM((n, fp), jnp.float32),   # p
            pltpu.VMEM((1, 1), jnp.float32),    # gamma (vector-side)
            pltpu.SMEM((1,), jnp.int32),        # converged flag (pl.when gate)
        ],
    )(a, at, m_pad, mt_pad, b_pad, x0_pad)

    return x_pad[:, :f], r_pad[:, :f]


# ---------------------------------------------------------------------------
# Pure-JAX reference (same freeze-on-convergence semantics) for validation
# ---------------------------------------------------------------------------

def _cgls_reference(b, xref, a, mix, n_iter, eps):
    for_op = lambda v: a @ v @ mix
    adj_op = lambda v: a.T @ v @ mix.T
    ssq = lambda v: jnp.sum(v * v)

    thresh = jnp.float32(eps) ** 2 * ssq(b)
    x = xref
    r = b - for_op(x)
    converged = ssq(r) < thresh
    s = adj_op(r)
    p = s
    gamma = ssq(s)
    for _ in range(n_iter):
        q = for_op(p)
        alpha = gamma / ssq(q)
        x = jnp.where(converged, x, x + alpha * p)
        r = jnp.where(converged, r, r - alpha * q)
        now_conv = ssq(r) < thresh
        s_new = adj_op(r)
        gamma_new = ssq(s_new)
        beta = gamma_new / gamma
        conv_after = jnp.logical_or(converged, now_conv)
        p = jnp.where(conv_after, p, s_new + beta * p)
        gamma = jnp.where(conv_after, gamma, gamma_new)
        converged = conv_after
    return x, r


# ---------------------------------------------------------------------------
# main
# ---------------------------------------------------------------------------

if __name__ == "__main__":
    key = jax.random.PRNGKey(0)
    N, F, E = 16, 32, 64  # nodes, features, edges

    k_m, k_ei0, k_ei1, k_w, k_xt = jax.random.split(key, 5)

    # deterministic synthetic forOp parameters
    mix = (jax.random.normal(k_m, (F, F), jnp.float32) / jnp.sqrt(F)
           + jnp.eye(F, dtype=jnp.float32))

    edge_index = jnp.stack([
        jax.random.randint(k_ei0, (E,), 0, N),
        jax.random.randint(k_ei1, (E,), 0, N),
    ]).astype(jnp.int32)
    edge_weights = jax.random.uniform(k_w, (E,), jnp.float32, 0.1, 1.0)

    # build b = forOp(x_true) so the CGLS problem is well-posed
    a_dense = jnp.zeros((N, N), jnp.float32).at[
        edge_index[0], edge_index[1]].add(edge_weights)
    x_true = jax.random.normal(k_xt, (N, F), jnp.float32)
    b = a_dense @ x_true @ mix

    xref = jnp.zeros((N, F), jnp.float32)

    x_out, r_out = graph_cgls_forward(b, xref, edge_index, edge_weights, mix,
                                      n_cgls_iter=10, eps=0.01)
    jax.block_until_ready((x_out, r_out))

    assert x_out.shape == (N, F) and r_out.shape == (N, F)
    assert bool(jnp.all(jnp.isfinite(x_out))) and bool(jnp.all(jnp.isfinite(r_out)))

    # loose numerical check against a pure-JAX implementation (f32 matmul
    # precision differs slightly between XLA and the MXU path)
    x_ref, r_ref = _cgls_reference(b, xref, a_dense, mix, n_iter=10, eps=0.01)
    assert bool(jnp.allclose(x_out, x_ref, rtol=5e-2, atol=5e-2))
    assert bool(jnp.allclose(r_out, r_ref, rtol=5e-2, atol=5e-2))

    print("KERNEL_OK")
</pallas_src>

<mosaic_0001>
module attributes {stable_mosaic.version = 11 : i64} {
  func.func private @main(%arg0: i32) attributes {dimension_semantics = [#tpu.dimension_semantics<core_parallel>], iteration_bounds = array<i64: 2>, tpu.core_type = #tpu.core_type<sc_scalar_subcore>, window_params = []} {
    return
  }
}

module attributes {stable_mosaic.version = 11 : i64} {
  func.func private @main(%arg0: i32) attributes {dimension_semantics = [#tpu.dimension_semantics<core_parallel>], iteration_bounds = array<i64: 2>, tpu.core_type = #tpu.core_type<sc_scalar_subcore>, window_params = []} {
    return
  }
}

module attributes {stable_mosaic.version = 11 : i64} {
  func.func @_cgls_kernel(%arg0: memref<16x16xf32, #tpu.memory_space<vmem>>, %arg1: memref<16x16xf32, #tpu.memory_space<vmem>>, %arg2: memref<128x128xf32, #tpu.memory_space<vmem>>, %arg3: memref<128x128xf32, #tpu.memory_space<vmem>>, %arg4: memref<16x128xf32, #tpu.memory_space<vmem>>, %arg5: memref<16x128xf32, #tpu.memory_space<vmem>>, %arg6: memref<16x128xf32, #tpu.memory_space<vmem>>, %arg7: memref<16x128xf32, #tpu.memory_space<vmem>>, %arg8: memref<16x128xf32, #tpu.memory_space<vmem>>, %arg9: memref<1x1xf32, #tpu.memory_space<vmem>>, %arg10: memref<1xi32, #tpu.memory_space<smem>>) attributes {dimension_semantics = [], scalar_prefetch = 0 : i64, scratch_operands = 3 : i64, tpu.core_type = #tpu.core_type<tc>} {
    %c0 = arith.constant 0 : index
    %c0_0 = arith.constant 0 : index
    %0 = vector.load %arg4[%c0, %c0_0] : memref<16x128xf32, #tpu.memory_space<vmem>>, vector<16x128xf32>
    %c0_1 = arith.constant 0 : index
    %c0_2 = arith.constant 0 : index
    %1 = vector.load %arg5[%c0_1, %c0_2] : memref<16x128xf32, #tpu.memory_space<vmem>>, vector<16x128xf32>
    %c0_3 = arith.constant 0 : index
    %c0_4 = arith.constant 0 : index
    %2 = vector.load %arg6[%c0_3, %c0_4] : memref<16x128xf32, #tpu.memory_space<vmem>>, vector<16x128xf32>
    tpu.vector_store %arg6[%c0_3, %c0_4], %1 {strides = array<i32>} : memref<16x128xf32, #tpu.memory_space<vmem>>, vector<16x128xf32>,
    %c0_5 = arith.constant 0 : index
    %c0_6 = arith.constant 0 : index
    %3 = vector.load %arg0[%c0_5, %c0_6] : memref<16x16xf32, #tpu.memory_space<vmem>>, vector<16x16xf32>
    %cst = arith.constant dense<0.000000e+00> : vector<16x128xf32>
    %4 = tpu.matmul %3, %1, %cst {dimension_numbers = #tpu.dot_dimension_numbers<[1], [0], [0], [1], [0, 0, 1, 1], [], []>} : vector<16x16xf32>, vector<16x128xf32>, vector<16x128xf32> -> vector<16x128xf32>
    %c0_7 = arith.constant 0 : index
    %c0_8 = arith.constant 0 : index
    %5 = vector.load %arg2[%c0_7, %c0_8] : memref<128x128xf32, #tpu.memory_space<vmem>>, vector<128x128xf32>
    %cst_9 = arith.constant dense<0.000000e+00> : vector<16x128xf32>
    %6 = tpu.matmul %4, %5, %cst_9 {dimension_numbers = #tpu.dot_dimension_numbers<[1], [0], [0], [1], [0, 0, 1, 1], [], []>} : vector<16x128xf32>, vector<128x128xf32>, vector<16x128xf32> -> vector<16x128xf32>
    %7 = arith.subf %0, %6 : vector<16x128xf32>
    %c0_10 = arith.constant 0 : index
    %c0_11 = arith.constant 0 : index
    %8 = vector.load %arg7[%c0_10, %c0_11] : memref<16x128xf32, #tpu.memory_space<vmem>>, vector<16x128xf32>
    tpu.vector_store %arg7[%c0_10, %c0_11], %7 {strides = array<i32>} : memref<16x128xf32, #tpu.memory_space<vmem>>, vector<16x128xf32>,
    %9 = arith.mulf %0, %0 : vector<16x128xf32>
    %10 = vector.shape_cast %9 : vector<16x128xf32> to vector<1x16x128xf32>
    %cst_12 = arith.constant dense<0.000000e+00> : vector<1xf32>
    %11 = vector.multi_reduction <add>, %10, %cst_12 [1, 2] : vector<1x16x128xf32> to vector<1xf32>
    %12 = vector.shape_cast %11 : vector<1xf32> to vector<1x1x1xf32>
    %13 = vector.extract %12[0, 0, 0] : f32 from vector<1x1x1xf32>
    %cst_13 = arith.constant 9.99999974E-5 : f32
    %14 = arith.mulf %cst_13, %13 : f32
    %15 = arith.mulf %7, %7 : vector<16x128xf32>
    %16 = vector.shape_cast %15 : vector<16x128xf32> to vector<1x16x128xf32>
    %cst_14 = arith.constant dense<0.000000e+00> : vector<1xf32>
    %17 = vector.multi_reduction <add>, %16, %cst_14 [1, 2] : vector<1x16x128xf32> to vector<1xf32>
    %18 = vector.shape_cast %17 : vector<1xf32> to vector<1x1x1xf32>
    %19 = vector.extract %18[0, 0, 0] : f32 from vector<1x1x1xf32>
    %20 = arith.cmpf olt, %19, %14 : f32
    %c1_i32 = arith.constant 1 : i32
    %c0_i32 = arith.constant 0 : i32
    %21 = arith.select %20, %c1_i32, %c0_i32 : i32
    %c0_15 = arith.constant 0 : index
    %22 = memref.load %arg10[%c0_15] : memref<1xi32, #tpu.memory_space<smem>>
    memref.store %21, %arg10[%c0_15] : memref<1xi32, #tpu.memory_space<smem>>
    %c0_16 = arith.constant 0 : index
    %c0_17 = arith.constant 0 : index
    %23 = vector.load %arg1[%c0_16, %c0_17] : memref<16x16xf32, #tpu.memory_space<vmem>>, vector<16x16xf32>
    %cst_18 = arith.constant dense<0.000000e+00> : vector<16x128xf32>
    %24 = tpu.matmul %23, %7, %cst_18 {dimension_numbers = #tpu.dot_dimension_numbers<[1], [0], [0], [1], [0, 0, 1, 1], [], []>} : vector<16x16xf32>, vector<16x128xf32>, vector<16x128xf32> -> vector<16x128xf32>
    %c0_19 = arith.constant 0 : index
    %c0_20 = arith.constant 0 : index
    %25 = vector.load %arg3[%c0_19, %c0_20] : memref<128x128xf32, #tpu.memory_space<vmem>>, vector<128x128xf32>
    %cst_21 = arith.constant dense<0.000000e+00> : vector<16x128xf32>
    %26 = tpu.matmul %24, %25, %cst_21 {dimension_numbers = #tpu.dot_dimension_numbers<[1], [0], [0], [1], [0, 0, 1, 1], [], []>} : vector<16x128xf32>, vector<128x128xf32>, vector<16x128xf32> -> vector<16x128xf32>
    %c0_22 = arith.constant 0 : index
    %c0_23 = arith.constant 0 : index
    %27 = vector.load %arg8[%c0_22, %c0_23] : memref<16x128xf32, #tpu.memory_space<vmem>>, vector<16x128xf32>
    tpu.vector_store %arg8[%c0_22, %c0_23], %26 {strides = array<i32>} : memref<16x128xf32, #tpu.memory_space<vmem>>, vector<16x128xf32>,
    %28 = arith.mulf %26, %26 : vector<16x128xf32>
    %29 = vector.shape_cast %28 : vector<16x128xf32> to vector<1x16x128xf32>
    %cst_24 = arith.constant dense<0.000000e+00> : vector<1xf32>
    %30 = vector.multi_reduction <add>, %29, %cst_24 [1, 2] : vector<1x16x128xf32> to vector<1xf32>
    %31 = vector.shape_cast %30 : vector<1xf32> to vector<1x1x1xf32>
    %32 = vector.extract %31[0, 0, 0] : f32 from vector<1x1x1xf32>
    %33 = vector.broadcast %32 : f32 to vector<1x1xf32>
    %c0_25 = arith.constant 0 : index
    %c0_26 = arith.constant 0 : index
    %34 = vector.load %arg9[%c0_25, %c0_26] : memref<1x1xf32, #tpu.memory_space<vmem>>, vector<1x1xf32>
    tpu.vector_store %arg9[%c0_25, %c0_26], %33 {strides = array<i32>} : memref<1x1xf32, #tpu.memory_space<vmem>>, vector<1x1xf32>,
    %c0_i32_27 = arith.constant 0 : i32
    %c0_28 = arith.constant 0 : index
    %35 = memref.load %arg10[%c0_28] : memref<1xi32, #tpu.memory_space<smem>>
    %c0_i32_29 = arith.constant 0 : i32
    %36 = arith.cmpi eq, %35, %c0_i32_29 : i32
    %37 = arith.extui %36 : i1 to i32
    %c0_i32_30 = arith.constant 0 : i32
    %38 = arith.cmpi ne, %37, %c0_i32_30 : i32
    scf.if %38 {
      %c0_59 = arith.constant 0 : index
      %c0_60 = arith.constant 0 : index
      %75 = vector.load %arg8[%c0_59, %c0_60] : memref<16x128xf32, #tpu.memory_space<vmem>>, vector<16x128xf32>
      %c0_61 = arith.constant 0 : index
      %c0_62 = arith.constant 0 : index
      %76 = vector.load %arg9[%c0_61, %c0_62] : memref<1x1xf32, #tpu.memory_space<vmem>>, vector<1x1xf32>
      %c0_63 = arith.constant 0 : index
      %c0_64 = arith.constant 0 : index
      %77 = vector.load %arg0[%c0_63, %c0_64] : memref<16x16xf32, #tpu.memory_space<vmem>>, vector<16x16xf32>
      %cst_65 = arith.constant dense<0.000000e+00> : vector<16x128xf32>
      %78 = tpu.matmul %77, %75, %cst_65 {dimension_numbers = #tpu.dot_dimension_numbers<[1], [0], [0], [1], [0, 0, 1, 1], [], []>} : vector<16x16xf32>, vector<16x128xf32>, vector<16x128xf32> -> vector<16x128xf32>
      %c0_66 = arith.constant 0 : index
      %c0_67 = arith.constant 0 : index
      %79 = vector.load %arg2[%c0_66, %c0_67] : memref<128x128xf32, #tpu.memory_space<vmem>>, vector<128x128xf32>
      %cst_68 = arith.constant dense<0.000000e+00> : vector<16x128xf32>
      %80 = tpu.matmul %78, %79, %cst_68 {dimension_numbers = #tpu.dot_dimension_numbers<[1], [0], [0], [1], [0, 0, 1, 1], [], []>} : vector<16x128xf32>, vector<128x128xf32>, vector<16x128xf32> -> vector<16x128xf32>
      %81 = arith.mulf %80, %80 : vector<16x128xf32>
      %82 = vector.shape_cast %81 : vector<16x128xf32> to vector<1x16x128xf32>
      %cst_69 = arith.constant dense<0.000000e+00> : vector<1xf32>
      %83 = vector.multi_reduction <add>, %82, %cst_69 [1, 2] : vector<1x16x128xf32> to vector<1xf32>
      %84 = vector.shape_cast %83 : vector<1xf32> to vector<1x1x1xf32>
      %85 = vector.extract %84[0, 0, 0] : f32 from vector<1x1x1xf32>
      %86 = vector.broadcast %85 : f32 to vector<1x1xf32>
      %87 = arith.divf %76, %86 : vector<1x1xf32>
      %c0_70 = arith.constant 0 : index
      %c0_71 = arith.constant 0 : index
      %88 = vector.load %arg6[%c0_70, %c0_71] : memref<16x128xf32, #tpu.memory_space<vmem>>, vector<16x128xf32>
      %89 = vector.broadcast %87 : vector<1x1xf32> to vector<16x128xf32>
      %90 = arith.mulf %89, %75 : vector<16x128xf32>
      %91 = arith.addf %88, %90 : vector<16x128xf32>
      %c0_72 = arith.constant 0 : index
      %c0_73 = arith.constant 0 : index
      %92 = vector.load %arg6[%c0_72, %c0_73] : memref<16x128xf32, #tpu.memory_space<vmem>>, vector<16x128xf32>
      tpu.vector_store %arg6[%c0_72, %c0_73], %91 {strides = array<i32>} : memref<16x128xf32, #tpu.memory_space<vmem>>, vector<16x128xf32>,
      %c0_74 = arith.constant 0 : index
      %c0_75 = arith.constant 0 : index
      %93 = vector.load %arg7[%c0_74, %c0_75] : memref<16x128xf32, #tpu.memory_space<vmem>>, vector<16x128xf32>
      %94 = vector.broadcast %87 : vector<1x1xf32> to vector<16x128xf32>
      %95 = arith.mulf %94, %80 : vector<16x128xf32>
      %96 = arith.subf %93, %95 : vector<16x128xf32>
      %c0_76 = arith.constant 0 : index
      %c0_77 = arith.constant 0 : index
      %97 = vector.load %arg7[%c0_76, %c0_77] : memref<16x128xf32, #tpu.memory_space<vmem>>, vector<16x128xf32>
      tpu.vector_store %arg7[%c0_76, %c0_77], %96 {strides = array<i32>} : memref<16x128xf32, #tpu.memory_space<vmem>>, vector<16x128xf32>,
      %c0_78 = arith.constant 0 : index
      %c0_79 = arith.constant 0 : index
      %98 = vector.load %arg1[%c0_78, %c0_79] : memref<16x16xf32, #tpu.memory_space<vmem>>, vector<16x16xf32>
      %cst_80 = arith.constant dense<0.000000e+00> : vector<16x128xf32>
      %99 = tpu.matmul %98, %96, %cst_80 {dimension_numbers = #tpu.dot_dimension_numbers<[1], [0], [0], [1], [0, 0, 1, 1], [], []>} : vector<16x16xf32>, vector<16x128xf32>, vector<16x128xf32> -> vector<16x128xf32>
      %c0_81 = arith.constant 0 : index
      %c0_82 = arith.constant 0 : index
      %100 = vector.load %arg3[%c0_81, %c0_82] : memref<128x128xf32, #tpu.memory_space<vmem>>, vector<128x128xf32>
      %cst_83 = arith.constant dense<0.000000e+00> : vector<16x128xf32>
      %101 = tpu.matmul %99, %100, %cst_83 {dimension_numbers = #tpu.dot_dimension_numbers<[1], [0], [0], [1], [0, 0, 1, 1], [], []>} : vector<16x128xf32>, vector<128x128xf32>, vector<16x128xf32> -> vector<16x128xf32>
      %102 = arith.mulf %101, %101 : vector<16x128xf32>
      %103 = vector.shape_cast %102 : vector<16x128xf32> to vector<1x16x128xf32>
      %cst_84 = arith.constant dense<0.000000e+00> : vector<1xf32>
      %104 = vector.multi_reduction <add>, %103, %cst_84 [1, 2] : vector<1x16x128xf32> to vector<1xf32>
      %105 = vector.shape_cast %104 : vector<1xf32> to vector<1x1x1xf32>
      %106 = vector.extract %105[0, 0, 0] : f32 from vector<1x1x1xf32>
      %107 = vector.broadcast %106 : f32 to vector<1x1xf32>
      %108 = arith.divf %107, %76 : vector<1x1xf32>
      %109 = vector.broadcast %108 : vector<1x1xf32> to vector<16x128xf32>
      %110 = arith.mulf %109, %75 : vector<16x128xf32>
      %111 = arith.addf %101, %110 : vector<16x128xf32>
      %c0_85 = arith.constant 0 : index
      %c0_86 = arith.constant 0 : index
      %112 = vector.load %arg8[%c0_85, %c0_86] : memref<16x128xf32, #tpu.memory_space<vmem>>, vector<16x128xf32>
      tpu.vector_store %arg8[%c0_85, %c0_86], %111 {strides = array<i32>} : memref<16x128xf32, #tpu.memory_space<vmem>>, vector<16x128xf32>,
      %c0_87 = arith.constant 0 : index
      %c0_88 = arith.constant 0 : index
      %113 = vector.load %arg9[%c0_87, %c0_88] : memref<1x1xf32, #tpu.memory_space<vmem>>, vector<1x1xf32>
      tpu.vector_store %arg9[%c0_87, %c0_88], %107 {strides = array<i32>} : memref<1x1xf32, #tpu.memory_space<vmem>>, vector<1x1xf32>,
      %114 = arith.mulf %96, %96 : vector<16x128xf32>
      %115 = vector.shape_cast %114 : vector<16x128xf32> to vector<1x16x128xf32>
      %cst_89 = arith.constant dense<0.000000e+00> : vector<1xf32>
      %116 = vector.multi_reduction <add>, %115, %cst_89 [1, 2] : vector<1x16x128xf32> to vector<1xf32>
      %117 = vector.shape_cast %116 : vector<1xf32> to vector<1x1x1xf32>
      %118 = vector.extract %117[0, 0, 0] : f32 from vector<1x1x1xf32>
      %119 = arith.cmpf olt, %118, %14 : f32
      %c1_i32_90 = arith.constant 1 : i32
      %c0_i32_91 = arith.constant 0 : i32
      %120 = arith.select %119, %c1_i32_90, %c0_i32_91 : i32
      %c0_92 = arith.constant 0 : index
      %121 = memref.load %arg10[%c0_92] : memref<1xi32, #tpu.memory_space<smem>>
      memref.store %120, %arg10[%c0_92] : memref<1xi32, #tpu.memory_space<smem>>
    } else {
    }
    %c1_i32_31 = arith.constant 1 : i32
    %c0_32 = arith.constant 0 : index
    %39 = memref.load %arg10[%c0_32] : memref<1xi32, #tpu.memory_space<smem>>
    %c0_i32_33 = arith.constant 0 : i32
    %40 = arith.cmpi eq, %39, %c0_i32_33 : i32
    %41 = arith.extui %40 : i1 to i32
    %c0_i32_34 = arith.constant 0 : i32
    %42 = arith.cmpi ne, %41, %c0_i32_34 : i32
    scf.if %42 {
      %c0_59 = arith.constant 0 : index
      %c0_60 = arith.constant 0 : index
      %75 = vector.load %arg8[%c0_59, %c0_60] : memref<16x128xf32, #tpu.memory_space<vmem>>, vector<16x128xf32>
      %c0_61 = arith.constant 0 : index
      %c0_62 = arith.constant 0 : index
      %76 = vector.load %arg9[%c0_61, %c0_62] : memref<1x1xf32, #tpu.memory_space<vmem>>, vector<1x1xf32>
      %c0_63 = arith.constant 0 : index
      %c0_64 = arith.constant 0 : index
      %77 = vector.load %arg0[%c0_63, %c0_64] : memref<16x16xf32, #tpu.memory_space<vmem>>, vector<16x16xf32>
      %cst_65 = arith.constant dense<0.000000e+00> : vector<16x128xf32>
      %78 = tpu.matmul %77, %75, %cst_65 {dimension_numbers = #tpu.dot_dimension_numbers<[1], [0], [0], [1], [0, 0, 1, 1], [], []>} : vector<16x16xf32>, vector<16x128xf32>, vector<16x128xf32> -> vector<16x128xf32>
      %c0_66 = arith.constant 0 : index
      %c0_67 = arith.constant 0 : index
      %79 = vector.load %arg2[%c0_66, %c0_67] : memref<128x128xf32, #tpu.memory_space<vmem>>, vector<128x128xf32>
      %cst_68 = arith.constant dense<0.000000e+00> : vector<16x128xf32>
      %80 = tpu.matmul %78, %79, %cst_68 {dimension_numbers = #tpu.dot_dimension_numbers<[1], [0], [0], [1], [0, 0, 1, 1], [], []>} : vector<16x128xf32>, vector<128x128xf32>, vector<16x128xf32> -> vector<16x128xf32>
      %81 = arith.mulf %80, %80 : vector<16x128xf32>
      %82 = vector.shape_cast %81 : vector<16x128xf32> to vector<1x16x128xf32>
      %cst_69 = arith.constant dense<0.000000e+00> : vector<1xf32>
      %83 = vector.multi_reduction <add>, %82, %cst_69 [1, 2] : vector<1x16x128xf32> to vector<1xf32>
      %84 = vector.shape_cast %83 : vector<1xf32> to vector<1x1x1xf32>
      %85 = vector.extract %84[0, 0, 0] : f32 from vector<1x1x1xf32>
      %86 = vector.broadcast %85 : f32 to vector<1x1xf32>
      %87 = arith.divf %76, %86 : vector<1x1xf32>
      %c0_70 = arith.constant 0 : index
      %c0_71 = arith.constant 0 : index
      %88 = vector.load %arg6[%c0_70, %c0_71] : memref<16x128xf32, #tpu.memory_space<vmem>>, vector<16x128xf32>
      %89 = vector.broadcast %87 : vector<1x1xf32> to vector<16x128xf32>
      %90 = arith.mulf %89, %75 : vector<16x128xf32>
      %91 = arith.addf %88, %90 : vector<16x128xf32>
      %c0_72 = arith.constant 0 : index
      %c0_73 = arith.constant 0 : index
      %92 = vector.load %arg6[%c0_72, %c0_73] : memref<16x128xf32, #tpu.memory_space<vmem>>, vector<16x128xf32>
      tpu.vector_store %arg6[%c0_72, %c0_73], %91 {strides = array<i32>} : memref<16x128xf32, #tpu.memory_space<vmem>>, vector<16x128xf32>,
      %c0_74 = arith.constant 0 : index
      %c0_75 = arith.constant 0 : index
      %93 = vector.load %arg7[%c0_74, %c0_75] : memref<16x128xf32, #tpu.memory_space<vmem>>, vector<16x128xf32>
      %94 = vector.broadcast %87 : vector<1x1xf32> to vector<16x128xf32>
      %95 = arith.mulf %94, %80 : vector<16x128xf32>
      %96 = arith.subf %93, %95 : vector<16x128xf32>
      %c0_76 = arith.constant 0 : index
      %c0_77 = arith.constant 0 : index
      %97 = vector.load %arg7[%c0_76, %c0_77] : memref<16x128xf32, #tpu.memory_space<vmem>>, vector<16x128xf32>
      tpu.vector_store %arg7[%c0_76, %c0_77], %96 {strides = array<i32>} : memref<16x128xf32, #tpu.memory_space<vmem>>, vector<16x128xf32>,
      %c0_78 = arith.constant 0 : index
      %c0_79 = arith.constant 0 : index
      %98 = vector.load %arg1[%c0_78, %c0_79] : memref<16x16xf32, #tpu.memory_space<vmem>>, vector<16x16xf32>
      %cst_80 = arith.constant dense<0.000000e+00> : vector<16x128xf32>
      %99 = tpu.matmul %98, %96, %cst_80 {dimension_numbers = #tpu.dot_dimension_numbers<[1], [0], [0], [1], [0, 0, 1, 1], [], []>} : vector<16x16xf32>, vector<16x128xf32>, vector<16x128xf32> -> vector<16x128xf32>
      %c0_81 = arith.constant 0 : index
      %c0_82 = arith.constant 0 : index
      %100 = vector.load %arg3[%c0_81, %c0_82] : memref<128x128xf32, #tpu.memory_space<vmem>>, vector<128x128xf32>
      %cst_83 = arith.constant dense<0.000000e+00> : vector<16x128xf32>
      %101 = tpu.matmul %99, %100, %cst_83 {dimension_numbers = #tpu.dot_dimension_numbers<[1], [0], [0], [1], [0, 0, 1, 1], [], []>} : vector<16x128xf32>, vector<128x128xf32>, vector<16x128xf32> -> vector<16x128xf32>
      %102 = arith.mulf %101, %101 : vector<16x128xf32>
      %103 = vector.shape_cast %102 : vector<16x128xf32> to vector<1x16x128xf32>
      %cst_84 = arith.constant dense<0.000000e+00> : vector<1xf32>
      %104 = vector.multi_reduction <add>, %103, %cst_84 [1, 2] : vector<1x16x128xf32> to vector<1xf32>
      %105 = vector.shape_cast %104 : vector<1xf32> to vector<1x1x1xf32>
      %106 = vector.extract %105[0, 0, 0] : f32 from vector<1x1x1xf32>
      %107 = vector.broadcast %106 : f32 to vector<1x1xf32>
      %108 = arith.divf %107, %76 : vector<1x1xf32>
      %109 = vector.broadcast %108 : vector<1x1xf32> to vector<16x128xf32>
      %110 = arith.mulf %109, %75 : vector<16x128xf32>
      %111 = arith.addf %101, %110 : vector<16x128xf32>
      %c0_85 = arith.constant 0 : index
      %c0_86 = arith.constant 0 : index
      %112 = vector.load %arg8[%c0_85, %c0_86] : memref<16x128xf32, #tpu.memory_space<vmem>>, vector<16x128xf32>
      tpu.vector_store %arg8[%c0_85, %c0_86], %111 {strides = array<i32>} : memref<16x128xf32, #tpu.memory_space<vmem>>, vector<16x128xf32>,
      %c0_87 = arith.constant 0 : index
      %c0_88 = arith.constant 0 : index
      %113 = vector.load %arg9[%c0_87, %c0_88] : memref<1x1xf32, #tpu.memory_space<vmem>>, vector<1x1xf32>
      tpu.vector_store %arg9[%c0_87, %c0_88], %107 {strides = array<i32>} : memref<1x1xf32, #tpu.memory_space<vmem>>, vector<1x1xf32>,
      %114 = arith.mulf %96, %96 : vector<16x128xf32>
      %115 = vector.shape_cast %114 : vector<16x128xf32> to vector<1x16x128xf32>
      %cst_89 = arith.constant dense<0.000000e+00> : vector<1xf32>
      %116 = vector.multi_reduction <add>, %115, %cst_89 [1, 2] : vector<1x16x128xf32> to vector<1xf32>
      %117 = vector.shape_cast %116 : vector<1xf32> to vector<1x1x1xf32>
      %118 = vector.extract %117[0, 0, 0] : f32 from vector<1x1x1xf32>
      %119 = arith.cmpf olt, %118, %14 : f32
      %c1_i32_90 = arith.constant 1 : i32
      %c0_i32_91 = arith.constant 0 : i32
      %120 = arith.select %119, %c1_i32_90, %c0_i32_91 : i32
      %c0_92 = arith.constant 0 : index
      %121 = memref.load %arg10[%c0_92] : memref<1xi32, #tpu.memory_space<smem>>
      memref.store %120, %arg10[%c0_92] : memref<1xi32, #tpu.memory_space<smem>>
    } else {
    }
    %c2_i32 = arith.constant 2 : i32
    %c0_35 = arith.constant 0 : index
    %43 = memref.load %arg10[%c0_35] : memref<1xi32, #tpu.memory_space<smem>>
    %c0_i32_36 = arith.constant 0 : i32
    %44 = arith.cmpi eq, %43, %c0_i32_36 : i32
    %45 = arith.extui %44 : i1 to i32
    %c0_i32_37 = arith.constant 0 : i32
    %46 = arith.cmpi ne, %45, %c0_i32_37 : i32
    scf.if %46 {
      %c0_59 = arith.constant 0 : index
      %c0_60 = arith.constant 0 : index
      %75 = vector.load %arg8[%c0_59, %c0_60] : memref<16x128xf32, #tpu.memory_space<vmem>>, vector<16x128xf32>
      %c0_61 = arith.constant 0 : index
      %c0_62 = arith.constant 0 : index
      %76 = vector.load %arg9[%c0_61, %c0_62] : memref<1x1xf32, #tpu.memory_space<vmem>>, vector<1x1xf32>
      %c0_63 = arith.constant 0 : index
      %c0_64 = arith.constant 0 : index
      %77 = vector.load %arg0[%c0_63, %c0_64] : memref<16x16xf32, #tpu.memory_space<vmem>>, vector<16x16xf32>
      %cst_65 = arith.constant dense<0.000000e+00> : vector<16x128xf32>
      %78 = tpu.matmul %77, %75, %cst_65 {dimension_numbers = #tpu.dot_dimension_numbers<[1], [0], [0], [1], [0, 0, 1, 1], [], []>} : vector<16x16xf32>, vector<16x128xf32>, vector<16x128xf32> -> vector<16x128xf32>
      %c0_66 = arith.constant 0 : index
      %c0_67 = arith.constant 0 : index
      %79 = vector.load %arg2[%c0_66, %c0_67] : memref<128x128xf32, #tpu.memory_space<vmem>>, vector<128x128xf32>
      %cst_68 = arith.constant dense<0.000000e+00> : vector<16x128xf32>
      %80 = tpu.matmul %78, %79, %cst_68 {dimension_numbers = #tpu.dot_dimension_numbers<[1], [0], [0], [1], [0, 0, 1, 1], [], []>} : vector<16x128xf32>, vector<128x128xf32>, vector<16x128xf32> -> vector<16x128xf32>
      %81 = arith.mulf %80, %80 : vector<16x128xf32>
      %82 = vector.shape_cast %81 : vector<16x128xf32> to vector<1x16x128xf32>
      %cst_69 = arith.constant dense<0.000000e+00> : vector<1xf32>
      %83 = vector.multi_reduction <add>, %82, %cst_69 [1, 2] : vector<1x16x128xf32> to vector<1xf32>
      %84 = vector.shape_cast %83 : vector<1xf32> to vector<1x1x1xf32>
      %85 = vector.extract %84[0, 0, 0] : f32 from vector<1x1x1xf32>
      %86 = vector.broadcast %85 : f32 to vector<1x1xf32>
      %87 = arith.divf %76, %86 : vector<1x1xf32>
      %c0_70 = arith.constant 0 : index
      %c0_71 = arith.constant 0 : index
      %88 = vector.load %arg6[%c0_70, %c0_71] : memref<16x128xf32, #tpu.memory_space<vmem>>, vector<16x128xf32>
      %89 = vector.broadcast %87 : vector<1x1xf32> to vector<16x128xf32>
      %90 = arith.mulf %89, %75 : vector<16x128xf32>
      %91 = arith.addf %88, %90 : vector<16x128xf32>
      %c0_72 = arith.constant 0 : index
      %c0_73 = arith.constant 0 : index
      %92 = vector.load %arg6[%c0_72, %c0_73] : memref<16x128xf32, #tpu.memory_space<vmem>>, vector<16x128xf32>
      tpu.vector_store %arg6[%c0_72, %c0_73], %91 {strides = array<i32>} : memref<16x128xf32, #tpu.memory_space<vmem>>, vector<16x128xf32>,
      %c0_74 = arith.constant 0 : index
      %c0_75 = arith.constant 0 : index
      %93 = vector.load %arg7[%c0_74, %c0_75] : memref<16x128xf32, #tpu.memory_space<vmem>>, vector<16x128xf32>
      %94 = vector.broadcast %87 : vector<1x1xf32> to vector<16x128xf32>
      %95 = arith.mulf %94, %80 : vector<16x128xf32>
      %96 = arith.subf %93, %95 : vector<16x128xf32>
      %c0_76 = arith.constant 0 : index
      %c0_77 = arith.constant 0 : index
      %97 = vector.load %arg7[%c0_76, %c0_77] : memref<16x128xf32, #tpu.memory_space<vmem>>, vector<16x128xf32>
      tpu.vector_store %arg7[%c0_76, %c0_77], %96 {strides = array<i32>} : memref<16x128xf32, #tpu.memory_space<vmem>>, vector<16x128xf32>,
      %c0_78 = arith.constant 0 : index
      %c0_79 = arith.constant 0 : index
      %98 = vector.load %arg1[%c0_78, %c0_79] : memref<16x16xf32, #tpu.memory_space<vmem>>, vector<16x16xf32>
      %cst_80 = arith.constant dense<0.000000e+00> : vector<16x128xf32>
      %99 = tpu.matmul %98, %96, %cst_80 {dimension_numbers = #tpu.dot_dimension_numbers<[1], [0], [0], [1], [0, 0, 1, 1], [], []>} : vector<16x16xf32>, vector<16x128xf32>, vector<16x128xf32> -> vector<16x128xf32>
      %c0_81 = arith.constant 0 : index
      %c0_82 = arith.constant 0 : index
      %100 = vector.load %arg3[%c0_81, %c0_82] : memref<128x128xf32, #tpu.memory_space<vmem>>, vector<128x128xf32>
      %cst_83 = arith.constant dense<0.000000e+00> : vector<16x128xf32>
      %101 = tpu.matmul %99, %100, %cst_83 {dimension_numbers = #tpu.dot_dimension_numbers<[1], [0], [0], [1], [0, 0, 1, 1], [], []>} : vector<16x128xf32>, vector<128x128xf32>, vector<16x128xf32> -> vector<16x128xf32>
      %102 = arith.mulf %101, %101 : vector<16x128xf32>
      %103 = vector.shape_cast %102 : vector<16x128xf32> to vector<1x16x128xf32>
      %cst_84 = arith.constant dense<0.000000e+00> : vector<1xf32>
      %104 = vector.multi_reduction <add>, %103, %cst_84 [1, 2] : vector<1x16x128xf32> to vector<1xf32>
      %105 = vector.shape_cast %104 : vector<1xf32> to vector<1x1x1xf32>
      %106 = vector.extract %105[0, 0, 0] : f32 from vector<1x1x1xf32>
      %107 = vector.broadcast %106 : f32 to vector<1x1xf32>
      %108 = arith.divf %107, %76 : vector<1x1xf32>
      %109 = vector.broadcast %108 : vector<1x1xf32> to vector<16x128xf32>
      %110 = arith.mulf %109, %75 : vector<16x128xf32>
      %111 = arith.addf %101, %110 : vector<16x128xf32>
      %c0_85 = arith.constant 0 : index
      %c0_86 = arith.constant 0 : index
      %112 = vector.load %arg8[%c0_85, %c0_86] : memref<16x128xf32, #tpu.memory_space<vmem>>, vector<16x128xf32>
      tpu.vector_store %arg8[%c0_85, %c0_86], %111 {strides = array<i32>} : memref<16x128xf32, #tpu.memory_space<vmem>>, vector<16x128xf32>,
      %c0_87 = arith.constant 0 : index
      %c0_88 = arith.constant 0 : index
      %113 = vector.load %arg9[%c0_87, %c0_88] : memref<1x1xf32, #tpu.memory_space<vmem>>, vector<1x1xf32>
      tpu.vector_store %arg9[%c0_87, %c0_88], %107 {strides = array<i32>} : memref<1x1xf32, #tpu.memory_space<vmem>>, vector<1x1xf32>,
      %114 = arith.mulf %96, %96 : vector<16x128xf32>
      %115 = vector.shape_cast %114 : vector<16x128xf32> to vector<1x16x128xf32>
      %cst_89 = arith.constant dense<0.000000e+00> : vector<1xf32>
      %116 = vector.multi_reduction <add>, %115, %cst_89 [1, 2] : vector<1x16x128xf32> to vector<1xf32>
      %117 = vector.shape_cast %116 : vector<1xf32> to vector<1x1x1xf32>
      %118 = vector.extract %117[0, 0, 0] : f32 from vector<1x1x1xf32>
      %119 = arith.cmpf olt, %118, %14 : f32
      %c1_i32_90 = arith.constant 1 : i32
      %c0_i32_91 = arith.constant 0 : i32
      %120 = arith.select %119, %c1_i32_90, %c0_i32_91 : i32
      %c0_92 = arith.constant 0 : index
      %121 = memref.load %arg10[%c0_92] : memref<1xi32, #tpu.memory_space<smem>>
      memref.store %120, %arg10[%c0_92] : memref<1xi32, #tpu.memory_space<smem>>
    } else {
    }
    %c3_i32 = arith.constant 3 : i32
    %c0_38 = arith.constant 0 : index
    %47 = memref.load %arg10[%c0_38] : memref<1xi32, #tpu.memory_space<smem>>
    %c0_i32_39 = arith.constant 0 : i32
    %48 = arith.cmpi eq, %47, %c0_i32_39 : i32
    %49 = arith.extui %48 : i1 to i32
    %c0_i32_40 = arith.constant 0 : i32
    %50 = arith.cmpi ne, %49, %c0_i32_40 : i32
    scf.if %50 {
      %c0_59 = arith.constant 0 : index
      %c0_60 = arith.constant 0 : index
      %75 = vector.load %arg8[%c0_59, %c0_60] : memref<16x128xf32, #tpu.memory_space<vmem>>, vector<16x128xf32>
      %c0_61 = arith.constant 0 : index
      %c0_62 = arith.constant 0 : index
      %76 = vector.load %arg9[%c0_61, %c0_62] : memref<1x1xf32, #tpu.memory_space<vmem>>, vector<1x1xf32>
      %c0_63 = arith.constant 0 : index
      %c0_64 = arith.constant 0 : index
      %77 = vector.load %arg0[%c0_63, %c0_64] : memref<16x16xf32, #tpu.memory_space<vmem>>, vector<16x16xf32>
      %cst_65 = arith.constant dense<0.000000e+00> : vector<16x128xf32>
      %78 = tpu.matmul %77, %75, %cst_65 {dimension_numbers = #tpu.dot_dimension_numbers<[1], [0], [0], [1], [0, 0, 1, 1], [], []>} : vector<16x16xf32>, vector<16x128xf32>, vector<16x128xf32> -> vector<16x128xf32>
      %c0_66 = arith.constant 0 : index
      %c0_67 = arith.constant 0 : index
      %79 = vector.load %arg2[%c0_66, %c0_67] : memref<128x128xf32, #tpu.memory_space<vmem>>, vector<128x128xf32>
      %cst_68 = arith.constant dense<0.000000e+00> : vector<16x128xf32>
      %80 = tpu.matmul %78, %79, %cst_68 {dimension_numbers = #tpu.dot_dimension_numbers<[1], [0], [0], [1], [0, 0, 1, 1], [], []>} : vector<16x128xf32>, vector<128x128xf32>, vector<16x128xf32> -> vector<16x128xf32>
      %81 = arith.mulf %80, %80 : vector<16x128xf32>
      %82 = vector.shape_cast %81 : vector<16x128xf32> to vector<1x16x128xf32>
      %cst_69 = arith.constant dense<0.000000e+00> : vector<1xf32>
      %83 = vector.multi_reduction <add>, %82, %cst_69 [1, 2] : vector<1x16x128xf32> to vector<1xf32>
      %84 = vector.shape_cast %83 : vector<1xf32> to vector<1x1x1xf32>
      %85 = vector.extract %84[0, 0, 0] : f32 from vector<1x1x1xf32>
      %86 = vector.broadcast %85 : f32 to vector<1x1xf32>
      %87 = arith.divf %76, %86 : vector<1x1xf32>
      %c0_70 = arith.constant 0 : index
      %c0_71 = arith.constant 0 : index
      %88 = vector.load %arg6[%c0_70, %c0_71] : memref<16x128xf32, #tpu.memory_space<vmem>>, vector<16x128xf32>
      %89 = vector.broadcast %87 : vector<1x1xf32> to vector<16x128xf32>
      %90 = arith.mulf %89, %75 : vector<16x128xf32>
      %91 = arith.addf %88, %90 : vector<16x128xf32>
      %c0_72 = arith.constant 0 : index
      %c0_73 = arith.constant 0 : index
      %92 = vector.load %arg6[%c0_72, %c0_73] : memref<16x128xf32, #tpu.memory_space<vmem>>, vector<16x128xf32>
      tpu.vector_store %arg6[%c0_72, %c0_73], %91 {strides = array<i32>} : memref<16x128xf32, #tpu.memory_space<vmem>>, vector<16x128xf32>,
      %c0_74 = arith.constant 0 : index
      %c0_75 = arith.constant 0 : index
      %93 = vector.load %arg7[%c0_74, %c0_75] : memref<16x128xf32, #tpu.memory_space<vmem>>, vector<16x128xf32>
      %94 = vector.broadcast %87 : vector<1x1xf32> to vector<16x128xf32>
      %95 = arith.mulf %94, %80 : vector<16x128xf32>
      %96 = arith.subf %93, %95 : vector<16x128xf32>
      %c0_76 = arith.constant 0 : index
      %c0_77 = arith.constant 0 : index
      %97 = vector.load %arg7[%c0_76, %c0_77] : memref<16x128xf32, #tpu.memory_space<vmem>>, vector<16x128xf32>
      tpu.vector_store %arg7[%c0_76, %c0_77], %96 {strides = array<i32>} : memref<16x128xf32, #tpu.memory_space<vmem>>, vector<16x128xf32>,
      %c0_78 = arith.constant 0 : index
      %c0_79 = arith.constant 0 : index
      %98 = vector.load %arg1[%c0_78, %c0_79] : memref<16x16xf32, #tpu.memory_space<vmem>>, vector<16x16xf32>
      %cst_80 = arith.constant dense<0.000000e+00> : vector<16x128xf32>
      %99 = tpu.matmul %98, %96, %cst_80 {dimension_numbers = #tpu.dot_dimension_numbers<[1], [0], [0], [1], [0, 0, 1, 1], [], []>} : vector<16x16xf32>, vector<16x128xf32>, vector<16x128xf32> -> vector<16x128xf32>
      %c0_81 = arith.constant 0 : index
      %c0_82 = arith.constant 0 : index
      %100 = vector.load %arg3[%c0_81, %c0_82] : memref<128x128xf32, #tpu.memory_space<vmem>>, vector<128x128xf32>
      %cst_83 = arith.constant dense<0.000000e+00> : vector<16x128xf32>
      %101 = tpu.matmul %99, %100, %cst_83 {dimension_numbers = #tpu.dot_dimension_numbers<[1], [0], [0], [1], [0, 0, 1, 1], [], []>} : vector<16x128xf32>, vector<128x128xf32>, vector<16x128xf32> -> vector<16x128xf32>
      %102 = arith.mulf %101, %101 : vector<16x128xf32>
      %103 = vector.shape_cast %102 : vector<16x128xf32> to vector<1x16x128xf32>
      %cst_84 = arith.constant dense<0.000000e+00> : vector<1xf32>
      %104 = vector.multi_reduction <add>, %103, %cst_84 [1, 2] : vector<1x16x128xf32> to vector<1xf32>
      %105 = vector.shape_cast %104 : vector<1xf32> to vector<1x1x1xf32>
      %106 = vector.extract %105[0, 0, 0] : f32 from vector<1x1x1xf32>
      %107 = vector.broadcast %106 : f32 to vector<1x1xf32>
      %108 = arith.divf %107, %76 : vector<1x1xf32>
      %109 = vector.broadcast %108 : vector<1x1xf32> to vector<16x128xf32>
      %110 = arith.mulf %109, %75 : vector<16x128xf32>
      %111 = arith.addf %101, %110 : vector<16x128xf32>
      %c0_85 = arith.constant 0 : index
      %c0_86 = arith.constant 0 : index
      %112 = vector.load %arg8[%c0_85, %c0_86] : memref<16x128xf32, #tpu.memory_space<vmem>>, vector<16x128xf32>
      tpu.vector_store %arg8[%c0_85, %c0_86], %111 {strides = array<i32>} : memref<16x128xf32, #tpu.memory_space<vmem>>, vector<16x128xf32>,
      %c0_87 = arith.constant 0 : index
      %c0_88 = arith.constant 0 : index
      %113 = vector.load %arg9[%c0_87, %c0_88] : memref<1x1xf32, #tpu.memory_space<vmem>>, vector<1x1xf32>
      tpu.vector_store %arg9[%c0_87, %c0_88], %107 {strides = array<i32>} : memref<1x1xf32, #tpu.memory_space<vmem>>, vector<1x1xf32>,
      %114 = arith.mulf %96, %96 : vector<16x128xf32>
      %115 = vector.shape_cast %114 : vector<16x128xf32> to vector<1x16x128xf32>
      %cst_89 = arith.constant dense<0.000000e+00> : vector<1xf32>
      %116 = vector.multi_reduction <add>, %115, %cst_89 [1, 2] : vector<1x16x128xf32> to vector<1xf32>
      %117 = vector.shape_cast %116 : vector<1xf32> to vector<1x1x1xf32>
      %118 = vector.extract %117[0, 0, 0] : f32 from vector<1x1x1xf32>
      %119 = arith.cmpf olt, %118, %14 : f32
      %c1_i32_90 = arith.constant 1 : i32
      %c0_i32_91 = arith.constant 0 : i32
      %120 = arith.select %119, %c1_i32_90, %c0_i32_91 : i32
      %c0_92 = arith.constant 0 : index
      %121 = memref.load %arg10[%c0_92] : memref<1xi32, #tpu.memory_space<smem>>
      memref.store %120, %arg10[%c0_92] : memref<1xi32, #tpu.memory_space<smem>>
    } else {
    }
    %c4_i32 = arith.constant 4 : i32
    %c0_41 = arith.constant 0 : index
    %51 = memref.load %arg10[%c0_41] : memref<1xi32, #tpu.memory_space<smem>>
    %c0_i32_42 = arith.constant 0 : i32
    %52 = arith.cmpi eq, %51, %c0_i32_42 : i32
    %53 = arith.extui %52 : i1 to i32
    %c0_i32_43 = arith.constant 0 : i32
    %54 = arith.cmpi ne, %53, %c0_i32_43 : i32
    scf.if %54 {
      %c0_59 = arith.constant 0 : index
      %c0_60 = arith.constant 0 : index
      %75 = vector.load %arg8[%c0_59, %c0_60] : memref<16x128xf32, #tpu.memory_space<vmem>>, vector<16x128xf32>
      %c0_61 = arith.constant 0 : index
      %c0_62 = arith.constant 0 : index
      %76 = vector.load %arg9[%c0_61, %c0_62] : memref<1x1xf32, #tpu.memory_space<vmem>>, vector<1x1xf32>
      %c0_63 = arith.constant 0 : index
      %c0_64 = arith.constant 0 : index
      %77 = vector.load %arg0[%c0_63, %c0_64] : memref<16x16xf32, #tpu.memory_space<vmem>>, vector<16x16xf32>
      %cst_65 = arith.constant dense<0.000000e+00> : vector<16x128xf32>
      %78 = tpu.matmul %77, %75, %cst_65 {dimension_numbers = #tpu.dot_dimension_numbers<[1], [0], [0], [1], [0, 0, 1, 1], [], []>} : vector<16x16xf32>, vector<16x128xf32>, vector<16x128xf32> -> vector<16x128xf32>
      %c0_66 = arith.constant 0 : index
      %c0_67 = arith.constant 0 : index
      %79 = vector.load %arg2[%c0_66, %c0_67] : memref<128x128xf32, #tpu.memory_space<vmem>>, vector<128x128xf32>
      %cst_68 = arith.constant dense<0.000000e+00> : vector<16x128xf32>
      %80 = tpu.matmul %78, %79, %cst_68 {dimension_numbers = #tpu.dot_dimension_numbers<[1], [0], [0], [1], [0, 0, 1, 1], [], []>} : vector<16x128xf32>, vector<128x128xf32>, vector<16x128xf32> -> vector<16x128xf32>
      %81 = arith.mulf %80, %80 : vector<16x128xf32>
      %82 = vector.shape_cast %81 : vector<16x128xf32> to vector<1x16x128xf32>
      %cst_69 = arith.constant dense<0.000000e+00> : vector<1xf32>
      %83 = vector.multi_reduction <add>, %82, %cst_69 [1, 2] : vector<1x16x128xf32> to vector<1xf32>
      %84 = vector.shape_cast %83 : vector<1xf32> to vector<1x1x1xf32>
      %85 = vector.extract %84[0, 0, 0] : f32 from vector<1x1x1xf32>
      %86 = vector.broadcast %85 : f32 to vector<1x1xf32>
      %87 = arith.divf %76, %86 : vector<1x1xf32>
      %c0_70 = arith.constant 0 : index
      %c0_71 = arith.constant 0 : index
      %88 = vector.load %arg6[%c0_70, %c0_71] : memref<16x128xf32, #tpu.memory_space<vmem>>, vector<16x128xf32>
      %89 = vector.broadcast %87 : vector<1x1xf32> to vector<16x128xf32>
      %90 = arith.mulf %89, %75 : vector<16x128xf32>
      %91 = arith.addf %88, %90 : vector<16x128xf32>
      %c0_72 = arith.constant 0 : index
      %c0_73 = arith.constant 0 : index
      %92 = vector.load %arg6[%c0_72, %c0_73] : memref<16x128xf32, #tpu.memory_space<vmem>>, vector<16x128xf32>
      tpu.vector_store %arg6[%c0_72, %c0_73], %91 {strides = array<i32>} : memref<16x128xf32, #tpu.memory_space<vmem>>, vector<16x128xf32>,
      %c0_74 = arith.constant 0 : index
      %c0_75 = arith.constant 0 : index
      %93 = vector.load %arg7[%c0_74, %c0_75] : memref<16x128xf32, #tpu.memory_space<vmem>>, vector<16x128xf32>
      %94 = vector.broadcast %87 : vector<1x1xf32> to vector<16x128xf32>
      %95 = arith.mulf %94, %80 : vector<16x128xf32>
      %96 = arith.subf %93, %95 : vector<16x128xf32>
      %c0_76 = arith.constant 0 : index
      %c0_77 = arith.constant 0 : index
      %97 = vector.load %arg7[%c0_76, %c0_77] : memref<16x128xf32, #tpu.memory_space<vmem>>, vector<16x128xf32>
      tpu.vector_store %arg7[%c0_76, %c0_77], %96 {strides = array<i32>} : memref<16x128xf32, #tpu.memory_space<vmem>>, vector<16x128xf32>,
      %c0_78 = arith.constant 0 : index
      %c0_79 = arith.constant 0 : index
      %98 = vector.load %arg1[%c0_78, %c0_79] : memref<16x16xf32, #tpu.memory_space<vmem>>, vector<16x16xf32>
      %cst_80 = arith.constant dense<0.000000e+00> : vector<16x128xf32>
      %99 = tpu.matmul %98, %96, %cst_80 {dimension_numbers = #tpu.dot_dimension_numbers<[1], [0], [0], [1], [0, 0, 1, 1], [], []>} : vector<16x16xf32>, vector<16x128xf32>, vector<16x128xf32> -> vector<16x128xf32>
      %c0_81 = arith.constant 0 : index
      %c0_82 = arith.constant 0 : index
      %100 = vector.load %arg3[%c0_81, %c0_82] : memref<128x128xf32, #tpu.memory_space<vmem>>, vector<128x128xf32>
      %cst_83 = arith.constant dense<0.000000e+00> : vector<16x128xf32>
      %101 = tpu.matmul %99, %100, %cst_83 {dimension_numbers = #tpu.dot_dimension_numbers<[1], [0], [0], [1], [0, 0, 1, 1], [], []>} : vector<16x128xf32>, vector<128x128xf32>, vector<16x128xf32> -> vector<16x128xf32>
      %102 = arith.mulf %101, %101 : vector<16x128xf32>
      %103 = vector.shape_cast %102 : vector<16x128xf32> to vector<1x16x128xf32>
      %cst_84 = arith.constant dense<0.000000e+00> : vector<1xf32>
      %104 = vector.multi_reduction <add>, %103, %cst_84 [1, 2] : vector<1x16x128xf32> to vector<1xf32>
      %105 = vector.shape_cast %104 : vector<1xf32> to vector<1x1x1xf32>
      %106 = vector.extract %105[0, 0, 0] : f32 from vector<1x1x1xf32>
      %107 = vector.broadcast %106 : f32 to vector<1x1xf32>
      %108 = arith.divf %107, %76 : vector<1x1xf32>
      %109 = vector.broadcast %108 : vector<1x1xf32> to vector<16x128xf32>
      %110 = arith.mulf %109, %75 : vector<16x128xf32>
      %111 = arith.addf %101, %110 : vector<16x128xf32>
      %c0_85 = arith.constant 0 : index
      %c0_86 = arith.constant 0 : index
      %112 = vector.load %arg8[%c0_85, %c0_86] : memref<16x128xf32, #tpu.memory_space<vmem>>, vector<16x128xf32>
      tpu.vector_store %arg8[%c0_85, %c0_86], %111 {strides = array<i32>} : memref<16x128xf32, #tpu.memory_space<vmem>>, vector<16x128xf32>,
      %c0_87 = arith.constant 0 : index
      %c0_88 = arith.constant 0 : index
      %113 = vector.load %arg9[%c0_87, %c0_88] : memref<1x1xf32, #tpu.memory_space<vmem>>, vector<1x1xf32>
      tpu.vector_store %arg9[%c0_87, %c0_88], %107 {strides = array<i32>} : memref<1x1xf32, #tpu.memory_space<vmem>>, vector<1x1xf32>,
      %114 = arith.mulf %96, %96 : vector<16x128xf32>
      %115 = vector.shape_cast %114 : vector<16x128xf32> to vector<1x16x128xf32>
      %cst_89 = arith.constant dense<0.000000e+00> : vector<1xf32>
      %116 = vector.multi_reduction <add>, %115, %cst_89 [1, 2] : vector<1x16x128xf32> to vector<1xf32>
      %117 = vector.shape_cast %116 : vector<1xf32> to vector<1x1x1xf32>
      %118 = vector.extract %117[0, 0, 0] : f32 from vector<1x1x1xf32>
      %119 = arith.cmpf olt, %118, %14 : f32
      %c1_i32_90 = arith.constant 1 : i32
      %c0_i32_91 = arith.constant 0 : i32
      %120 = arith.select %119, %c1_i32_90, %c0_i32_91 : i32
      %c0_92 = arith.constant 0 : index
      %121 = memref.load %arg10[%c0_92] : memref<1xi32, #tpu.memory_space<smem>>
      memref.store %120, %arg10[%c0_92] : memref<1xi32, #tpu.memory_space<smem>>
    } else {
    }
    %c5_i32 = arith.constant 5 : i32
    %c0_44 = arith.constant 0 : index
    %55 = memref.load %arg10[%c0_44] : memref<1xi32, #tpu.memory_space<smem>>
    %c0_i32_45 = arith.constant 0 : i32
    %56 = arith.cmpi eq, %55, %c0_i32_45 : i32
    %57 = arith.extui %56 : i1 to i32
    %c0_i32_46 = arith.constant 0 : i32
    %58 = arith.cmpi ne, %57, %c0_i32_46 : i32
    scf.if %58 {
      %c0_59 = arith.constant 0 : index
      %c0_60 = arith.constant 0 : index
      %75 = vector.load %arg8[%c0_59, %c0_60] : memref<16x128xf32, #tpu.memory_space<vmem>>, vector<16x128xf32>
      %c0_61 = arith.constant 0 : index
      %c0_62 = arith.constant 0 : index
      %76 = vector.load %arg9[%c0_61, %c0_62] : memref<1x1xf32, #tpu.memory_space<vmem>>, vector<1x1xf32>
      %c0_63 = arith.constant 0 : index
      %c0_64 = arith.constant 0 : index
      %77 = vector.load %arg0[%c0_63, %c0_64] : memref<16x16xf32, #tpu.memory_space<vmem>>, vector<16x16xf32>
      %cst_65 = arith.constant dense<0.000000e+00> : vector<16x128xf32>
      %78 = tpu.matmul %77, %75, %cst_65 {dimension_numbers = #tpu.dot_dimension_numbers<[1], [0], [0], [1], [0, 0, 1, 1], [], []>} : vector<16x16xf32>, vector<16x128xf32>, vector<16x128xf32> -> vector<16x128xf32>
      %c0_66 = arith.constant 0 : index
      %c0_67 = arith.constant 0 : index
      %79 = vector.load %arg2[%c0_66, %c0_67] : memref<128x128xf32, #tpu.memory_space<vmem>>, vector<128x128xf32>
      %cst_68 = arith.constant dense<0.000000e+00> : vector<16x128xf32>
      %80 = tpu.matmul %78, %79, %cst_68 {dimension_numbers = #tpu.dot_dimension_numbers<[1], [0], [0], [1], [0, 0, 1, 1], [], []>} : vector<16x128xf32>, vector<128x128xf32>, vector<16x128xf32> -> vector<16x128xf32>
      %81 = arith.mulf %80, %80 : vector<16x128xf32>
      %82 = vector.shape_cast %81 : vector<16x128xf32> to vector<1x16x128xf32>
      %cst_69 = arith.constant dense<0.000000e+00> : vector<1xf32>
      %83 = vector.multi_reduction <add>, %82, %cst_69 [1, 2] : vector<1x16x128xf32> to vector<1xf32>
      %84 = vector.shape_cast %83 : vector<1xf32> to vector<1x1x1xf32>
      %85 = vector.extract %84[0, 0, 0] : f32 from vector<1x1x1xf32>
      %86 = vector.broadcast %85 : f32 to vector<1x1xf32>
      %87 = arith.divf %76, %86 : vector<1x1xf32>
      %c0_70 = arith.constant 0 : index
      %c0_71 = arith.constant 0 : index
      %88 = vector.load %arg6[%c0_70, %c0_71] : memref<16x128xf32, #tpu.memory_space<vmem>>, vector<16x128xf32>
      %89 = vector.broadcast %87 : vector<1x1xf32> to vector<16x128xf32>
      %90 = arith.mulf %89, %75 : vector<16x128xf32>
      %91 = arith.addf %88, %90 : vector<16x128xf32>
      %c0_72 = arith.constant 0 : index
      %c0_73 = arith.constant 0 : index
      %92 = vector.load %arg6[%c0_72, %c0_73] : memref<16x128xf32, #tpu.memory_space<vmem>>, vector<16x128xf32>
      tpu.vector_store %arg6[%c0_72, %c0_73], %91 {strides = array<i32>} : memref<16x128xf32, #tpu.memory_space<vmem>>, vector<16x128xf32>,
      %c0_74 = arith.constant 0 : index
      %c0_75 = arith.constant 0 : index
      %93 = vector.load %arg7[%c0_74, %c0_75] : memref<16x128xf32, #tpu.memory_space<vmem>>, vector<16x128xf32>
      %94 = vector.broadcast %87 : vector<1x1xf32> to vector<16x128xf32>
      %95 = arith.mulf %94, %80 : vector<16x128xf32>
      %96 = arith.subf %93, %95 : vector<16x128xf32>
      %c0_76 = arith.constant 0 : index
      %c0_77 = arith.constant 0 : index
      %97 = vector.load %arg7[%c0_76, %c0_77] : memref<16x128xf32, #tpu.memory_space<vmem>>, vector<16x128xf32>
      tpu.vector_store %arg7[%c0_76, %c0_77], %96 {strides = array<i32>} : memref<16x128xf32, #tpu.memory_space<vmem>>, vector<16x128xf32>,
      %c0_78 = arith.constant 0 : index
      %c0_79 = arith.constant 0 : index
      %98 = vector.load %arg1[%c0_78, %c0_79] : memref<16x16xf32, #tpu.memory_space<vmem>>, vector<16x16xf32>
      %cst_80 = arith.constant dense<0.000000e+00> : vector<16x128xf32>
      %99 = tpu.matmul %98, %96, %cst_80 {dimension_numbers = #tpu.dot_dimension_numbers<[1], [0], [0], [1], [0, 0, 1, 1], [], []>} : vector<16x16xf32>, vector<16x128xf32>, vector<16x128xf32> -> vector<16x128xf32>
      %c0_81 = arith.constant 0 : index
      %c0_82 = arith.constant 0 : index
      %100 = vector.load %arg3[%c0_81, %c0_82] : memref<128x128xf32, #tpu.memory_space<vmem>>, vector<128x128xf32>
      %cst_83 = arith.constant dense<0.000000e+00> : vector<16x128xf32>
      %101 = tpu.matmul %99, %100, %cst_83 {dimension_numbers = #tpu.dot_dimension_numbers<[1], [0], [0], [1], [0, 0, 1, 1], [], []>} : vector<16x128xf32>, vector<128x128xf32>, vector<16x128xf32> -> vector<16x128xf32>
      %102 = arith.mulf %101, %101 : vector<16x128xf32>
      %103 = vector.shape_cast %102 : vector<16x128xf32> to vector<1x16x128xf32>
      %cst_84 = arith.constant dense<0.000000e+00> : vector<1xf32>
      %104 = vector.multi_reduction <add>, %103, %cst_84 [1, 2] : vector<1x16x128xf32> to vector<1xf32>
      %105 = vector.shape_cast %104 : vector<1xf32> to vector<1x1x1xf32>
      %106 = vector.extract %105[0, 0, 0] : f32 from vector<1x1x1xf32>
      %107 = vector.broadcast %106 : f32 to vector<1x1xf32>
      %108 = arith.divf %107, %76 : vector<1x1xf32>
      %109 = vector.broadcast %108 : vector<1x1xf32> to vector<16x128xf32>
      %110 = arith.mulf %109, %75 : vector<16x128xf32>
      %111 = arith.addf %101, %110 : vector<16x128xf32>
      %c0_85 = arith.constant 0 : index
      %c0_86 = arith.constant 0 : index
      %112 = vector.load %arg8[%c0_85, %c0_86] : memref<16x128xf32, #tpu.memory_space<vmem>>, vector<16x128xf32>
      tpu.vector_store %arg8[%c0_85, %c0_86], %111 {strides = array<i32>} : memref<16x128xf32, #tpu.memory_space<vmem>>, vector<16x128xf32>,
      %c0_87 = arith.constant 0 : index
      %c0_88 = arith.constant 0 : index
      %113 = vector.load %arg9[%c0_87, %c0_88] : memref<1x1xf32, #tpu.memory_space<vmem>>, vector<1x1xf32>
      tpu.vector_store %arg9[%c0_87, %c0_88], %107 {strides = array<i32>} : memref<1x1xf32, #tpu.memory_space<vmem>>, vector<1x1xf32>,
      %114 = arith.mulf %96, %96 : vector<16x128xf32>
      %115 = vector.shape_cast %114 : vector<16x128xf32> to vector<1x16x128xf32>
      %cst_89 = arith.constant dense<0.000000e+00> : vector<1xf32>
      %116 = vector.multi_reduction <add>, %115, %cst_89 [1, 2] : vector<1x16x128xf32> to vector<1xf32>
      %117 = vector.shape_cast %116 : vector<1xf32> to vector<1x1x1xf32>
      %118 = vector.extract %117[0, 0, 0] : f32 from vector<1x1x1xf32>
      %119 = arith.cmpf olt, %118, %14 : f32
      %c1_i32_90 = arith.constant 1 : i32
      %c0_i32_91 = arith.constant 0 : i32
      %120 = arith.select %119, %c1_i32_90, %c0_i32_91 : i32
      %c0_92 = arith.constant 0 : index
      %121 = memref.load %arg10[%c0_92] : memref<1xi32, #tpu.memory_space<smem>>
      memref.store %120, %arg10[%c0_92] : memref<1xi32, #tpu.memory_space<smem>>
    } else {
    }
    %c6_i32 = arith.constant 6 : i32
    %c0_47 = arith.constant 0 : index
    %59 = memref.load %arg10[%c0_47] : memref<1xi32, #tpu.memory_space<smem>>
    %c0_i32_48 = arith.constant 0 : i32
    %60 = arith.cmpi eq, %59, %c0_i32_48 : i32
    %61 = arith.extui %60 : i1 to i32
    %c0_i32_49 = arith.constant 0 : i32
    %62 = arith.cmpi ne, %61, %c0_i32_49 : i32
    scf.if %62 {
      %c0_59 = arith.constant 0 : index
      %c0_60 = arith.constant 0 : index
      %75 = vector.load %arg8[%c0_59, %c0_60] : memref<16x128xf32, #tpu.memory_space<vmem>>, vector<16x128xf32>
      %c0_61 = arith.constant 0 : index
      %c0_62 = arith.constant 0 : index
      %76 = vector.load %arg9[%c0_61, %c0_62] : memref<1x1xf32, #tpu.memory_space<vmem>>, vector<1x1xf32>
      %c0_63 = arith.constant 0 : index
      %c0_64 = arith.constant 0 : index
      %77 = vector.load %arg0[%c0_63, %c0_64] : memref<16x16xf32, #tpu.memory_space<vmem>>, vector<16x16xf32>
      %cst_65 = arith.constant dense<0.000000e+00> : vector<16x128xf32>
      %78 = tpu.matmul %77, %75, %cst_65 {dimension_numbers = #tpu.dot_dimension_numbers<[1], [0], [0], [1], [0, 0, 1, 1], [], []>} : vector<16x16xf32>, vector<16x128xf32>, vector<16x128xf32> -> vector<16x128xf32>
      %c0_66 = arith.constant 0 : index
      %c0_67 = arith.constant 0 : index
      %79 = vector.load %arg2[%c0_66, %c0_67] : memref<128x128xf32, #tpu.memory_space<vmem>>, vector<128x128xf32>
      %cst_68 = arith.constant dense<0.000000e+00> : vector<16x128xf32>
      %80 = tpu.matmul %78, %79, %cst_68 {dimension_numbers = #tpu.dot_dimension_numbers<[1], [0], [0], [1], [0, 0, 1, 1], [], []>} : vector<16x128xf32>, vector<128x128xf32>, vector<16x128xf32> -> vector<16x128xf32>
      %81 = arith.mulf %80, %80 : vector<16x128xf32>
      %82 = vector.shape_cast %81 : vector<16x128xf32> to vector<1x16x128xf32>
      %cst_69 = arith.constant dense<0.000000e+00> : vector<1xf32>
      %83 = vector.multi_reduction <add>, %82, %cst_69 [1, 2] : vector<1x16x128xf32> to vector<1xf32>
      %84 = vector.shape_cast %83 : vector<1xf32> to vector<1x1x1xf32>
      %85 = vector.extract %84[0, 0, 0] : f32 from vector<1x1x1xf32>
      %86 = vector.broadcast %85 : f32 to vector<1x1xf32>
      %87 = arith.divf %76, %86 : vector<1x1xf32>
      %c0_70 = arith.constant 0 : index
      %c0_71 = arith.constant 0 : index
      %88 = vector.load %arg6[%c0_70, %c0_71] : memref<16x128xf32, #tpu.memory_space<vmem>>, vector<16x128xf32>
      %89 = vector.broadcast %87 : vector<1x1xf32> to vector<16x128xf32>
      %90 = arith.mulf %89, %75 : vector<16x128xf32>
      %91 = arith.addf %88, %90 : vector<16x128xf32>
      %c0_72 = arith.constant 0 : index
      %c0_73 = arith.constant 0 : index
      %92 = vector.load %arg6[%c0_72, %c0_73] : memref<16x128xf32, #tpu.memory_space<vmem>>, vector<16x128xf32>
      tpu.vector_store %arg6[%c0_72, %c0_73], %91 {strides = array<i32>} : memref<16x128xf32, #tpu.memory_space<vmem>>, vector<16x128xf32>,
      %c0_74 = arith.constant 0 : index
      %c0_75 = arith.constant 0 : index
      %93 = vector.load %arg7[%c0_74, %c0_75] : memref<16x128xf32, #tpu.memory_space<vmem>>, vector<16x128xf32>
      %94 = vector.broadcast %87 : vector<1x1xf32> to vector<16x128xf32>
      %95 = arith.mulf %94, %80 : vector<16x128xf32>
      %96 = arith.subf %93, %95 : vector<16x128xf32>
      %c0_76 = arith.constant 0 : index
      %c0_77 = arith.constant 0 : index
      %97 = vector.load %arg7[%c0_76, %c0_77] : memref<16x128xf32, #tpu.memory_space<vmem>>, vector<16x128xf32>
      tpu.vector_store %arg7[%c0_76, %c0_77], %96 {strides = array<i32>} : memref<16x128xf32, #tpu.memory_space<vmem>>, vector<16x128xf32>,
      %c0_78 = arith.constant 0 : index
      %c0_79 = arith.constant 0 : index
      %98 = vector.load %arg1[%c0_78, %c0_79] : memref<16x16xf32, #tpu.memory_space<vmem>>, vector<16x16xf32>
      %cst_80 = arith.constant dense<0.000000e+00> : vector<16x128xf32>
      %99 = tpu.matmul %98, %96, %cst_80 {dimension_numbers = #tpu.dot_dimension_numbers<[1], [0], [0], [1], [0, 0, 1, 1], [], []>} : vector<16x16xf32>, vector<16x128xf32>, vector<16x128xf32> -> vector<16x128xf32>
      %c0_81 = arith.constant 0 : index
      %c0_82 = arith.constant 0 : index
      %100 = vector.load %arg3[%c0_81, %c0_82] : memref<128x128xf32, #tpu.memory_space<vmem>>, vector<128x128xf32>
      %cst_83 = arith.constant dense<0.000000e+00> : vector<16x128xf32>
      %101 = tpu.matmul %99, %100, %cst_83 {dimension_numbers = #tpu.dot_dimension_numbers<[1], [0], [0], [1], [0, 0, 1, 1], [], []>} : vector<16x128xf32>, vector<128x128xf32>, vector<16x128xf32> -> vector<16x128xf32>
      %102 = arith.mulf %101, %101 : vector<16x128xf32>
      %103 = vector.shape_cast %102 : vector<16x128xf32> to vector<1x16x128xf32>
      %cst_84 = arith.constant dense<0.000000e+00> : vector<1xf32>
      %104 = vector.multi_reduction <add>, %103, %cst_84 [1, 2] : vector<1x16x128xf32> to vector<1xf32>
      %105 = vector.shape_cast %104 : vector<1xf32> to vector<1x1x1xf32>
      %106 = vector.extract %105[0, 0, 0] : f32 from vector<1x1x1xf32>
      %107 = vector.broadcast %106 : f32 to vector<1x1xf32>
      %108 = arith.divf %107, %76 : vector<1x1xf32>
      %109 = vector.broadcast %108 : vector<1x1xf32> to vector<16x128xf32>
      %110 = arith.mulf %109, %75 : vector<16x128xf32>
      %111 = arith.addf %101, %110 : vector<16x128xf32>
      %c0_85 = arith.constant 0 : index
      %c0_86 = arith.constant 0 : index
      %112 = vector.load %arg8[%c0_85, %c0_86] : memref<16x128xf32, #tpu.memory_space<vmem>>, vector<16x128xf32>
      tpu.vector_store %arg8[%c0_85, %c0_86], %111 {strides = array<i32>} : memref<16x128xf32, #tpu.memory_space<vmem>>, vector<16x128xf32>,
      %c0_87 = arith.constant 0 : index
      %c0_88 = arith.constant 0 : index
      %113 = vector.load %arg9[%c0_87, %c0_88] : memref<1x1xf32, #tpu.memory_space<vmem>>, vector<1x1xf32>
      tpu.vector_store %arg9[%c0_87, %c0_88], %107 {strides = array<i32>} : memref<1x1xf32, #tpu.memory_space<vmem>>, vector<1x1xf32>,
      %114 = arith.mulf %96, %96 : vector<16x128xf32>
      %115 = vector.shape_cast %114 : vector<16x128xf32> to vector<1x16x128xf32>
      %cst_89 = arith.constant dense<0.000000e+00> : vector<1xf32>
      %116 = vector.multi_reduction <add>, %115, %cst_89 [1, 2] : vector<1x16x128xf32> to vector<1xf32>
      %117 = vector.shape_cast %116 : vector<1xf32> to vector<1x1x1xf32>
      %118 = vector.extract %117[0, 0, 0] : f32 from vector<1x1x1xf32>
      %119 = arith.cmpf olt, %118, %14 : f32
      %c1_i32_90 = arith.constant 1 : i32
      %c0_i32_91 = arith.constant 0 : i32
      %120 = arith.select %119, %c1_i32_90, %c0_i32_91 : i32
      %c0_92 = arith.constant 0 : index
      %121 = memref.load %arg10[%c0_92] : memref<1xi32, #tpu.memory_space<smem>>
      memref.store %120, %arg10[%c0_92] : memref<1xi32, #tpu.memory_space<smem>>
    } else {
    }
    %c7_i32 = arith.constant 7 : i32
    %c0_50 = arith.constant 0 : index
    %63 = memref.load %arg10[%c0_50] : memref<1xi32, #tpu.memory_space<smem>>
    %c0_i32_51 = arith.constant 0 : i32
    %64 = arith.cmpi eq, %63, %c0_i32_51 : i32
    %65 = arith.extui %64 : i1 to i32
    %c0_i32_52 = arith.constant 0 : i32
    %66 = arith.cmpi ne, %65, %c0_i32_52 : i32
    scf.if %66 {
      %c0_59 = arith.constant 0 : index
      %c0_60 = arith.constant 0 : index
      %75 = vector.load %arg8[%c0_59, %c0_60] : memref<16x128xf32, #tpu.memory_space<vmem>>, vector<16x128xf32>
      %c0_61 = arith.constant 0 : index
      %c0_62 = arith.constant 0 : index
      %76 = vector.load %arg9[%c0_61, %c0_62] : memref<1x1xf32, #tpu.memory_space<vmem>>, vector<1x1xf32>
      %c0_63 = arith.constant 0 : index
      %c0_64 = arith.constant 0 : index
      %77 = vector.load %arg0[%c0_63, %c0_64] : memref<16x16xf32, #tpu.memory_space<vmem>>, vector<16x16xf32>
      %cst_65 = arith.constant dense<0.000000e+00> : vector<16x128xf32>
      %78 = tpu.matmul %77, %75, %cst_65 {dimension_numbers = #tpu.dot_dimension_numbers<[1], [0], [0], [1], [0, 0, 1, 1], [], []>} : vector<16x16xf32>, vector<16x128xf32>, vector<16x128xf32> -> vector<16x128xf32>
      %c0_66 = arith.constant 0 : index
      %c0_67 = arith.constant 0 : index
      %79 = vector.load %arg2[%c0_66, %c0_67] : memref<128x128xf32, #tpu.memory_space<vmem>>, vector<128x128xf32>
      %cst_68 = arith.constant dense<0.000000e+00> : vector<16x128xf32>
      %80 = tpu.matmul %78, %79, %cst_68 {dimension_numbers = #tpu.dot_dimension_numbers<[1], [0], [0], [1], [0, 0, 1, 1], [], []>} : vector<16x128xf32>, vector<128x128xf32>, vector<16x128xf32> -> vector<16x128xf32>
      %81 = arith.mulf %80, %80 : vector<16x128xf32>
      %82 = vector.shape_cast %81 : vector<16x128xf32> to vector<1x16x128xf32>
      %cst_69 = arith.constant dense<0.000000e+00> : vector<1xf32>
      %83 = vector.multi_reduction <add>, %82, %cst_69 [1, 2] : vector<1x16x128xf32> to vector<1xf32>
      %84 = vector.shape_cast %83 : vector<1xf32> to vector<1x1x1xf32>
      %85 = vector.extract %84[0, 0, 0] : f32 from vector<1x1x1xf32>
      %86 = vector.broadcast %85 : f32 to vector<1x1xf32>
      %87 = arith.divf %76, %86 : vector<1x1xf32>
      %c0_70 = arith.constant 0 : index
      %c0_71 = arith.constant 0 : index
      %88 = vector.load %arg6[%c0_70, %c0_71] : memref<16x128xf32, #tpu.memory_space<vmem>>, vector<16x128xf32>
      %89 = vector.broadcast %87 : vector<1x1xf32> to vector<16x128xf32>
      %90 = arith.mulf %89, %75 : vector<16x128xf32>
      %91 = arith.addf %88, %90 : vector<16x128xf32>
      %c0_72 = arith.constant 0 : index
      %c0_73 = arith.constant 0 : index
      %92 = vector.load %arg6[%c0_72, %c0_73] : memref<16x128xf32, #tpu.memory_space<vmem>>, vector<16x128xf32>
      tpu.vector_store %arg6[%c0_72, %c0_73], %91 {strides = array<i32>} : memref<16x128xf32, #tpu.memory_space<vmem>>, vector<16x128xf32>,
      %c0_74 = arith.constant 0 : index
      %c0_75 = arith.constant 0 : index
      %93 = vector.load %arg7[%c0_74, %c0_75] : memref<16x128xf32, #tpu.memory_space<vmem>>, vector<16x128xf32>
      %94 = vector.broadcast %87 : vector<1x1xf32> to vector<16x128xf32>
      %95 = arith.mulf %94, %80 : vector<16x128xf32>
      %96 = arith.subf %93, %95 : vector<16x128xf32>
      %c0_76 = arith.constant 0 : index
      %c0_77 = arith.constant 0 : index
      %97 = vector.load %arg7[%c0_76, %c0_77] : memref<16x128xf32, #tpu.memory_space<vmem>>, vector<16x128xf32>
      tpu.vector_store %arg7[%c0_76, %c0_77], %96 {strides = array<i32>} : memref<16x128xf32, #tpu.memory_space<vmem>>, vector<16x128xf32>,
      %c0_78 = arith.constant 0 : index
      %c0_79 = arith.constant 0 : index
      %98 = vector.load %arg1[%c0_78, %c0_79] : memref<16x16xf32, #tpu.memory_space<vmem>>, vector<16x16xf32>
      %cst_80 = arith.constant dense<0.000000e+00> : vector<16x128xf32>
      %99 = tpu.matmul %98, %96, %cst_80 {dimension_numbers = #tpu.dot_dimension_numbers<[1], [0], [0], [1], [0, 0, 1, 1], [], []>} : vector<16x16xf32>, vector<16x128xf32>, vector<16x128xf32> -> vector<16x128xf32>
      %c0_81 = arith.constant 0 : index
      %c0_82 = arith.constant 0 : index
      %100 = vector.load %arg3[%c0_81, %c0_82] : memref<128x128xf32, #tpu.memory_space<vmem>>, vector<128x128xf32>
      %cst_83 = arith.constant dense<0.000000e+00> : vector<16x128xf32>
      %101 = tpu.matmul %99, %100, %cst_83 {dimension_numbers = #tpu.dot_dimension_numbers<[1], [0], [0], [1], [0, 0, 1, 1], [], []>} : vector<16x128xf32>, vector<128x128xf32>, vector<16x128xf32> -> vector<16x128xf32>
      %102 = arith.mulf %101, %101 : vector<16x128xf32>
      %103 = vector.shape_cast %102 : vector<16x128xf32> to vector<1x16x128xf32>
      %cst_84 = arith.constant dense<0.000000e+00> : vector<1xf32>
      %104 = vector.multi_reduction <add>, %103, %cst_84 [1, 2] : vector<1x16x128xf32> to vector<1xf32>
      %105 = vector.shape_cast %104 : vector<1xf32> to vector<1x1x1xf32>
      %106 = vector.extract %105[0, 0, 0] : f32 from vector<1x1x1xf32>
      %107 = vector.broadcast %106 : f32 to vector<1x1xf32>
      %108 = arith.divf %107, %76 : vector<1x1xf32>
      %109 = vector.broadcast %108 : vector<1x1xf32> to vector<16x128xf32>
      %110 = arith.mulf %109, %75 : vector<16x128xf32>
      %111 = arith.addf %101, %110 : vector<16x128xf32>
      %c0_85 = arith.constant 0 : index
      %c0_86 = arith.constant 0 : index
      %112 = vector.load %arg8[%c0_85, %c0_86] : memref<16x128xf32, #tpu.memory_space<vmem>>, vector<16x128xf32>
      tpu.vector_store %arg8[%c0_85, %c0_86], %111 {strides = array<i32>} : memref<16x128xf32, #tpu.memory_space<vmem>>, vector<16x128xf32>,
      %c0_87 = arith.constant 0 : index
      %c0_88 = arith.constant 0 : index
      %113 = vector.load %arg9[%c0_87, %c0_88] : memref<1x1xf32, #tpu.memory_space<vmem>>, vector<1x1xf32>
      tpu.vector_store %arg9[%c0_87, %c0_88], %107 {strides = array<i32>} : memref<1x1xf32, #tpu.memory_space<vmem>>, vector<1x1xf32>,
      %114 = arith.mulf %96, %96 : vector<16x128xf32>
      %115 = vector.shape_cast %114 : vector<16x128xf32> to vector<1x16x128xf32>
      %cst_89 = arith.constant dense<0.000000e+00> : vector<1xf32>
      %116 = vector.multi_reduction <add>, %115, %cst_89 [1, 2] : vector<1x16x128xf32> to vector<1xf32>
      %117 = vector.shape_cast %116 : vector<1xf32> to vector<1x1x1xf32>
      %118 = vector.extract %117[0, 0, 0] : f32 from vector<1x1x1xf32>
      %119 = arith.cmpf olt, %118, %14 : f32
      %c1_i32_90 = arith.constant 1 : i32
      %c0_i32_91 = arith.constant 0 : i32
      %120 = arith.select %119, %c1_i32_90, %c0_i32_91 : i32
      %c0_92 = arith.constant 0 : index
      %121 = memref.load %arg10[%c0_92] : memref<1xi32, #tpu.memory_space<smem>>
      memref.store %120, %arg10[%c0_92] : memref<1xi32, #tpu.memory_space<smem>>
    } else {
    }
    %c8_i32 = arith.constant 8 : i32
    %c0_53 = arith.constant 0 : index
    %67 = memref.load %arg10[%c0_53] : memref<1xi32, #tpu.memory_space<smem>>
    %c0_i32_54 = arith.constant 0 : i32
    %68 = arith.cmpi eq, %67, %c0_i32_54 : i32
    %69 = arith.extui %68 : i1 to i32
    %c0_i32_55 = arith.constant 0 : i32
    %70 = arith.cmpi ne, %69, %c0_i32_55 : i32
    scf.if %70 {
      %c0_59 = arith.constant 0 : index
      %c0_60 = arith.constant 0 : index
      %75 = vector.load %arg8[%c0_59, %c0_60] : memref<16x128xf32, #tpu.memory_space<vmem>>, vector<16x128xf32>
      %c0_61 = arith.constant 0 : index
      %c0_62 = arith.constant 0 : index
      %76 = vector.load %arg9[%c0_61, %c0_62] : memref<1x1xf32, #tpu.memory_space<vmem>>, vector<1x1xf32>
      %c0_63 = arith.constant 0 : index
      %c0_64 = arith.constant 0 : index
      %77 = vector.load %arg0[%c0_63, %c0_64] : memref<16x16xf32, #tpu.memory_space<vmem>>, vector<16x16xf32>
      %cst_65 = arith.constant dense<0.000000e+00> : vector<16x128xf32>
      %78 = tpu.matmul %77, %75, %cst_65 {dimension_numbers = #tpu.dot_dimension_numbers<[1], [0], [0], [1], [0, 0, 1, 1], [], []>} : vector<16x16xf32>, vector<16x128xf32>, vector<16x128xf32> -> vector<16x128xf32>
      %c0_66 = arith.constant 0 : index
      %c0_67 = arith.constant 0 : index
      %79 = vector.load %arg2[%c0_66, %c0_67] : memref<128x128xf32, #tpu.memory_space<vmem>>, vector<128x128xf32>
      %cst_68 = arith.constant dense<0.000000e+00> : vector<16x128xf32>
      %80 = tpu.matmul %78, %79, %cst_68 {dimension_numbers = #tpu.dot_dimension_numbers<[1], [0], [0], [1], [0, 0, 1, 1], [], []>} : vector<16x128xf32>, vector<128x128xf32>, vector<16x128xf32> -> vector<16x128xf32>
      %81 = arith.mulf %80, %80 : vector<16x128xf32>
      %82 = vector.shape_cast %81 : vector<16x128xf32> to vector<1x16x128xf32>
      %cst_69 = arith.constant dense<0.000000e+00> : vector<1xf32>
      %83 = vector.multi_reduction <add>, %82, %cst_69 [1, 2] : vector<1x16x128xf32> to vector<1xf32>
      %84 = vector.shape_cast %83 : vector<1xf32> to vector<1x1x1xf32>
      %85 = vector.extract %84[0, 0, 0] : f32 from vector<1x1x1xf32>
      %86 = vector.broadcast %85 : f32 to vector<1x1xf32>
      %87 = arith.divf %76, %86 : vector<1x1xf32>
      %c0_70 = arith.constant 0 : index
      %c0_71 = arith.constant 0 : index
      %88 = vector.load %arg6[%c0_70, %c0_71] : memref<16x128xf32, #tpu.memory_space<vmem>>, vector<16x128xf32>
      %89 = vector.broadcast %87 : vector<1x1xf32> to vector<16x128xf32>
      %90 = arith.mulf %89, %75 : vector<16x128xf32>
      %91 = arith.addf %88, %90 : vector<16x128xf32>
      %c0_72 = arith.constant 0 : index
      %c0_73 = arith.constant 0 : index
      %92 = vector.load %arg6[%c0_72, %c0_73] : memref<16x128xf32, #tpu.memory_space<vmem>>, vector<16x128xf32>
      tpu.vector_store %arg6[%c0_72, %c0_73], %91 {strides = array<i32>} : memref<16x128xf32, #tpu.memory_space<vmem>>, vector<16x128xf32>,
      %c0_74 = arith.constant 0 : index
      %c0_75 = arith.constant 0 : index
      %93 = vector.load %arg7[%c0_74, %c0_75] : memref<16x128xf32, #tpu.memory_space<vmem>>, vector<16x128xf32>
      %94 = vector.broadcast %87 : vector<1x1xf32> to vector<16x128xf32>
      %95 = arith.mulf %94, %80 : vector<16x128xf32>
      %96 = arith.subf %93, %95 : vector<16x128xf32>
      %c0_76 = arith.constant 0 : index
      %c0_77 = arith.constant 0 : index
      %97 = vector.load %arg7[%c0_76, %c0_77] : memref<16x128xf32, #tpu.memory_space<vmem>>, vector<16x128xf32>
      tpu.vector_store %arg7[%c0_76, %c0_77], %96 {strides = array<i32>} : memref<16x128xf32, #tpu.memory_space<vmem>>, vector<16x128xf32>,
      %c0_78 = arith.constant 0 : index
      %c0_79 = arith.constant 0 : index
      %98 = vector.load %arg1[%c0_78, %c0_79] : memref<16x16xf32, #tpu.memory_space<vmem>>, vector<16x16xf32>
      %cst_80 = arith.constant dense<0.000000e+00> : vector<16x128xf32>
      %99 = tpu.matmul %98, %96, %cst_80 {dimension_numbers = #tpu.dot_dimension_numbers<[1], [0], [0], [1], [0, 0, 1, 1], [], []>} : vector<16x16xf32>, vector<16x128xf32>, vector<16x128xf32> -> vector<16x128xf32>
      %c0_81 = arith.constant 0 : index
      %c0_82 = arith.constant 0 : index
      %100 = vector.load %arg3[%c0_81, %c0_82] : memref<128x128xf32, #tpu.memory_space<vmem>>, vector<128x128xf32>
      %cst_83 = arith.constant dense<0.000000e+00> : vector<16x128xf32>
      %101 = tpu.matmul %99, %100, %cst_83 {dimension_numbers = #tpu.dot_dimension_numbers<[1], [0], [0], [1], [0, 0, 1, 1], [], []>} : vector<16x128xf32>, vector<128x128xf32>, vector<16x128xf32> -> vector<16x128xf32>
      %102 = arith.mulf %101, %101 : vector<16x128xf32>
      %103 = vector.shape_cast %102 : vector<16x128xf32> to vector<1x16x128xf32>
      %cst_84 = arith.constant dense<0.000000e+00> : vector<1xf32>
      %104 = vector.multi_reduction <add>, %103, %cst_84 [1, 2] : vector<1x16x128xf32> to vector<1xf32>
      %105 = vector.shape_cast %104 : vector<1xf32> to vector<1x1x1xf32>
      %106 = vector.extract %105[0, 0, 0] : f32 from vector<1x1x1xf32>
      %107 = vector.broadcast %106 : f32 to vector<1x1xf32>
      %108 = arith.divf %107, %76 : vector<1x1xf32>
      %109 = vector.broadcast %108 : vector<1x1xf32> to vector<16x128xf32>
      %110 = arith.mulf %109, %75 : vector<16x128xf32>
      %111 = arith.addf %101, %110 : vector<16x128xf32>
      %c0_85 = arith.constant 0 : index
      %c0_86 = arith.constant 0 : index
      %112 = vector.load %arg8[%c0_85, %c0_86] : memref<16x128xf32, #tpu.memory_space<vmem>>, vector<16x128xf32>
      tpu.vector_store %arg8[%c0_85, %c0_86], %111 {strides = array<i32>} : memref<16x128xf32, #tpu.memory_space<vmem>>, vector<16x128xf32>,
      %c0_87 = arith.constant 0 : index
      %c0_88 = arith.constant 0 : index
      %113 = vector.load %arg9[%c0_87, %c0_88] : memref<1x1xf32, #tpu.memory_space<vmem>>, vector<1x1xf32>
      tpu.vector_store %arg9[%c0_87, %c0_88], %107 {strides = array<i32>} : memref<1x1xf32, #tpu.memory_space<vmem>>, vector<1x1xf32>,
      %114 = arith.mulf %96, %96 : vector<16x128xf32>
      %115 = vector.shape_cast %114 : vector<16x128xf32> to vector<1x16x128xf32>
      %cst_89 = arith.constant dense<0.000000e+00> : vector<1xf32>
      %116 = vector.multi_reduction <add>, %115, %cst_89 [1, 2] : vector<1x16x128xf32> to vector<1xf32>
      %117 = vector.shape_cast %116 : vector<1xf32> to vector<1x1x1xf32>
      %118 = vector.extract %117[0, 0, 0] : f32 from vector<1x1x1xf32>
      %119 = arith.cmpf olt, %118, %14 : f32
      %c1_i32_90 = arith.constant 1 : i32
      %c0_i32_91 = arith.constant 0 : i32
      %120 = arith.select %119, %c1_i32_90, %c0_i32_91 : i32
      %c0_92 = arith.constant 0 : index
      %121 = memref.load %arg10[%c0_92] : memref<1xi32, #tpu.memory_space<smem>>
      memref.store %120, %arg10[%c0_92] : memref<1xi32, #tpu.memory_space<smem>>
    } else {
    }
    %c9_i32 = arith.constant 9 : i32
    %c0_56 = arith.constant 0 : index
    %71 = memref.load %arg10[%c0_56] : memref<1xi32, #tpu.memory_space<smem>>
    %c0_i32_57 = arith.constant 0 : i32
    %72 = arith.cmpi eq, %71, %c0_i32_57 : i32
    %73 = arith.extui %72 : i1 to i32
    %c0_i32_58 = arith.constant 0 : i32
    %74 = arith.cmpi ne, %73, %c0_i32_58 : i32
    scf.if %74 {
      %c0_59 = arith.constant 0 : index
      %c0_60 = arith.constant 0 : index
      %75 = vector.load %arg8[%c0_59, %c0_60] : memref<16x128xf32, #tpu.memory_space<vmem>>, vector<16x128xf32>
      %c0_61 = arith.constant 0 : index
      %c0_62 = arith.constant 0 : index
      %76 = vector.load %arg9[%c0_61, %c0_62] : memref<1x1xf32, #tpu.memory_space<vmem>>, vector<1x1xf32>
      %c0_63 = arith.constant 0 : index
      %c0_64 = arith.constant 0 : index
      %77 = vector.load %arg0[%c0_63, %c0_64] : memref<16x16xf32, #tpu.memory_space<vmem>>, vector<16x16xf32>
      %cst_65 = arith.constant dense<0.000000e+00> : vector<16x128xf32>
      %78 = tpu.matmul %77, %75, %cst_65 {dimension_numbers = #tpu.dot_dimension_numbers<[1], [0], [0], [1], [0, 0, 1, 1], [], []>} : vector<16x16xf32>, vector<16x128xf32>, vector<16x128xf32> -> vector<16x128xf32>
      %c0_66 = arith.constant 0 : index
      %c0_67 = arith.constant 0 : index
      %79 = vector.load %arg2[%c0_66, %c0_67] : memref<128x128xf32, #tpu.memory_space<vmem>>, vector<128x128xf32>
      %cst_68 = arith.constant dense<0.000000e+00> : vector<16x128xf32>
      %80 = tpu.matmul %78, %79, %cst_68 {dimension_numbers = #tpu.dot_dimension_numbers<[1], [0], [0], [1], [0, 0, 1, 1], [], []>} : vector<16x128xf32>, vector<128x128xf32>, vector<16x128xf32> -> vector<16x128xf32>
      %81 = arith.mulf %80, %80 : vector<16x128xf32>
      %82 = vector.shape_cast %81 : vector<16x128xf32> to vector<1x16x128xf32>
      %cst_69 = arith.constant dense<0.000000e+00> : vector<1xf32>
      %83 = vector.multi_reduction <add>, %82, %cst_69 [1, 2] : vector<1x16x128xf32> to vector<1xf32>
      %84 = vector.shape_cast %83 : vector<1xf32> to vector<1x1x1xf32>
      %85 = vector.extract %84[0, 0, 0] : f32 from vector<1x1x1xf32>
      %86 = vector.broadcast %85 : f32 to vector<1x1xf32>
      %87 = arith.divf %76, %86 : vector<1x1xf32>
      %c0_70 = arith.constant 0 : index
      %c0_71 = arith.constant 0 : index
      %88 = vector.load %arg6[%c0_70, %c0_71] : memref<16x128xf32, #tpu.memory_space<vmem>>, vector<16x128xf32>
      %89 = vector.broadcast %87 : vector<1x1xf32> to vector<16x128xf32>
      %90 = arith.mulf %89, %75 : vector<16x128xf32>
      %91 = arith.addf %88, %90 : vector<16x128xf32>
      %c0_72 = arith.constant 0 : index
      %c0_73 = arith.constant 0 : index
      %92 = vector.load %arg6[%c0_72, %c0_73] : memref<16x128xf32, #tpu.memory_space<vmem>>, vector<16x128xf32>
      tpu.vector_store %arg6[%c0_72, %c0_73], %91 {strides = array<i32>} : memref<16x128xf32, #tpu.memory_space<vmem>>, vector<16x128xf32>,
      %c0_74 = arith.constant 0 : index
      %c0_75 = arith.constant 0 : index
      %93 = vector.load %arg7[%c0_74, %c0_75] : memref<16x128xf32, #tpu.memory_space<vmem>>, vector<16x128xf32>
      %94 = vector.broadcast %87 : vector<1x1xf32> to vector<16x128xf32>
      %95 = arith.mulf %94, %80 : vector<16x128xf32>
      %96 = arith.subf %93, %95 : vector<16x128xf32>
      %c0_76 = arith.constant 0 : index
      %c0_77 = arith.constant 0 : index
      %97 = vector.load %arg7[%c0_76, %c0_77] : memref<16x128xf32, #tpu.memory_space<vmem>>, vector<16x128xf32>
      tpu.vector_store %arg7[%c0_76, %c0_77], %96 {strides = array<i32>} : memref<16x128xf32, #tpu.memory_space<vmem>>, vector<16x128xf32>,
      %c0_78 = arith.constant 0 : index
      %c0_79 = arith.constant 0 : index
      %98 = vector.load %arg1[%c0_78, %c0_79] : memref<16x16xf32, #tpu.memory_space<vmem>>, vector<16x16xf32>
      %cst_80 = arith.constant dense<0.000000e+00> : vector<16x128xf32>
      %99 = tpu.matmul %98, %96, %cst_80 {dimension_numbers = #tpu.dot_dimension_numbers<[1], [0], [0], [1], [0, 0, 1, 1], [], []>} : vector<16x16xf32>, vector<16x128xf32>, vector<16x128xf32> -> vector<16x128xf32>
      %c0_81 = arith.constant 0 : index
      %c0_82 = arith.constant 0 : index
      %100 = vector.load %arg3[%c0_81, %c0_82] : memref<128x128xf32, #tpu.memory_space<vmem>>, vector<128x128xf32>
      %cst_83 = arith.constant dense<0.000000e+00> : vector<16x128xf32>
      %101 = tpu.matmul %99, %100, %cst_83 {dimension_numbers = #tpu.dot_dimension_numbers<[1], [0], [0], [1], [0, 0, 1, 1], [], []>} : vector<16x128xf32>, vector<128x128xf32>, vector<16x128xf32> -> vector<16x128xf32>
      %102 = arith.mulf %101, %101 : vector<16x128xf32>
      %103 = vector.shape_cast %102 : vector<16x128xf32> to vector<1x16x128xf32>
      %cst_84 = arith.constant dense<0.000000e+00> : vector<1xf32>
      %104 = vector.multi_reduction <add>, %103, %cst_84 [1, 2] : vector<1x16x128xf32> to vector<1xf32>
      %105 = vector.shape_cast %104 : vector<1xf32> to vector<1x1x1xf32>
      %106 = vector.extract %105[0, 0, 0] : f32 from vector<1x1x1xf32>
      %107 = vector.broadcast %106 : f32 to vector<1x1xf32>
      %108 = arith.divf %107, %76 : vector<1x1xf32>
      %109 = vector.broadcast %108 : vector<1x1xf32> to vector<16x128xf32>
      %110 = arith.mulf %109, %75 : vector<16x128xf32>
      %111 = arith.addf %101, %110 : vector<16x128xf32>
      %c0_85 = arith.constant 0 : index
      %c0_86 = arith.constant 0 : index
      %112 = vector.load %arg8[%c0_85, %c0_86] : memref<16x128xf32, #tpu.memory_space<vmem>>, vector<16x128xf32>
      tpu.vector_store %arg8[%c0_85, %c0_86], %111 {strides = array<i32>} : memref<16x128xf32, #tpu.memory_space<vmem>>, vector<16x128xf32>,
      %c0_87 = arith.constant 0 : index
      %c0_88 = arith.constant 0 : index
      %113 = vector.load %arg9[%c0_87, %c0_88] : memref<1x1xf32, #tpu.memory_space<vmem>>, vector<1x1xf32>
      tpu.vector_store %arg9[%c0_87, %c0_88], %107 {strides = array<i32>} : memref<1x1xf32, #tpu.memory_space<vmem>>, vector<1x1xf32>,
      %114 = arith.mulf %96, %96 : vector<16x128xf32>
      %115 = vector.shape_cast %114 : vector<16x128xf32> to vector<1x16x128xf32>
      %cst_89 = arith.constant dense<0.000000e+00> : vector<1xf32>
      %116 = vector.multi_reduction <add>, %115, %cst_89 [1, 2] : vector<1x16x128xf32> to vector<1xf32>
      %117 = vector.shape_cast %116 : vector<1xf32> to vector<1x1x1xf32>
      %118 = vector.extract %117[0, 0, 0] : f32 from vector<1x1x1xf32>
      %119 = arith.cmpf olt, %118, %14 : f32
      %c1_i32_90 = arith.constant 1 : i32
      %c0_i32_91 = arith.constant 0 : i32
      %120 = arith.select %119, %c1_i32_90, %c0_i32_91 : i32
      %c0_92 = arith.constant 0 : index
      %121 = memref.load %arg10[%c0_92] : memref<1xi32, #tpu.memory_space<smem>>
      memref.store %120, %arg10[%c0_92] : memref<1xi32, #tpu.memory_space<smem>>
    } else {
    }
    return
  }
}

</mosaic_0001>

<llo_original>
// kernel: graph_cgls_forward.1
$region0: #{graph_cgls_forward.1}
  #allocation0 [shape = 'u32[]', space=smem, size = 0x4, offset = 0x4, fixed_abs, tag = 'smem constant byte address 0x4 - core index']
  #allocation1 [shape = 'u32[144,128]{1,0:T(1,128)}', space=vmem, size = 0x12000, scoped, tag = 'internal scratch']
  #allocation2 [shape = 'f32[16,128]{1,0:T(8,128)}', space=vmem, size = 0x2000, scoped, tag = 'scratch operand']
  #allocation3 [shape = 'f32[1,1]{1,0:T(1,128)}', space=vmem, size = 0x200, scoped, tag = 'scratch operand']
  #allocation4 [shape = 's32[1]{0:T(128)}', space=smem, size = 0x200, scoped, tag = 'scratch operand']
  %s0 = inlined_call_operand.vmem [shape: f32[16,16], index: 0, kind: input, shape index: {}]
  %s1 = inlined_call_operand.vmem [shape: f32[16,16], index: 1, kind: input, shape index: {}]
  %s2 = inlined_call_operand.vmem [shape: f32[128,128], index: 2, kind: input, shape index: {}]
  %s3 = inlined_call_operand.vmem [shape: f32[128,128], index: 3, kind: input, shape index: {}]
  %s4 = inlined_call_operand.vmem [shape: f32[16,128], index: 4, kind: input, shape index: {}]
  %s5 = inlined_call_operand.vmem [shape: f32[16,128], index: 5, kind: input, shape index: {}]
  %s6 = inlined_call_operand.hbm [shape: f32[16,128], index: 6, kind: output, shape index: {0}]
  %s7 = inlined_call_operand.hbm [shape: f32[16,128], index: 7, kind: output, shape index: {1}]
  %8 = xla_tuple %s6, %s7
  %s9 = sld [smem:[#allocation0]]
  $region82: #{graph_cgls_forward.1} parent=0
    _
  %s11 = ssub.s32 1, %s9
  %s12 = scalar_select 0, %s11, %s9
  $region1: #{graph_cgls_forward.1} parent=0
    #allocation5 [shape = 'u8[8192]{0}', space=vmem, size = 0x2000, scoped, tag = 'output window, operand 0, single buffered']
    #allocation6 [shape = 's32[1]{0}', space=sflag, size = 0x4, scoped, tag = 'scoped memory for graph_cgls_forward.1']
    #allocation7 [shape = 'u8[8192]{0}', space=vmem, size = 0x2000, scoped, tag = 'output window, operand 1, single buffered']
    #allocation8 [shape = 's32[1]{0}', space=sflag, size = 0x4, scoped, tag = 'scoped memory for graph_cgls_forward.1']
    %13 = vsyncpa [#allocation6], 0
    %14 = vsyncpa [#allocation8], 0
    // Predicated region
    $region2: #{graph_cgls_forward.1} parent=1 // pred_check
      _
    $region3: #{graph_cgls_forward.1} parent=1 // pred_check_branch
      %16 = sbr.rel (0) target = $region5
    $region4: #{graph_cgls_forward.1} parent=1 // pred_region
      _
    $region5: #{graph_cgls_forward.1} parent=1 // pred_fallthru
      _
    // Predicated region
    $region6: #{graph_cgls_forward.1} parent=1 // pred_check
      _
    $region7: #{graph_cgls_forward.1} parent=1 // pred_check_branch
      %18 = sbr.rel (0) target = $region9
    $region8: #{graph_cgls_forward.1} parent=1 // pred_region
      _
    $region9: #{graph_cgls_forward.1} parent=1 // pred_fallthru
      _
    // Predicated region
    $region10: #{graph_cgls_forward.1} parent=1 // pred_check
      _
    $region11: #{graph_cgls_forward.1} parent=1 // pred_check_branch
      %20 = sbr.rel (0) target = $region13
    $region12: #{graph_cgls_forward.1} parent=1 // pred_region
      _
    $region13: #{graph_cgls_forward.1} parent=1 // pred_fallthru
      _
    // Predicated region
    $region14: #{graph_cgls_forward.1} parent=1 // pred_check
      _
    $region15: #{graph_cgls_forward.1} parent=1 // pred_check_branch
      %22 = sbr.rel (0) target = $region17
    $region16: #{graph_cgls_forward.1} parent=1 // pred_region
      _
    $region17: #{graph_cgls_forward.1} parent=1 // pred_fallthru
      _
    // Predicated region
    $region18: #{graph_cgls_forward.1} parent=1 // pred_check
      _
    $region19: #{graph_cgls_forward.1} parent=1 // pred_check_branch
      %24 = sbr.rel (0) target = $region21
    $region20: #{graph_cgls_forward.1} parent=1 // pred_region
      _
    $region21: #{graph_cgls_forward.1} parent=1 // pred_fallthru
      _
    // Predicated region
    $region22: #{graph_cgls_forward.1} parent=1 // pred_check
      _
    $region23: #{graph_cgls_forward.1} parent=1 // pred_check_branch
      %26 = sbr.rel (0) target = $region25
    $region24: #{graph_cgls_forward.1} parent=1 // pred_region
      _
    $region25: #{graph_cgls_forward.1} parent=1 // pred_fallthru
      _
    %v27 = vld [vmem:[%s4] sm:$0xff]
    %v28 = vld [vmem:[%s4 + $0x8] sm:$0xff]
    %v29 = vld [vmem:[%s5] sm:$0xff]
    %v30 = vld [vmem:[%s5 + $0x8] sm:$0xff]
    %31 = vst [vmem:[#allocation5] sm:$0xff] %v29
    %32 = vst [vmem:[#allocation5 + $0x8] sm:$0xff] %v30
    %v33 = vld [vmem:[%s0] sm:$0xff]
    %v34 = vld [vmem:[%s0 + $0x8] sm:$0xff]
    %vm35 = vcmask 130048
    %v37 = vsel %vm35, %v33, 0
    %v40 = vsel %vm35, %v34, 0
    %42 = vmatprep.subr.mxu0 0.0
    %43 = vmatpush1.msra.mxu0 %v29
    %44 = vmatprep.subr.mxu0 0.0
    %45 = vmatpush1.msra.mxu0 %v30
    %46 = vmatprep.subr.mxu0 0.0
    %47 = vmatpush1.msra.mxu0 0.0
    %48 = vmatprep.subr.mxu0 0.0
    %49 = vmatpush1.msra.mxu0 0.0
    %50 = vmatprep.subr.mxu0 0.0
    %51 = vmatpush1.msra.mxu0 0.0
    %52 = vmatprep.subr.mxu0 0.0
    %53 = vmatpush1.msra.mxu0 0.0
    %54 = vmatprep.subr.mxu0 0.0
    %55 = vmatpush1.msra.mxu0 0.0
    %56 = vmatprep.subr.mxu0 0.0
    %57 = vmatpush1.msra.mxu0 0.0
    %58 = vmatprep.subr.mxu0 0.0
    %59 = vmatpush1.msra.mxu0 0.0
    %60 = vmatprep.subr.mxu0 0.0
    %61 = vmatpush1.msra.mxu0 0.0
    %62 = vmatprep.subr.mxu0 0.0
    %63 = vmatpush1.msra.mxu0 0.0
    %64 = vmatprep.subr.mxu0 0.0
    %65 = vmatpush1.msra.mxu0 0.0
    %66 = vmatprep.subr.mxu0 0.0
    %67 = vmatpush1.msra.mxu0 0.0
    %68 = vmatprep.subr.mxu0 0.0
    %69 = vmatpush1.msra.mxu0 0.0
    %70 = vmatprep.subr.mxu0 0.0
    %71 = vmatpush1.msra.mxu0 0.0
    %72 = vmatprep.subr.mxu0 0.0
    %73 = vmatpush1.msra.mxu0 0.0
    %74 = vmatprep.subr.mxu0 0.0
    %75 = vmatpush1.msra.mxu0 0.0
    %76 = vmatprep.subr.mxu0 0.0
    %77 = vmatpush1.msra.mxu0 0.0
    %78 = vmatprep.subr.mxu0 0.0
    %79 = vmatpush1.msra.mxu0 0.0
    %80 = vmatprep.subr.mxu0 0.0
    %81 = vmatpush1.msra.mxu0 0.0
    %82 = vmatprep.subr.mxu0 0.0
    %83 = vmatpush1.msra.mxu0 0.0
    %84 = vmatprep.subr.mxu0 0.0
    %85 = vmatpush1.msra.mxu0 0.0
    %86 = vmatprep.subr.mxu0 0.0
    %87 = vmatpush1.msra.mxu0 0.0
    %88 = vmatprep.subr.mxu0 0.0
    %89 = vmatpush1.msra.mxu0 0.0
    %90 = vmatprep.subr.mxu0 0.0
    %91 = vmatpush1.msra.mxu0 0.0
    %92 = vmatprep.subr.mxu0 0.0
    %93 = vmatpush1.msra.mxu0 0.0
    %94 = vmatprep.subr.mxu0 0.0
    %95 = vmatpush1.msra.mxu0 0.0
    %96 = vmatprep.subr.mxu0 0.0
    %97 = vmatpush1.msra.mxu0 0.0
    %98 = vmatprep.subr.mxu0 0.0
    %99 = vmatpush1.msra.mxu0 0.0
    %100 = vmatprep.subr.mxu0 0.0
    %101 = vmatpush1.msra.mxu0 0.0
    %102 = vmatprep.subr.mxu0 0.0
    %103 = vmatpush1.msra.mxu0 0.0
    %104 = vmatprep.subr.mxu0 0.0
    %105 = vmatpush1.msra.mxu0 0.0
    %106 = vmatprep.mubr.f32.mxu0 0.0
    %107 = vmatmul.mubr.f32.gmra.mrb[0].mxu0 %v37
    %v108 = vpop.f32.mrb[0].mxu0
    %v109 = vadd.f32 0.0, %v108
    %v110 = vpop.f32.mrb[0].mxu0
    %111 = vmatprep.mubr.f32.mxu0 0.0
    %112 = vmatmul.mubr.f32.gmra.mrb[0].mxu0 %v40
    %v113 = vpop.f32.mrb[0].mxu0
    %v114 = vadd.f32 0.0, %v113
    %v115 = vpop.f32.mrb[0].mxu0
    %116 = vdwg.mxu0
    %v117 = vld [vmem:[%s2] sm:$0xff]
    %v118 = vld [vmem:[%s2 + $0x8] sm:$0xff]
    %v119 = vld [vmem:[%s2 + $0x10] sm:$0xff]
    %v120 = vld [vmem:[%s2 + $0x18] sm:$0xff]
    %v121 = vld [vmem:[%s2 + $0x20] sm:$0xff]
    %v122 = vld [vmem:[%s2 + $0x28] sm:$0xff]
    %v123 = vld [vmem:[%s2 + $0x30] sm:$0xff]
    %v124 = vld [vmem:[%s2 + $0x38] sm:$0xff]
    %v125 = vld [vmem:[%s2 + $0x40] sm:$0xff]
    %v126 = vld [vmem:[%s2 + $0x48] sm:$0xff]
    %v127 = vld [vmem:[%s2 + $0x50] sm:$0xff]
    %v128 = vld [vmem:[%s2 + $0x58] sm:$0xff]
    %v129 = vld [vmem:[%s2 + $0x60] sm:$0xff]
    %v130 = vld [vmem:[%s2 + $0x68] sm:$0xff]
    %v131 = vld [vmem:[%s2 + $0x70] sm:$0xff]
    %v132 = vld [vmem:[%s2 + $0x78] sm:$0xff]
    %133 = vmatprep.subr.mxu0 0.0
    %134 = vmatpush1.msra.mxu0 %v117
    %135 = vmatprep.subr.mxu0 0.0
    %136 = vmatpush1.msra.mxu0 %v118
    %137 = vmatprep.subr.mxu0 0.0
    %138 = vmatpush1.msra.mxu0 %v119
    %139 = vmatprep.subr.mxu0 0.0
    %140 = vmatpush1.msra.mxu0 %v120
    %141 = vmatprep.subr.mxu0 0.0
    %142 = vmatpush1.msra.mxu0 %v121
    %143 = vmatprep.subr.mxu0 0.0
    %144 = vmatpush1.msra.mxu0 %v122
    %145 = vmatprep.subr.mxu0 0.0
    %146 = vmatpush1.msra.mxu0 %v123
    %147 = vmatprep.subr.mxu0 0.0
    %148 = vmatpush1.msra.mxu0 %v124
    %149 = vmatprep.subr.mxu0 0.0
    %150 = vmatpush1.msra.mxu0 %v125
    %151 = vmatprep.subr.mxu0 0.0
    %152 = vmatpush1.msra.mxu0 %v126
    %153 = vmatprep.subr.mxu0 0.0
    %154 = vmatpush1.msra.mxu0 %v127
    %155 = vmatprep.subr.mxu0 0.0
    %156 = vmatpush1.msra.mxu0 %v128
    %157 = vmatprep.subr.mxu0 0.0
    %158 = vmatpush1.msra.mxu0 %v129
    %159 = vmatprep.subr.mxu0 0.0
    %160 = vmatpush1.msra.mxu0 %v130
    %161 = vmatprep.subr.mxu0 0.0
    %162 = vmatpush1.msra.mxu0 %v131
    %163 = vmatprep.subr.mxu0 0.0
    %164 = vmatpush1.msra.mxu0 %v132
    %165 = vmatprep.subr.mxu0 0.0
    %166 = vmatpush1.msra.mxu0 0.0
    %167 = vmatprep.subr.mxu0 0.0
    %168 = vmatpush1.msra.mxu0 0.0
    %169 = vmatprep.subr.mxu0 0.0
    %170 = vmatpush1.msra.mxu0 0.0
    %171 = vmatprep.subr.mxu0 0.0
    %172 = vmatpush1.msra.mxu0 0.0
    %173 = vmatprep.subr.mxu0 0.0
    %174 = vmatpush1.msra.mxu0 0.0
    %175 = vmatprep.subr.mxu0 0.0
    %176 = vmatpush1.msra.mxu0 0.0
    %177 = vmatprep.subr.mxu0 0.0
    %178 = vmatpush1.msra.mxu0 0.0
    %179 = vmatprep.subr.mxu0 0.0
    %180 = vmatpush1.msra.mxu0 0.0
    %181 = vmatprep.subr.mxu0 0.0
    %182 = vmatpush1.msra.mxu0 0.0
    %183 = vmatprep.subr.mxu0 0.0
    %184 = vmatpush1.msra.mxu0 0.0
    %185 = vmatprep.subr.mxu0 0.0
    %186 = vmatpush1.msra.mxu0 0.0
    %187 = vmatprep.subr.mxu0 0.0
    %188 = vmatpush1.msra.mxu0 0.0
    %189 = vmatprep.subr.mxu0 0.0
    %190 = vmatpush1.msra.mxu0 0.0
    %191 = vmatprep.subr.mxu0 0.0
    %192 = vmatpush1.msra.mxu0 0.0
    %193 = vmatprep.subr.mxu0 0.0
    %194 = vmatpush1.msra.mxu0 0.0
    %195 = vmatprep.subr.mxu0 0.0
    %196 = vmatpush1.msra.mxu0 0.0
    %197 = vmatprep.mubr.f32.mxu0 0.0
    %198 = vmatmul.mubr.f32.gmra.mrb[0].mxu0 %v109
    %v199 = vpop.f32.mrb[0].mxu0
    %v200 = vadd.f32 0.0, %v199
    %v201 = vpop.f32.mrb[0].mxu0
    %202 = vmatprep.mubr.f32.mxu0 0.0
    %203 = vmatmul.mubr.f32.gmra.mrb[0].mxu0 %v114
    %v204 = vpop.f32.mrb[0].mxu0
    %v205 = vadd.f32 0.0, %v204
    %v206 = vpop.f32.mrb[0].mxu0
    %207 = vdwg.mxu0
    %v208 = vsub.f32 %v27, %v200
    %v209 = vsub.f32 %v28, %v205
    %210 = vst [vmem:[#allocation7] sm:$0xff] %v208
    %211 = vst [vmem:[#allocation7 + $0x8] sm:$0xff] %v209
    %v212 = vmul.f32 %v27, %v27
    %v213 = vmul.f32 %v28, %v28
    %v214 = vadd.f32 %v212, %v213
    %215 = vadd.xlane.f32.xlu0 %v214
    %v216 = vpop.xlane.xlu0 %215
    %v217 = vrot.slane %v216, 4
    %v218 = vadd.f32 %v216, %v217
    %v219 = vrot.slane %v218, 2
    %v220 = vadd.f32 %v218, %v219
    %v221 = vrot.slane %v220, 1
    %v222 = vadd.f32 %v220, %v221
    %s223 = vtos %v222
    %s224 = smul.f32 %s223, 0.0001
    %v225 = vmul.f32 %v208, %v208
    %v226 = vmul.f32 %v209, %v209
    %v227 = vadd.f32 %v225, %v226
    %228 = vadd.xlane.f32.xlu0 %v227
    %v229 = vpop.xlane.xlu0 %228
    %v230 = vrot.slane %v229, 4
    %v231 = vadd.f32 %v229, %v230
    %v232 = vrot.slane %v231, 2
    %v233 = vadd.f32 %v231, %v232
    %v234 = vrot.slane %v233, 1
    %v235 = vadd.f32 %v233, %v234
    %s236 = vtos %v235
    %p237 = scmp.lt.f32.partialorder %s236, %s224
    %s238 = scalar_select %p237, 1, 0
    %s239 = scalar_lea.smem [#allocation4], 0
    %240 = sst [smem:[%s239]] %s238
    %v241 = vld [vmem:[%s1] sm:$0xff]
    %v242 = vld [vmem:[%s1 + $0x8] sm:$0xff]
    %v244 = vsel %vm35, %v241, 0
    %v247 = vsel %vm35, %v242, 0
    %249 = vmatprep.subr.mxu0 0.0
    %250 = vmatpush1.msra.mxu0 %v208
    %251 = vmatprep.subr.mxu0 0.0
    %252 = vmatpush1.msra.mxu0 %v209
    %253 = vmatprep.subr.mxu0 0.0
    %254 = vmatpush1.msra.mxu0 0.0
    %255 = vmatprep.subr.mxu0 0.0
    %256 = vmatpush1.msra.mxu0 0.0
    %257 = vmatprep.subr.mxu0 0.0
    %258 = vmatpush1.msra.mxu0 0.0
    %259 = vmatprep.subr.mxu0 0.0
    %260 = vmatpush1.msra.mxu0 0.0
    %261 = vmatprep.subr.mxu0 0.0
    %262 = vmatpush1.msra.mxu0 0.0
    %263 = vmatprep.subr.mxu0 0.0
    %264 = vmatpush1.msra.mxu0 0.0
    %265 = vmatprep.subr.mxu0 0.0
    %266 = vmatpush1.msra.mxu0 0.0
    %267 = vmatprep.subr.mxu0 0.0
    %268 = vmatpush1.msra.mxu0 0.0
    %269 = vmatprep.subr.mxu0 0.0
    %270 = vmatpush1.msra.mxu0 0.0
    %271 = vmatprep.subr.mxu0 0.0
    %272 = vmatpush1.msra.mxu0 0.0
    %273 = vmatprep.subr.mxu0 0.0
    %274 = vmatpush1.msra.mxu0 0.0
    %275 = vmatprep.subr.mxu0 0.0
    %276 = vmatpush1.msra.mxu0 0.0
    %277 = vmatprep.subr.mxu0 0.0
    %278 = vmatpush1.msra.mxu0 0.0
    %279 = vmatprep.subr.mxu0 0.0
    %280 = vmatpush1.msra.mxu0 0.0
    %281 = vmatprep.subr.mxu0 0.0
    %282 = vmatpush1.msra.mxu0 0.0
    %283 = vmatprep.subr.mxu0 0.0
    %284 = vmatpush1.msra.mxu0 0.0
    %285 = vmatprep.subr.mxu0 0.0
    %286 = vmatpush1.msra.mxu0 0.0
    %287 = vmatprep.subr.mxu0 0.0
    %288 = vmatpush1.msra.mxu0 0.0
    %289 = vmatprep.subr.mxu0 0.0
    %290 = vmatpush1.msra.mxu0 0.0
    %291 = vmatprep.subr.mxu0 0.0
    %292 = vmatpush1.msra.mxu0 0.0
    %293 = vmatprep.subr.mxu0 0.0
    %294 = vmatpush1.msra.mxu0 0.0
    %295 = vmatprep.subr.mxu0 0.0
    %296 = vmatpush1.msra.mxu0 0.0
    %297 = vmatprep.subr.mxu0 0.0
    %298 = vmatpush1.msra.mxu0 0.0
    %299 = vmatprep.subr.mxu0 0.0
    %300 = vmatpush1.msra.mxu0 0.0
    %301 = vmatprep.subr.mxu0 0.0
    %302 = vmatpush1.msra.mxu0 0.0
    %303 = vmatprep.subr.mxu0 0.0
    %304 = vmatpush1.msra.mxu0 0.0
    %305 = vmatprep.subr.mxu0 0.0
    %306 = vmatpush1.msra.mxu0 0.0
    %307 = vmatprep.subr.mxu0 0.0
    %308 = vmatpush1.msra.mxu0 0.0
    %309 = vmatprep.subr.mxu0 0.0
    %310 = vmatpush1.msra.mxu0 0.0
    %311 = vmatprep.subr.mxu0 0.0
    %312 = vmatpush1.msra.mxu0 0.0
    %313 = vmatprep.mubr.f32.mxu0 0.0
    %314 = vmatmul.mubr.f32.gmra.mrb[0].mxu0 %v244
    %v315 = vpop.f32.mrb[0].mxu0
    %v316 = vadd.f32 0.0, %v315
    %v317 = vpop.f32.mrb[0].mxu0
    %318 = vmatprep.mubr.f32.mxu0 0.0
    %319 = vmatmul.mubr.f32.gmra.mrb[0].mxu0 %v247
    %v320 = vpop.f32.mrb[0].mxu0
    %v321 = vadd.f32 0.0, %v320
    %v322 = vpop.f32.mrb[0].mxu0
    %323 = vdwg.mxu0
    %v324 = vld [vmem:[%s3] sm:$0xff]
    %v325 = vld [vmem:[%s3 + $0x8] sm:$0xff]
    %v326 = vld [vmem:[%s3 + $0x10] sm:$0xff]
    %v327 = vld [vmem:[%s3 + $0x18] sm:$0xff]
    %v328 = vld [vmem:[%s3 + $0x20] sm:$0xff]
    %v329 = vld [vmem:[%s3 + $0x28] sm:$0xff]
    %v330 = vld [vmem:[%s3 + $0x30] sm:$0xff]
    %v331 = vld [vmem:[%s3 + $0x38] sm:$0xff]
    %v332 = vld [vmem:[%s3 + $0x40] sm:$0xff]
    %v333 = vld [vmem:[%s3 + $0x48] sm:$0xff]
    %v334 = vld [vmem:[%s3 + $0x50] sm:$0xff]
    %v335 = vld [vmem:[%s3 + $0x58] sm:$0xff]
    %v336 = vld [vmem:[%s3 + $0x60] sm:$0xff]
    %v337 = vld [vmem:[%s3 + $0x68] sm:$0xff]
    %v338 = vld [vmem:[%s3 + $0x70] sm:$0xff]
    %v339 = vld [vmem:[%s3 + $0x78] sm:$0xff]
    %340 = vmatprep.subr.mxu0 0.0
    %341 = vmatpush1.msra.mxu0 %v324
    %342 = vmatprep.subr.mxu0 0.0
    %343 = vmatpush1.msra.mxu0 %v325
    %344 = vmatprep.subr.mxu0 0.0
    %345 = vmatpush1.msra.mxu0 %v326
    %346 = vmatprep.subr.mxu0 0.0
    %347 = vmatpush1.msra.mxu0 %v327
    %348 = vmatprep.subr.mxu0 0.0
    %349 = vmatpush1.msra.mxu0 %v328
    %350 = vmatprep.subr.mxu0 0.0
    %351 = vmatpush1.msra.mxu0 %v329
    %352 = vmatprep.subr.mxu0 0.0
    %353 = vmatpush1.msra.mxu0 %v330
    %354 = vmatprep.subr.mxu0 0.0
    %355 = vmatpush1.msra.mxu0 %v331
    %356 = vmatprep.subr.mxu0 0.0
    %357 = vmatpush1.msra.mxu0 %v332
    %358 = vmatprep.subr.mxu0 0.0
    %359 = vmatpush1.msra.mxu0 %v333
    %360 = vmatprep.subr.mxu0 0.0
    %361 = vmatpush1.msra.mxu0 %v334
    %362 = vmatprep.subr.mxu0 0.0
    %363 = vmatpush1.msra.mxu0 %v335
    %364 = vmatprep.subr.mxu0 0.0
    %365 = vmatpush1.msra.mxu0 %v336
    %366 = vmatprep.subr.mxu0 0.0
    %367 = vmatpush1.msra.mxu0 %v337
    %368 = vmatprep.subr.mxu0 0.0
    %369 = vmatpush1.msra.mxu0 %v338
    %370 = vmatprep.subr.mxu0 0.0
    %371 = vmatpush1.msra.mxu0 %v339
    %372 = vmatprep.subr.mxu0 0.0
    %373 = vmatpush1.msra.mxu0 0.0
    %374 = vmatprep.subr.mxu0 0.0
    %375 = vmatpush1.msra.mxu0 0.0
    %376 = vmatprep.subr.mxu0 0.0
    %377 = vmatpush1.msra.mxu0 0.0
    %378 = vmatprep.subr.mxu0 0.0
    %379 = vmatpush1.msra.mxu0 0.0
    %380 = vmatprep.subr.mxu0 0.0
    %381 = vmatpush1.msra.mxu0 0.0
    %382 = vmatprep.subr.mxu0 0.0
    %383 = vmatpush1.msra.mxu0 0.0
    %384 = vmatprep.subr.mxu0 0.0
    %385 = vmatpush1.msra.mxu0 0.0
    %386 = vmatprep.subr.mxu0 0.0
    %387 = vmatpush1.msra.mxu0 0.0
    %388 = vmatprep.subr.mxu0 0.0
    %389 = vmatpush1.msra.mxu0 0.0
    %390 = vmatprep.subr.mxu0 0.0
    %391 = vmatpush1.msra.mxu0 0.0
    %392 = vmatprep.subr.mxu0 0.0
    %393 = vmatpush1.msra.mxu0 0.0
    %394 = vmatprep.subr.mxu0 0.0
    %395 = vmatpush1.msra.mxu0 0.0
    %396 = vmatprep.subr.mxu0 0.0
    %397 = vmatpush1.msra.mxu0 0.0
    %398 = vmatprep.subr.mxu0 0.0
    %399 = vmatpush1.msra.mxu0 0.0
    %400 = vmatprep.subr.mxu0 0.0
    %401 = vmatpush1.msra.mxu0 0.0
    %402 = vmatprep.subr.mxu0 0.0
    %403 = vmatpush1.msra.mxu0 0.0
    %404 = vmatprep.mubr.f32.mxu0 0.0
    %405 = vmatmul.mubr.f32.gmra.mrb[0].mxu0 %v316
    %v406 = vpop.f32.mrb[0].mxu0
    %v407 = vadd.f32 0.0, %v406
    %v408 = vpop.f32.mrb[0].mxu0
    %409 = vmatprep.mubr.f32.mxu0 0.0
    %410 = vmatmul.mubr.f32.gmra.mrb[0].mxu0 %v321
    %v411 = vpop.f32.mrb[0].mxu0
    %v412 = vadd.f32 0.0, %v411
    %v413 = vpop.f32.mrb[0].mxu0
    %414 = vdwg.mxu0
    %415 = vst [vmem:[#allocation2] sm:$0xff] %v407
    %416 = vst [vmem:[#allocation2 + $0x8] sm:$0xff] %v412
    %v417 = vmul.f32 %v407, %v407
    %v418 = vmul.f32 %v412, %v412
    %v419 = vadd.f32 %v417, %v418
    %420 = vadd.xlane.f32.xlu0 %v419
    %v421 = vpop.xlane.xlu0 %420
    %v422 = vrot.slane %v421, 4
    %v423 = vadd.f32 %v421, %v422
    %v424 = vrot.slane %v423, 2
    %v425 = vadd.f32 %v423, %v424
    %v426 = vrot.slane %v425, 1
    %v427 = vadd.f32 %v425, %v426
    %s428 = vtos %v427
    %v429 = vstv %s428
    %vm430 = vcmask 0
    %431 = vst.msk [vmem:[#allocation3] sm:$0x1] %vm430, %v429
    %s432 = sld [smem:[#allocation4]]
    %p433 = scmp.eq.s32.totalorder %s432, 0
    // Predicated region
    $region26: #{graph_cgls_forward.1} parent=1 // pred_check
      %p434 = pneg %p433
    $region27: #{graph_cgls_forward.1} parent=1 // pred_check_branch
      %436 = sbr.rel (%p434) target = $region29
    $region28: #{graph_cgls_forward.1} parent=1 // pred_region
      %v437 = vld [vmem:[#allocation2] sm:$0xff]
      %v438 = vld [vmem:[#allocation2 + $0x8] sm:$0xff]
      %v439 = vld [vmem:[#allocation3] sm:$0x1]
      %v440 = vld [vmem:[%s0] sm:$0xff]
      %v441 = vld [vmem:[%s0 + $0x8] sm:$0xff]
      %v443 = vsel %vm35, %v440, 0
      %v446 = vsel %vm35, %v441, 0
      %448 = vmatprep.subr.mxu0 0.0
      %449 = vmatpush1.msra.mxu0 %v437
      %450 = vmatprep.subr.mxu0 0.0
      %451 = vmatpush1.msra.mxu0 %v438
      %452 = vmatprep.subr.mxu0 0.0
      %453 = vmatpush1.msra.mxu0 0.0
      %454 = vmatprep.subr.mxu0 0.0
      %455 = vmatpush1.msra.mxu0 0.0
      %456 = vmatprep.subr.mxu0 0.0
      %457 = vmatpush1.msra.mxu0 0.0
      %458 = vmatprep.subr.mxu0 0.0
      %459 = vmatpush1.msra.mxu0 0.0
      %460 = vmatprep.subr.mxu0 0.0
      %461 = vmatpush1.msra.mxu0 0.0
      %462 = vmatprep.subr.mxu0 0.0
      %463 = vmatpush1.msra.mxu0 0.0
      %464 = vmatprep.subr.mxu0 0.0
      %465 = vmatpush1.msra.mxu0 0.0
      %466 = vmatprep.subr.mxu0 0.0
      %467 = vmatpush1.msra.mxu0 0.0
      %468 = vmatprep.subr.mxu0 0.0
      %469 = vmatpush1.msra.mxu0 0.0
      %470 = vmatprep.subr.mxu0 0.0
      %471 = vmatpush1.msra.mxu0 0.0
      %472 = vmatprep.subr.mxu0 0.0
      %473 = vmatpush1.msra.mxu0 0.0
      %474 = vmatprep.subr.mxu0 0.0
      %475 = vmatpush1.msra.mxu0 0.0
      %476 = vmatprep.subr.mxu0 0.0
      %477 = vmatpush1.msra.mxu0 0.0
      %478 = vmatprep.subr.mxu0 0.0
      %479 = vmatpush1.msra.mxu0 0.0
      %480 = vmatprep.subr.mxu0 0.0
      %481 = vmatpush1.msra.mxu0 0.0
      %482 = vmatprep.subr.mxu0 0.0
      %483 = vmatpush1.msra.mxu0 0.0
      %484 = vmatprep.subr.mxu0 0.0
      %485 = vmatpush1.msra.mxu0 0.0
      %486 = vmatprep.subr.mxu0 0.0
      %487 = vmatpush1.msra.mxu0 0.0
      %488 = vmatprep.subr.mxu0 0.0
      %489 = vmatpush1.msra.mxu0 0.0
      %490 = vmatprep.subr.mxu0 0.0
      %491 = vmatpush1.msra.mxu0 0.0
      %492 = vmatprep.subr.mxu0 0.0
      %493 = vmatpush1.msra.mxu0 0.0
      %494 = vmatprep.subr.mxu0 0.0
      %495 = vmatpush1.msra.mxu0 0.0
      %496 = vmatprep.subr.mxu0 0.0
      %497 = vmatpush1.msra.mxu0 0.0
      %498 = vmatprep.subr.mxu0 0.0
      %499 = vmatpush1.msra.mxu0 0.0
      %500 = vmatprep.subr.mxu0 0.0
      %501 = vmatpush1.msra.mxu0 0.0
      %502 = vmatprep.subr.mxu0 0.0
      %503 = vmatpush1.msra.mxu0 0.0
      %504 = vmatprep.subr.mxu0 0.0
      %505 = vmatpush1.msra.mxu0 0.0
      %506 = vmatprep.subr.mxu0 0.0
      %507 = vmatpush1.msra.mxu0 0.0
      %508 = vmatprep.subr.mxu0 0.0
      %509 = vmatpush1.msra.mxu0 0.0
      %510 = vmatprep.subr.mxu0 0.0
      %511 = vmatpush1.msra.mxu0 0.0
      %512 = vmatprep.mubr.f32.mxu0 0.0
      %513 = vmatmul.mubr.f32.gmra.mrb[0].mxu0 %v443
      %v514 = vpop.f32.mrb[0].mxu0
      %v515 = vadd.f32 0.0, %v514
      %v516 = vpop.f32.mrb[0].mxu0
      %517 = vmatprep.mubr.f32.mxu0 0.0
      %518 = vmatmul.mubr.f32.gmra.mrb[0].mxu0 %v446
      %v519 = vpop.f32.mrb[0].mxu0
      %v520 = vadd.f32 0.0, %v519
      %v521 = vpop.f32.mrb[0].mxu0
      %522 = vdwg.mxu0
      %v523 = vld [vmem:[%s2] sm:$0xff]
      %v524 = vld [vmem:[%s2 + $0x8] sm:$0xff]
      %v525 = vld [vmem:[%s2 + $0x10] sm:$0xff]
      %v526 = vld [vmem:[%s2 + $0x18] sm:$0xff]
      %v527 = vld [vmem:[%s2 + $0x20] sm:$0xff]
      %v528 = vld [vmem:[%s2 + $0x28] sm:$0xff]
      %v529 = vld [vmem:[%s2 + $0x30] sm:$0xff]
      %v530 = vld [vmem:[%s2 + $0x38] sm:$0xff]
      %v531 = vld [vmem:[%s2 + $0x40] sm:$0xff]
      %v532 = vld [vmem:[%s2 + $0x48] sm:$0xff]
      %v533 = vld [vmem:[%s2 + $0x50] sm:$0xff]
      %v534 = vld [vmem:[%s2 + $0x58] sm:$0xff]
      %v535 = vld [vmem:[%s2 + $0x60] sm:$0xff]
      %v536 = vld [vmem:[%s2 + $0x68] sm:$0xff]
      %v537 = vld [vmem:[%s2 + $0x70] sm:$0xff]
      %v538 = vld [vmem:[%s2 + $0x78] sm:$0xff]
      %539 = vmatprep.subr.mxu0 0.0
      %540 = vmatpush1.msra.mxu0 %v523
      %541 = vmatprep.subr.mxu0 0.0
      %542 = vmatpush1.msra.mxu0 %v524
      %543 = vmatprep.subr.mxu0 0.0
      %544 = vmatpush1.msra.mxu0 %v525
      %545 = vmatprep.subr.mxu0 0.0
      %546 = vmatpush1.msra.mxu0 %v526
      %547 = vmatprep.subr.mxu0 0.0
      %548 = vmatpush1.msra.mxu0 %v527
      %549 = vmatprep.subr.mxu0 0.0
      %550 = vmatpush1.msra.mxu0 %v528
      %551 = vmatprep.subr.mxu0 0.0
      %552 = vmatpush1.msra.mxu0 %v529
      %553 = vmatprep.subr.mxu0 0.0
      %554 = vmatpush1.msra.mxu0 %v530
      %555 = vmatprep.subr.mxu0 0.0
      %556 = vmatpush1.msra.mxu0 %v531
      %557 = vmatprep.subr.mxu0 0.0
      %558 = vmatpush1.msra.mxu0 %v532
      %559 = vmatprep.subr.mxu0 0.0
      %560 = vmatpush1.msra.mxu0 %v533
      %561 = vmatprep.subr.mxu0 0.0
      %562 = vmatpush1.msra.mxu0 %v534
      %563 = vmatprep.subr.mxu0 0.0
      %564 = vmatpush1.msra.mxu0 %v535
      %565 = vmatprep.subr.mxu0 0.0
      %566 = vmatpush1.msra.mxu0 %v536
      %567 = vmatprep.subr.mxu0 0.0
      %568 = vmatpush1.msra.mxu0 %v537
      %569 = vmatprep.subr.mxu0 0.0
      %570 = vmatpush1.msra.mxu0 %v538
      %571 = vmatprep.subr.mxu0 0.0
      %572 = vmatpush1.msra.mxu0 0.0
      %573 = vmatprep.subr.mxu0 0.0
      %574 = vmatpush1.msra.mxu0 0.0
      %575 = vmatprep.subr.mxu0 0.0
      %576 = vmatpush1.msra.mxu0 0.0
      %577 = vmatprep.subr.mxu0 0.0
      %578 = vmatpush1.msra.mxu0 0.0
      %579 = vmatprep.subr.mxu0 0.0
      %580 = vmatpush1.msra.mxu0 0.0
      %581 = vmatprep.subr.mxu0 0.0
      %582 = vmatpush1.msra.mxu0 0.0
      %583 = vmatprep.subr.mxu0 0.0
      %584 = vmatpush1.msra.mxu0 0.0
      %585 = vmatprep.subr.mxu0 0.0
      %586 = vmatpush1.msra.mxu0 0.0
      %587 = vmatprep.subr.mxu0 0.0
      %588 = vmatpush1.msra.mxu0 0.0
      %589 = vmatprep.subr.mxu0 0.0
      %590 = vmatpush1.msra.mxu0 0.0
      %591 = vmatprep.subr.mxu0 0.0
      %592 = vmatpush1.msra.mxu0 0.0
      %593 = vmatprep.subr.mxu0 0.0
      %594 = vmatpush1.msra.mxu0 0.0
      %595 = vmatprep.subr.mxu0 0.0
      %596 = vmatpush1.msra.mxu0 0.0
      %597 = vmatprep.subr.mxu0 0.0
      %598 = vmatpush1.msra.mxu0 0.0
      %599 = vmatprep.subr.mxu0 0.0
      %600 = vmatpush1.msra.mxu0 0.0
      %601 = vmatprep.subr.mxu0 0.0
      %602 = vmatpush1.msra.mxu0 0.0
      %603 = vmatprep.mubr.f32.mxu0 0.0
      %604 = vmatmul.mubr.f32.gmra.mrb[0].mxu0 %v515
      %v605 = vpop.f32.mrb[0].mxu0
      %v606 = vadd.f32 0.0, %v605
      %v607 = vpop.f32.mrb[0].mxu0
      %608 = vmatprep.mubr.f32.mxu0 0.0
      %609 = vmatmul.mubr.f32.gmra.mrb[0].mxu0 %v520
      %v610 = vpop.f32.mrb[0].mxu0
      %v611 = vadd.f32 0.0, %v610
      %v612 = vpop.f32.mrb[0].mxu0
      %613 = vdwg.mxu0
      %v614 = vmul.f32 %v606, %v606
      %v615 = vmul.f32 %v611, %v611
      %v616 = vadd.f32 %v614, %v615
      %617 = vadd.xlane.f32.xlu0 %v616
      %v618 = vpop.xlane.xlu0 %617
      %v619 = vrot.slane %v618, 4
      %v620 = vadd.f32 %v618, %v619
      %v621 = vrot.slane %v620, 2
      %v622 = vadd.f32 %v620, %v621
      %v623 = vrot.slane %v622, 1
      %v624 = vadd.f32 %v622, %v623
      %s625 = vtos %v624
      %v626 = vstv %s625
      %v627 = vrcp.pop %v626
      %v628 = vmul.f32 %v439, %v627
      %v629 = vld [vmem:[#allocation5] sm:$0xff]
      %v630 = vld [vmem:[#allocation5 + $0x8] sm:$0xff]
      %v632 = vlaneseq
      %v633 = vshrl.u32 %v632, 7
      %v634 = vsub.s32 0, %v633
      %v635 = vrot.slane %v628, %v634
      %636 = vset.pattern.permute.xlu0 0
      %637 = vperm.xlu0 %636, %v635
      %v638 = vpop.permute.xlu0 %637
      %v640 = vmul.f32 %v638, %v437
      %v641 = vmul.f32 %v638, %v438
      %v642 = vadd.f32 %v629, %v640
      %v643 = vadd.f32 %v630, %v641
      %644 = vst [vmem:[#allocation5] sm:$0xff] %v642
      %645 = vst [vmem:[#allocation5 + $0x8] sm:$0xff] %v643
      %v646 = vld [vmem:[#allocation7] sm:$0xff]
      %v647 = vld [vmem:[#allocation7 + $0x8] sm:$0xff]
      %v648 = vmul.f32 %v638, %v606
      %v649 = vmul.f32 %v638, %v611
      %v650 = vsub.f32 %v646, %v648
      %v651 = vsub.f32 %v647, %v649
      %652 = vst [vmem:[#allocation7] sm:$0xff] %v650
      %653 = vst [vmem:[#allocation7 + $0x8] sm:$0xff] %v651
      %v654 = vld [vmem:[%s1] sm:$0xff]
      %v655 = vld [vmem:[%s1 + $0x8] sm:$0xff]
      %v657 = vsel %vm35, %v654, 0
      %v660 = vsel %vm35, %v655, 0
      %662 = vmatprep.subr.mxu0 0.0
      %663 = vmatpush1.msra.mxu0 %v650
      %664 = vmatprep.subr.mxu0 0.0
      %665 = vmatpush1.msra.mxu0 %v651
      %666 = vmatprep.subr.mxu0 0.0
      %667 = vmatpush1.msra.mxu0 0.0
      %668 = vmatprep.subr.mxu0 0.0
      %669 = vmatpush1.msra.mxu0 0.0
      %670 = vmatprep.subr.mxu0 0.0
      %671 = vmatpush1.msra.mxu0 0.0
      %672 = vmatprep.subr.mxu0 0.0
      %673 = vmatpush1.msra.mxu0 0.0
      %674 = vmatprep.subr.mxu0 0.0
      %675 = vmatpush1.msra.mxu0 0.0
      %676 = vmatprep.subr.mxu0 0.0
      %677 = vmatpush1.msra.mxu0 0.0
      %678 = vmatprep.subr.mxu0 0.0
      %679 = vmatpush1.msra.mxu0 0.0
      %680 = vmatprep.subr.mxu0 0.0
      %681 = vmatpush1.msra.mxu0 0.0
      %682 = vmatprep.subr.mxu0 0.0
      %683 = vmatpush1.msra.mxu0 0.0
      %684 = vmatprep.subr.mxu0 0.0
      %685 = vmatpush1.msra.mxu0 0.0
      %686 = vmatprep.subr.mxu0 0.0
      %687 = vmatpush1.msra.mxu0 0.0
      %688 = vmatprep.subr.mxu0 0.0
      %689 = vmatpush1.msra.mxu0 0.0
      %690 = vmatprep.subr.mxu0 0.0
      %691 = vmatpush1.msra.mxu0 0.0
      %692 = vmatprep.subr.mxu0 0.0
      %693 = vmatpush1.msra.mxu0 0.0
      %694 = vmatprep.subr.mxu0 0.0
      %695 = vmatpush1.msra.mxu0 0.0
      %696 = vmatprep.subr.mxu0 0.0
      %697 = vmatpush1.msra.mxu0 0.0
      %698 = vmatprep.subr.mxu0 0.0
      %699 = vmatpush1.msra.mxu0 0.0
      %700 = vmatprep.subr.mxu0 0.0
      %701 = vmatpush1.msra.mxu0 0.0
      %702 = vmatprep.subr.mxu0 0.0
      %703 = vmatpush1.msra.mxu0 0.0
      %704 = vmatprep.subr.mxu0 0.0
      %705 = vmatpush1.msra.mxu0 0.0
      %706 = vmatprep.subr.mxu0 0.0
      %707 = vmatpush1.msra.mxu0 0.0
      %708 = vmatprep.subr.mxu0 0.0
      %709 = vmatpush1.msra.mxu0 0.0
      %710 = vmatprep.subr.mxu0 0.0
      %711 = vmatpush1.msra.mxu0 0.0
      %712 = vmatprep.subr.mxu0 0.0
      %713 = vmatpush1.msra.mxu0 0.0
      %714 = vmatprep.subr.mxu0 0.0
      %715 = vmatpush1.msra.mxu0 0.0
      %716 = vmatprep.subr.mxu0 0.0
      %717 = vmatpush1.msra.mxu0 0.0
      %718 = vmatprep.subr.mxu0 0.0
      %719 = vmatpush1.msra.mxu0 0.0
      %720 = vmatprep.subr.mxu0 0.0
      %721 = vmatpush1.msra.mxu0 0.0
      %722 = vmatprep.subr.mxu0 0.0
      %723 = vmatpush1.msra.mxu0 0.0
      %724 = vmatprep.subr.mxu0 0.0
      %725 = vmatpush1.msra.mxu0 0.0
      %726 = vmatprep.mubr.f32.mxu0 0.0
      %727 = vmatmul.mubr.f32.gmra.mrb[0].mxu0 %v657
      %v728 = vpop.f32.mrb[0].mxu0
      %v729 = vadd.f32 0.0, %v728
      %v730 = vpop.f32.mrb[0].mxu0
      %731 = vmatprep.mubr.f32.mxu0 0.0
      %732 = vmatmul.mubr.f32.gmra.mrb[0].mxu0 %v660
      %v733 = vpop.f32.mrb[0].mxu0
      %v734 = vadd.f32 0.0, %v733
      %v735 = vpop.f32.mrb[0].mxu0
      %736 = vdwg.mxu0
      %v737 = vld [vmem:[%s3] sm:$0xff]
      %v738 = vld [vmem:[%s3 + $0x8] sm:$0xff]
      %v739 = vld [vmem:[%s3 + $0x10] sm:$0xff]
      %v740 = vld [vmem:[%s3 + $0x18] sm:$0xff]
      %v741 = vld [vmem:[%s3 + $0x20] sm:$0xff]
      %v742 = vld [vmem:[%s3 + $0x28] sm:$0xff]
      %v743 = vld [vmem:[%s3 + $0x30] sm:$0xff]
      %v744 = vld [vmem:[%s3 + $0x38] sm:$0xff]
      %v745 = vld [vmem:[%s3 + $0x40] sm:$0xff]
      %v746 = vld [vmem:[%s3 + $0x48] sm:$0xff]
      %v747 = vld [vmem:[%s3 + $0x50] sm:$0xff]
      %v748 = vld [vmem:[%s3 + $0x58] sm:$0xff]
      %v749 = vld [vmem:[%s3 + $0x60] sm:$0xff]
      %v750 = vld [vmem:[%s3 + $0x68] sm:$0xff]
      %v751 = vld [vmem:[%s3 + $0x70] sm:$0xff]
      %v752 = vld [vmem:[%s3 + $0x78] sm:$0xff]
      %753 = vmatprep.subr.mxu0 0.0
      %754 = vmatpush1.msra.mxu0 %v737
      %755 = vmatprep.subr.mxu0 0.0
      %756 = vmatpush1.msra.mxu0 %v738
      %757 = vmatprep.subr.mxu0 0.0
      %758 = vmatpush1.msra.mxu0 %v739
      %759 = vmatprep.subr.mxu0 0.0
      %760 = vmatpush1.msra.mxu0 %v740
      %761 = vmatprep.subr.mxu0 0.0
      %762 = vmatpush1.msra.mxu0 %v741
      %763 = vmatprep.subr.mxu0 0.0
      %764 = vmatpush1.msra.mxu0 %v742
      %765 = vmatprep.subr.mxu0 0.0
      %766 = vmatpush1.msra.mxu0 %v743
      %767 = vmatprep.subr.mxu0 0.0
      %768 = vmatpush1.msra.mxu0 %v744
      %769 = vmatprep.subr.mxu0 0.0
      %770 = vmatpush1.msra.mxu0 %v745
      %771 = vmatprep.subr.mxu0 0.0
      %772 = vmatpush1.msra.mxu0 %v746
      %773 = vmatprep.subr.mxu0 0.0
      %774 = vmatpush1.msra.mxu0 %v747
      %775 = vmatprep.subr.mxu0 0.0
      %776 = vmatpush1.msra.mxu0 %v748
      %777 = vmatprep.subr.mxu0 0.0
      %778 = vmatpush1.msra.mxu0 %v749
      %779 = vmatprep.subr.mxu0 0.0
      %780 = vmatpush1.msra.mxu0 %v750
      %781 = vmatprep.subr.mxu0 0.0
      %782 = vmatpush1.msra.mxu0 %v751
      %783 = vmatprep.subr.mxu0 0.0
      %784 = vmatpush1.msra.mxu0 %v752
      %785 = vmatprep.subr.mxu0 0.0
      %786 = vmatpush1.msra.mxu0 0.0
      %787 = vmatprep.subr.mxu0 0.0
      %788 = vmatpush1.msra.mxu0 0.0
      %789 = vmatprep.subr.mxu0 0.0
      %790 = vmatpush1.msra.mxu0 0.0
      %791 = vmatprep.subr.mxu0 0.0
      %792 = vmatpush1.msra.mxu0 0.0
      %793 = vmatprep.subr.mxu0 0.0
      %794 = vmatpush1.msra.mxu0 0.0
      %795 = vmatprep.subr.mxu0 0.0
      %796 = vmatpush1.msra.mxu0 0.0
      %797 = vmatprep.subr.mxu0 0.0
      %798 = vmatpush1.msra.mxu0 0.0
      %799 = vmatprep.subr.mxu0 0.0
      %800 = vmatpush1.msra.mxu0 0.0
      %801 = vmatprep.subr.mxu0 0.0
      %802 = vmatpush1.msra.mxu0 0.0
      %803 = vmatprep.subr.mxu0 0.0
      %804 = vmatpush1.msra.mxu0 0.0
      %805 = vmatprep.subr.mxu0 0.0
      %806 = vmatpush1.msra.mxu0 0.0
      %807 = vmatprep.subr.mxu0 0.0
      %808 = vmatpush1.msra.mxu0 0.0
      %809 = vmatprep.subr.mxu0 0.0
      %810 = vmatpush1.msra.mxu0 0.0
      %811 = vmatprep.subr.mxu0 0.0
      %812 = vmatpush1.msra.mxu0 0.0
      %813 = vmatprep.subr.mxu0 0.0
      %814 = vmatpush1.msra.mxu0 0.0
      %815 = vmatprep.subr.mxu0 0.0
      %816 = vmatpush1.msra.mxu0 0.0
      %817 = vmatprep.mubr.f32.mxu0 0.0
      %818 = vmatmul.mubr.f32.gmra.mrb[0].mxu0 %v729
      %v819 = vpop.f32.mrb[0].mxu0
      %v820 = vadd.f32 0.0, %v819
      %v821 = vpop.f32.mrb[0].mxu0
      %822 = vmatprep.mubr.f32.mxu0 0.0
      %823 = vmatmul.mubr.f32.gmra.mrb[0].mxu0 %v734
      %v824 = vpop.f32.mrb[0].mxu0
      %v825 = vadd.f32 0.0, %v824
      %v826 = vpop.f32.mrb[0].mxu0
      %827 = vdwg.mxu0
      %v828 = vmul.f32 %v820, %v820
      %v829 = vmul.f32 %v825, %v825
      %v830 = vadd.f32 %v828, %v829
      %831 = vadd.xlane.f32.xlu0 %v830
      %v832 = vpop.xlane.xlu0 %831
      %v833 = vrot.slane %v832, 4
      %v834 = vadd.f32 %v832, %v833
      %v835 = vrot.slane %v834, 2
      %v836 = vadd.f32 %v834, %v835
      %v837 = vrot.slane %v836, 1
      %v838 = vadd.f32 %v836, %v837
      %s839 = vtos %v838
      %v840 = vstv %s839
      %v841 = vrcp.pop %v439
      %v842 = vmul.f32 %v840, %v841
      %v844 = vlaneseq
      %v845 = vshrl.u32 %v844, 7
      %v846 = vsub.s32 0, %v845
      %v847 = vrot.slane %v842, %v846
      %848 = vset.pattern.permute.xlu0 0
      %849 = vperm.xlu0 %848, %v847
      %v850 = vpop.permute.xlu0 %849
      %v852 = vmul.f32 %v850, %v437
      %v853 = vmul.f32 %v850, %v438
      %v854 = vadd.f32 %v820, %v852
      %v855 = vadd.f32 %v825, %v853
      %856 = vst [vmem:[#allocation2] sm:$0xff] %v854
      %857 = vst [vmem:[#allocation2 + $0x8] sm:$0xff] %v855
      %858 = vst.msk [vmem:[#allocation3] sm:$0x1] %vm430, %v840
      %v859 = vmul.f32 %v650, %v650
      %v860 = vmul.f32 %v651, %v651
      %v861 = vadd.f32 %v859, %v860
      %862 = vadd.xlane.f32.xlu0 %v861
      %v863 = vpop.xlane.xlu0 %862
      %v864 = vrot.slane %v863, 4
      %v865 = vadd.f32 %v863, %v864
      %v866 = vrot.slane %v865, 2
      %v867 = vadd.f32 %v865, %v866
      %v868 = vrot.slane %v867, 1
      %v869 = vadd.f32 %v867, %v868
      %s870 = vtos %v869
      %p871 = scmp.lt.f32.partialorder %s870, %s224
      %s872 = scalar_select %p871, 1, 0
      %873 = sst [smem:[%s239]] %s872
    $region29: #{graph_cgls_forward.1} parent=1 // pred_fallthru
      _
    %s874 = sld [smem:[#allocation4]]
    %p875 = scmp.eq.s32.totalorder %s874, 0
    // Predicated region
    $region30: #{graph_cgls_forward.1} parent=1 // pred_check
      %p876 = pneg %p875
    $region31: #{graph_cgls_forward.1} parent=1 // pred_check_branch
      %878 = sbr.rel (%p876) target = $region33
    $region32: #{graph_cgls_forward.1} parent=1 // pred_region
      %v879 = vld [vmem:[#allocation2] sm:$0xff]
      %v880 = vld [vmem:[#allocation2 + $0x8] sm:$0xff]
      %v881 = vld [vmem:[#allocation3] sm:$0x1]
      %v882 = vld [vmem:[%s0] sm:$0xff]
      %v883 = vld [vmem:[%s0 + $0x8] sm:$0xff]
      %v885 = vsel %vm35, %v882, 0
      %v888 = vsel %vm35, %v883, 0
      %890 = vmatprep.subr.mxu0 0.0
      %891 = vmatpush1.msra.mxu0 %v879
      %892 = vmatprep.subr.mxu0 0.0
      %893 = vmatpush1.msra.mxu0 %v880
      %894 = vmatprep.subr.mxu0 0.0
      %895 = vmatpush1.msra.mxu0 0.0
      %896 = vmatprep.subr.mxu0 0.0
      %897 = vmatpush1.msra.mxu0 0.0
      %898 = vmatprep.subr.mxu0 0.0
      %899 = vmatpush1.msra.mxu0 0.0
      %900 = vmatprep.subr.mxu0 0.0
      %901 = vmatpush1.msra.mxu0 0.0
      %902 = vmatprep.subr.mxu0 0.0
      %903 = vmatpush1.msra.mxu0 0.0
      %904 = vmatprep.subr.mxu0 0.0
      %905 = vmatpush1.msra.mxu0 0.0
      %906 = vmatprep.subr.mxu0 0.0
      %907 = vmatpush1.msra.mxu0 0.0
      %908 = vmatprep.subr.mxu0 0.0
      %909 = vmatpush1.msra.mxu0 0.0
      %910 = vmatprep.subr.mxu0 0.0
      %911 = vmatpush1.msra.mxu0 0.0
      %912 = vmatprep.subr.mxu0 0.0
      %913 = vmatpush1.msra.mxu0 0.0
      %914 = vmatprep.subr.mxu0 0.0
      %915 = vmatpush1.msra.mxu0 0.0
      %916 = vmatprep.subr.mxu0 0.0
      %917 = vmatpush1.msra.mxu0 0.0
      %918 = vmatprep.subr.mxu0 0.0
      %919 = vmatpush1.msra.mxu0 0.0
      %920 = vmatprep.subr.mxu0 0.0
      %921 = vmatpush1.msra.mxu0 0.0
      %922 = vmatprep.subr.mxu0 0.0
      %923 = vmatpush1.msra.mxu0 0.0
      %924 = vmatprep.subr.mxu0 0.0
      %925 = vmatpush1.msra.mxu0 0.0
      %926 = vmatprep.subr.mxu0 0.0
      %927 = vmatpush1.msra.mxu0 0.0
      %928 = vmatprep.subr.mxu0 0.0
      %929 = vmatpush1.msra.mxu0 0.0
      %930 = vmatprep.subr.mxu0 0.0
      %931 = vmatpush1.msra.mxu0 0.0
      %932 = vmatprep.subr.mxu0 0.0
      %933 = vmatpush1.msra.mxu0 0.0
      %934 = vmatprep.subr.mxu0 0.0
      %935 = vmatpush1.msra.mxu0 0.0
      %936 = vmatprep.subr.mxu0 0.0
      %937 = vmatpush1.msra.mxu0 0.0
      %938 = vmatprep.subr.mxu0 0.0
      %939 = vmatpush1.msra.mxu0 0.0
      %940 = vmatprep.subr.mxu0 0.0
      %941 = vmatpush1.msra.mxu0 0.0
      %942 = vmatprep.subr.mxu0 0.0
      %943 = vmatpush1.msra.mxu0 0.0
      %944 = vmatprep.subr.mxu0 0.0
      %945 = vmatpush1.msra.mxu0 0.0
      %946 = vmatprep.subr.mxu0 0.0
      %947 = vmatpush1.msra.mxu0 0.0
      %948 = vmatprep.subr.mxu0 0.0
      %949 = vmatpush1.msra.mxu0 0.0
      %950 = vmatprep.subr.mxu0 0.0
      %951 = vmatpush1.msra.mxu0 0.0
      %952 = vmatprep.subr.mxu0 0.0
      %953 = vmatpush1.msra.mxu0 0.0
      %954 = vmatprep.mubr.f32.mxu0 0.0
      %955 = vmatmul.mubr.f32.gmra.mrb[0].mxu0 %v885
      %v956 = vpop.f32.mrb[0].mxu0
      %v957 = vadd.f32 0.0, %v956
      %v958 = vpop.f32.mrb[0].mxu0
      %959 = vmatprep.mubr.f32.mxu0 0.0
      %960 = vmatmul.mubr.f32.gmra.mrb[0].mxu0 %v888
      %v961 = vpop.f32.mrb[0].mxu0
      %v962 = vadd.f32 0.0, %v961
      %v963 = vpop.f32.mrb[0].mxu0
      %964 = vdwg.mxu0
      %v965 = vld [vmem:[%s2] sm:$0xff]
      %v966 = vld [vmem:[%s2 + $0x8] sm:$0xff]
      %v967 = vld [vmem:[%s2 + $0x10] sm:$0xff]
      %v968 = vld [vmem:[%s2 + $0x18] sm:$0xff]
      %v969 = vld [vmem:[%s2 + $0x20] sm:$0xff]
      %v970 = vld [vmem:[%s2 + $0x28] sm:$0xff]
      %v971 = vld [vmem:[%s2 + $0x30] sm:$0xff]
      %v972 = vld [vmem:[%s2 + $0x38] sm:$0xff]
      %v973 = vld [vmem:[%s2 + $0x40] sm:$0xff]
      %v974 = vld [vmem:[%s2 + $0x48] sm:$0xff]
      %v975 = vld [vmem:[%s2 + $0x50] sm:$0xff]
      %v976 = vld [vmem:[%s2 + $0x58] sm:$0xff]
      %v977 = vld [vmem:[%s2 + $0x60] sm:$0xff]
      %v978 = vld [vmem:[%s2 + $0x68] sm:$0xff]
      %v979 = vld [vmem:[%s2 + $0x70] sm:$0xff]
      %v980 = vld [vmem:[%s2 + $0x78] sm:$0xff]
      %981 = vmatprep.subr.mxu0 0.0
      %982 = vmatpush1.msra.mxu0 %v965
      %983 = vmatprep.subr.mxu0 0.0
      %984 = vmatpush1.msra.mxu0 %v966
      %985 = vmatprep.subr.mxu0 0.0
      %986 = vmatpush1.msra.mxu0 %v967
      %987 = vmatprep.subr.mxu0 0.0
      %988 = vmatpush1.msra.mxu0 %v968
      %989 = vmatprep.subr.mxu0 0.0
      %990 = vmatpush1.msra.mxu0 %v969
      %991 = vmatprep.subr.mxu0 0.0
      %992 = vmatpush1.msra.mxu0 %v970
      %993 = vmatprep.subr.mxu0 0.0
      %994 = vmatpush1.msra.mxu0 %v971
      %995 = vmatprep.subr.mxu0 0.0
      %996 = vmatpush1.msra.mxu0 %v972
      %997 = vmatprep.subr.mxu0 0.0
      %998 = vmatpush1.msra.mxu0 %v973
      %999 = vmatprep.subr.mxu0 0.0
      %1000 = vmatpush1.msra.mxu0 %v974
      %1001 = vmatprep.subr.mxu0 0.0
      %1002 = vmatpush1.msra.mxu0 %v975
      %1003 = vmatprep.subr.mxu0 0.0
      %1004 = vmatpush1.msra.mxu0 %v976
      %1005 = vmatprep.subr.mxu0 0.0
      %1006 = vmatpush1.msra.mxu0 %v977
      %1007 = vmatprep.subr.mxu0 0.0
      %1008 = vmatpush1.msra.mxu0 %v978
      %1009 = vmatprep.subr.mxu0 0.0
      %1010 = vmatpush1.msra.mxu0 %v979
      %1011 = vmatprep.subr.mxu0 0.0
      %1012 = vmatpush1.msra.mxu0 %v980
      %1013 = vmatprep.subr.mxu0 0.0
      %1014 = vmatpush1.msra.mxu0 0.0
      %1015 = vmatprep.subr.mxu0 0.0
      %1016 = vmatpush1.msra.mxu0 0.0
      %1017 = vmatprep.subr.mxu0 0.0
      %1018 = vmatpush1.msra.mxu0 0.0
      %1019 = vmatprep.subr.mxu0 0.0
      %1020 = vmatpush1.msra.mxu0 0.0
      %1021 = vmatprep.subr.mxu0 0.0
      %1022 = vmatpush1.msra.mxu0 0.0
      %1023 = vmatprep.subr.mxu0 0.0
      %1024 = vmatpush1.msra.mxu0 0.0
      %1025 = vmatprep.subr.mxu0 0.0
      %1026 = vmatpush1.msra.mxu0 0.0
      %1027 = vmatprep.subr.mxu0 0.0
      %1028 = vmatpush1.msra.mxu0 0.0
      %1029 = vmatprep.subr.mxu0 0.0
      %1030 = vmatpush1.msra.mxu0 0.0
      %1031 = vmatprep.subr.mxu0 0.0
      %1032 = vmatpush1.msra.mxu0 0.0
      %1033 = vmatprep.subr.mxu0 0.0
      %1034 = vmatpush1.msra.mxu0 0.0
      %1035 = vmatprep.subr.mxu0 0.0
      %1036 = vmatpush1.msra.mxu0 0.0
      %1037 = vmatprep.subr.mxu0 0.0
      %1038 = vmatpush1.msra.mxu0 0.0
      %1039 = vmatprep.subr.mxu0 0.0
      %1040 = vmatpush1.msra.mxu0 0.0
      %1041 = vmatprep.subr.mxu0 0.0
      %1042 = vmatpush1.msra.mxu0 0.0
      %1043 = vmatprep.subr.mxu0 0.0
      %1044 = vmatpush1.msra.mxu0 0.0
      %1045 = vmatprep.mubr.f32.mxu0 0.0
      %1046 = vmatmul.mubr.f32.gmra.mrb[0].mxu0 %v957
      %v1047 = vpop.f32.mrb[0].mxu0
      %v1048 = vadd.f32 0.0, %v1047
      %v1049 = vpop.f32.mrb[0].mxu0
      %1050 = vmatprep.mubr.f32.mxu0 0.0
      %1051 = vmatmul.mubr.f32.gmra.mrb[0].mxu0 %v962
      %v1052 = vpop.f32.mrb[0].mxu0
      %v1053 = vadd.f32 0.0, %v1052
      %v1054 = vpop.f32.mrb[0].mxu0
      %1055 = vdwg.mxu0
      %v1056 = vmul.f32 %v1048, %v1048
      %v1057 = vmul.f32 %v1053, %v1053
      %v1058 = vadd.f32 %v1056, %v1057
      %1059 = vadd.xlane.f32.xlu0 %v1058
      %v1060 = vpop.xlane.xlu0 %1059
      %v1061 = vrot.slane %v1060, 4
      %v1062 = vadd.f32 %v1060, %v1061
      %v1063 = vrot.slane %v1062, 2
      %v1064 = vadd.f32 %v1062, %v1063
      %v1065 = vrot.slane %v1064, 1
      %v1066 = vadd.f32 %v1064, %v1065
      %s1067 = vtos %v1066
      %v1068 = vstv %s1067
      %v1069 = vrcp.pop %v1068
      %v1070 = vmul.f32 %v881, %v1069
      %v1071 = vld [vmem:[#allocation5] sm:$0xff]
      %v1072 = vld [vmem:[#allocation5 + $0x8] sm:$0xff]
      %v1074 = vlaneseq
      %v1075 = vshrl.u32 %v1074, 7
      %v1076 = vsub.s32 0, %v1075
      %v1077 = vrot.slane %v1070, %v1076
      %1078 = vset.pattern.permute.xlu0 0
      %1079 = vperm.xlu0 %1078, %v1077
      %v1080 = vpop.permute.xlu0 %1079
      %v1082 = vmul.f32 %v1080, %v879
      %v1083 = vmul.f32 %v1080, %v880
      %v1084 = vadd.f32 %v1071, %v1082
      %v1085 = vadd.f32 %v1072, %v1083
      %1086 = vst [vmem:[#allocation5] sm:$0xff] %v1084
      %1087 = vst [vmem:[#allocation5 + $0x8] sm:$0xff] %v1085
      %v1088 = vld [vmem:[#allocation7] sm:$0xff]
      %v1089 = vld [vmem:[#allocation7 + $0x8] sm:$0xff]
      %v1090 = vmul.f32 %v1080, %v1048
      %v1091 = vmul.f32 %v1080, %v1053
      %v1092 = vsub.f32 %v1088, %v1090
      %v1093 = vsub.f32 %v1089, %v1091
      %1094 = vst [vmem:[#allocation7] sm:$0xff] %v1092
      %1095 = vst [vmem:[#allocation7 + $0x8] sm:$0xff] %v1093
      %v1096 = vld [vmem:[%s1] sm:$0xff]
      %v1097 = vld [vmem:[%s1 + $0x8] sm:$0xff]
      %v1099 = vsel %vm35, %v1096, 0
      %v1102 = vsel %vm35, %v1097, 0
      %1104 = vmatprep.subr.mxu0 0.0
      %1105 = vmatpush1.msra.mxu0 %v1092
      %1106 = vmatprep.subr.mxu0 0.0
      %1107 = vmatpush1.msra.mxu0 %v1093
      %1108 = vmatprep.subr.mxu0 0.0
      %1109 = vmatpush1.msra.mxu0 0.0
      %1110 = vmatprep.subr.mxu0 0.0
      %1111 = vmatpush1.msra.mxu0 0.0
      %1112 = vmatprep.subr.mxu0 0.0
      %1113 = vmatpush1.msra.mxu0 0.0
      %1114 = vmatprep.subr.mxu0 0.0
      %1115 = vmatpush1.msra.mxu0 0.0
      %1116 = vmatprep.subr.mxu0 0.0
      %1117 = vmatpush1.msra.mxu0 0.0
      %1118 = vmatprep.subr.mxu0 0.0
      %1119 = vmatpush1.msra.mxu0 0.0
      %1120 = vmatprep.subr.mxu0 0.0
      %1121 = vmatpush1.msra.mxu0 0.0
      %1122 = vmatprep.subr.mxu0 0.0
      %1123 = vmatpush1.msra.mxu0 0.0
      %1124 = vmatprep.subr.mxu0 0.0
      %1125 = vmatpush1.msra.mxu0 0.0
      %1126 = vmatprep.subr.mxu0 0.0
      %1127 = vmatpush1.msra.mxu0 0.0
      %1128 = vmatprep.subr.mxu0 0.0
      %1129 = vmatpush1.msra.mxu0 0.0
      %1130 = vmatprep.subr.mxu0 0.0
      %1131 = vmatpush1.msra.mxu0 0.0
      %1132 = vmatprep.subr.mxu0 0.0
      %1133 = vmatpush1.msra.mxu0 0.0
      %1134 = vmatprep.subr.mxu0 0.0
      %1135 = vmatpush1.msra.mxu0 0.0
      %1136 = vmatprep.subr.mxu0 0.0
      %1137 = vmatpush1.msra.mxu0 0.0
      %1138 = vmatprep.subr.mxu0 0.0
      %1139 = vmatpush1.msra.mxu0 0.0
      %1140 = vmatprep.subr.mxu0 0.0
      %1141 = vmatpush1.msra.mxu0 0.0
      %1142 = vmatprep.subr.mxu0 0.0
      %1143 = vmatpush1.msra.mxu0 0.0
      %1144 = vmatprep.subr.mxu0 0.0
      %1145 = vmatpush1.msra.mxu0 0.0
      %1146 = vmatprep.subr.mxu0 0.0
      %1147 = vmatpush1.msra.mxu0 0.0
      %1148 = vmatprep.subr.mxu0 0.0
      %1149 = vmatpush1.msra.mxu0 0.0
      %1150 = vmatprep.subr.mxu0 0.0
      %1151 = vmatpush1.msra.mxu0 0.0
      %1152 = vmatprep.subr.mxu0 0.0
      %1153 = vmatpush1.msra.mxu0 0.0
      %1154 = vmatprep.subr.mxu0 0.0
      %1155 = vmatpush1.msra.mxu0 0.0
      %1156 = vmatprep.subr.mxu0 0.0
      %1157 = vmatpush1.msra.mxu0 0.0
      %1158 = vmatprep.subr.mxu0 0.0
      %1159 = vmatpush1.msra.mxu0 0.0
      %1160 = vmatprep.subr.mxu0 0.0
      %1161 = vmatpush1.msra.mxu0 0.0
      %1162 = vmatprep.subr.mxu0 0.0
      %1163 = vmatpush1.msra.mxu0 0.0
      %1164 = vmatprep.subr.mxu0 0.0
      %1165 = vmatpush1.msra.mxu0 0.0
      %1166 = vmatprep.subr.mxu0 0.0
      %1167 = vmatpush1.msra.mxu0 0.0
      %1168 = vmatprep.mubr.f32.mxu0 0.0
      %1169 = vmatmul.mubr.f32.gmra.mrb[0].mxu0 %v1099
      %v1170 = vpop.f32.mrb[0].mxu0
      %v1171 = vadd.f32 0.0, %v1170
      %v1172 = vpop.f32.mrb[0].mxu0
      %1173 = vmatprep.mubr.f32.mxu0 0.0
      %1174 = vmatmul.mubr.f32.gmra.mrb[0].mxu0 %v1102
      %v1175 = vpop.f32.mrb[0].mxu0
      %v1176 = vadd.f32 0.0, %v1175
      %v1177 = vpop.f32.mrb[0].mxu0
      %1178 = vdwg.mxu0
      %v1179 = vld [vmem:[%s3] sm:$0xff]
      %v1180 = vld [vmem:[%s3 + $0x8] sm:$0xff]
      %v1181 = vld [vmem:[%s3 + $0x10] sm:$0xff]
      %v1182 = vld [vmem:[%s3 + $0x18] sm:$0xff]
      %v1183 = vld [vmem:[%s3 + $0x20] sm:$0xff]
      %v1184 = vld [vmem:[%s3 + $0x28] sm:$0xff]
      %v1185 = vld [vmem:[%s3 + $0x30] sm:$0xff]
      %v1186 = vld [vmem:[%s3 + $0x38] sm:$0xff]
      %v1187 = vld [vmem:[%s3 + $0x40] sm:$0xff]
      %v1188 = vld [vmem:[%s3 + $0x48] sm:$0xff]
      %v1189 = vld [vmem:[%s3 + $0x50] sm:$0xff]
      %v1190 = vld [vmem:[%s3 + $0x58] sm:$0xff]
      %v1191 = vld [vmem:[%s3 + $0x60] sm:$0xff]
      %v1192 = vld [vmem:[%s3 + $0x68] sm:$0xff]
      %v1193 = vld [vmem:[%s3 + $0x70] sm:$0xff]
      %v1194 = vld [vmem:[%s3 + $0x78] sm:$0xff]
      %1195 = vmatprep.subr.mxu0 0.0
      %1196 = vmatpush1.msra.mxu0 %v1179
      %1197 = vmatprep.subr.mxu0 0.0
      %1198 = vmatpush1.msra.mxu0 %v1180
      %1199 = vmatprep.subr.mxu0 0.0
      %1200 = vmatpush1.msra.mxu0 %v1181
      %1201 = vmatprep.subr.mxu0 0.0
      %1202 = vmatpush1.msra.mxu0 %v1182
      %1203 = vmatprep.subr.mxu0 0.0
      %1204 = vmatpush1.msra.mxu0 %v1183
      %1205 = vmatprep.subr.mxu0 0.0
      %1206 = vmatpush1.msra.mxu0 %v1184
      %1207 = vmatprep.subr.mxu0 0.0
      %1208 = vmatpush1.msra.mxu0 %v1185
      %1209 = vmatprep.subr.mxu0 0.0
      %1210 = vmatpush1.msra.mxu0 %v1186
      %1211 = vmatprep.subr.mxu0 0.0
      %1212 = vmatpush1.msra.mxu0 %v1187
      %1213 = vmatprep.subr.mxu0 0.0
      %1214 = vmatpush1.msra.mxu0 %v1188
      %1215 = vmatprep.subr.mxu0 0.0
      %1216 = vmatpush1.msra.mxu0 %v1189
      %1217 = vmatprep.subr.mxu0 0.0
      %1218 = vmatpush1.msra.mxu0 %v1190
      %1219 = vmatprep.subr.mxu0 0.0
      %1220 = vmatpush1.msra.mxu0 %v1191
      %1221 = vmatprep.subr.mxu0 0.0
      %1222 = vmatpush1.msra.mxu0 %v1192
      %1223 = vmatprep.subr.mxu0 0.0
      %1224 = vmatpush1.msra.mxu0 %v1193
      %1225 = vmatprep.subr.mxu0 0.0
      %1226 = vmatpush1.msra.mxu0 %v1194
      %1227 = vmatprep.subr.mxu0 0.0
      %1228 = vmatpush1.msra.mxu0 0.0
      %1229 = vmatprep.subr.mxu0 0.0
      %1230 = vmatpush1.msra.mxu0 0.0
      %1231 = vmatprep.subr.mxu0 0.0
      %1232 = vmatpush1.msra.mxu0 0.0
      %1233 = vmatprep.subr.mxu0 0.0
      %1234 = vmatpush1.msra.mxu0 0.0
      %1235 = vmatprep.subr.mxu0 0.0
      %1236 = vmatpush1.msra.mxu0 0.0
      %1237 = vmatprep.subr.mxu0 0.0
      %1238 = vmatpush1.msra.mxu0 0.0
      %1239 = vmatprep.subr.mxu0 0.0
      %1240 = vmatpush1.msra.mxu0 0.0
      %1241 = vmatprep.subr.mxu0 0.0
      %1242 = vmatpush1.msra.mxu0 0.0
      %1243 = vmatprep.subr.mxu0 0.0
      %1244 = vmatpush1.msra.mxu0 0.0
      %1245 = vmatprep.subr.mxu0 0.0
      %1246 = vmatpush1.msra.mxu0 0.0
      %1247 = vmatprep.subr.mxu0 0.0
      %1248 = vmatpush1.msra.mxu0 0.0
      %1249 = vmatprep.subr.mxu0 0.0
      %1250 = vmatpush1.msra.mxu0 0.0
      %1251 = vmatprep.subr.mxu0 0.0
      %1252 = vmatpush1.msra.mxu0 0.0
      %1253 = vmatprep.subr.mxu0 0.0
      %1254 = vmatpush1.msra.mxu0 0.0
      %1255 = vmatprep.subr.mxu0 0.0
      %1256 = vmatpush1.msra.mxu0 0.0
      %1257 = vmatprep.subr.mxu0 0.0
      %1258 = vmatpush1.msra.mxu0 0.0
      %1259 = vmatprep.mubr.f32.mxu0 0.0
      %1260 = vmatmul.mubr.f32.gmra.mrb[0].mxu0 %v1171
      %v1261 = vpop.f32.mrb[0].mxu0
      %v1262 = vadd.f32 0.0, %v1261
      %v1263 = vpop.f32.mrb[0].mxu0
      %1264 = vmatprep.mubr.f32.mxu0 0.0
      %1265 = vmatmul.mubr.f32.gmra.mrb[0].mxu0 %v1176
      %v1266 = vpop.f32.mrb[0].mxu0
      %v1267 = vadd.f32 0.0, %v1266
      %v1268 = vpop.f32.mrb[0].mxu0
      %1269 = vdwg.mxu0
      %v1270 = vmul.f32 %v1262, %v1262
      %v1271 = vmul.f32 %v1267, %v1267
      %v1272 = vadd.f32 %v1270, %v1271
      %1273 = vadd.xlane.f32.xlu0 %v1272
      %v1274 = vpop.xlane.xlu0 %1273
      %v1275 = vrot.slane %v1274, 4
      %v1276 = vadd.f32 %v1274, %v1275
      %v1277 = vrot.slane %v1276, 2
      %v1278 = vadd.f32 %v1276, %v1277
      %v1279 = vrot.slane %v1278, 1
      %v1280 = vadd.f32 %v1278, %v1279
      %s1281 = vtos %v1280
      %v1282 = vstv %s1281
      %v1283 = vrcp.pop %v881
      %v1284 = vmul.f32 %v1282, %v1283
      %v1286 = vlaneseq
      %v1287 = vshrl.u32 %v1286, 7
      %v1288 = vsub.s32 0, %v1287
      %v1289 = vrot.slane %v1284, %v1288
      %1290 = vset.pattern.permute.xlu0 0
      %1291 = vperm.xlu0 %1290, %v1289
      %v1292 = vpop.permute.xlu0 %1291
      %v1294 = vmul.f32 %v1292, %v879
      %v1295 = vmul.f32 %v1292, %v880
      %v1296 = vadd.f32 %v1262, %v1294
      %v1297 = vadd.f32 %v1267, %v1295
      %1298 = vst [vmem:[#allocation2] sm:$0xff] %v1296
      %1299 = vst [vmem:[#allocation2 + $0x8] sm:$0xff] %v1297
      %1300 = vst.msk [vmem:[#allocation3] sm:$0x1] %vm430, %v1282
      %v1301 = vmul.f32 %v1092, %v1092
      %v1302 = vmul.f32 %v1093, %v1093
      %v1303 = vadd.f32 %v1301, %v1302
      %1304 = vadd.xlane.f32.xlu0 %v1303
      %v1305 = vpop.xlane.xlu0 %1304
      %v1306 = vrot.slane %v1305, 4
      %v1307 = vadd.f32 %v1305, %v1306
      %v1308 = vrot.slane %v1307, 2
      %v1309 = vadd.f32 %v1307, %v1308
      %v1310 = vrot.slane %v1309, 1
      %v1311 = vadd.f32 %v1309, %v1310
      %s1312 = vtos %v1311
      %p1313 = scmp.lt.f32.partialorder %s1312, %s224
      %s1314 = scalar_select %p1313, 1, 0
      %1315 = sst [smem:[%s239]] %s1314
    $region33: #{graph_cgls_forward.1} parent=1 // pred_fallthru
      _
    %s1316 = sld [smem:[#allocation4]]
    %p1317 = scmp.eq.s32.totalorder %s1316, 0
    // Predicated region
    $region34: #{graph_cgls_forward.1} parent=1 // pred_check
      %p1318 = pneg %p1317
    $region35: #{graph_cgls_forward.1} parent=1 // pred_check_branch
      %1320 = sbr.rel (%p1318) target = $region37
    $region36: #{graph_cgls_forward.1} parent=1 // pred_region
      %v1321 = vld [vmem:[#allocation2] sm:$0xff]
      %v1322 = vld [vmem:[#allocation2 + $0x8] sm:$0xff]
      %v1323 = vld [vmem:[#allocation3] sm:$0x1]
      %v1324 = vld [vmem:[%s0] sm:$0xff]
      %v1325 = vld [vmem:[%s0 + $0x8] sm:$0xff]
      %v1327 = vsel %vm35, %v1324, 0
      %v1330 = vsel %vm35, %v1325, 0
      %1332 = vmatprep.subr.mxu0 0.0
      %1333 = vmatpush1.msra.mxu0 %v1321
      %1334 = vmatprep.subr.mxu0 0.0
      %1335 = vmatpush1.msra.mxu0 %v1322
      %1336 = vmatprep.subr.mxu0 0.0
      %1337 = vmatpush1.msra.mxu0 0.0
      %1338 = vmatprep.subr.mxu0 0.0
      %1339 = vmatpush1.msra.mxu0 0.0
      %1340 = vmatprep.subr.mxu0 0.0
      %1341 = vmatpush1.msra.mxu0 0.0
      %1342 = vmatprep.subr.mxu0 0.0
      %1343 = vmatpush1.msra.mxu0 0.0
      %1344 = vmatprep.subr.mxu0 0.0
      %1345 = vmatpush1.msra.mxu0 0.0
      %1346 = vmatprep.subr.mxu0 0.0
      %1347 = vmatpush1.msra.mxu0 0.0
      %1348 = vmatprep.subr.mxu0 0.0
      %1349 = vmatpush1.msra.mxu0 0.0
      %1350 = vmatprep.subr.mxu0 0.0
      %1351 = vmatpush1.msra.mxu0 0.0
      %1352 = vmatprep.subr.mxu0 0.0
      %1353 = vmatpush1.msra.mxu0 0.0
      %1354 = vmatprep.subr.mxu0 0.0
      %1355 = vmatpush1.msra.mxu0 0.0
      %1356 = vmatprep.subr.mxu0 0.0
      %1357 = vmatpush1.msra.mxu0 0.0
      %1358 = vmatprep.subr.mxu0 0.0
      %1359 = vmatpush1.msra.mxu0 0.0
      %1360 = vmatprep.subr.mxu0 0.0
      %1361 = vmatpush1.msra.mxu0 0.0
      %1362 = vmatprep.subr.mxu0 0.0
      %1363 = vmatpush1.msra.mxu0 0.0
      %1364 = vmatprep.subr.mxu0 0.0
      %1365 = vmatpush1.msra.mxu0 0.0
      %1366 = vmatprep.subr.mxu0 0.0
      %1367 = vmatpush1.msra.mxu0 0.0
      %1368 = vmatprep.subr.mxu0 0.0
      %1369 = vmatpush1.msra.mxu0 0.0
      %1370 = vmatprep.subr.mxu0 0.0
      %1371 = vmatpush1.msra.mxu0 0.0
      %1372 = vmatprep.subr.mxu0 0.0
      %1373 = vmatpush1.msra.mxu0 0.0
      %1374 = vmatprep.subr.mxu0 0.0
      %1375 = vmatpush1.msra.mxu0 0.0
      %1376 = vmatprep.subr.mxu0 0.0
      %1377 = vmatpush1.msra.mxu0 0.0
      %1378 = vmatprep.subr.mxu0 0.0
      %1379 = vmatpush1.msra.mxu0 0.0
      %1380 = vmatprep.subr.mxu0 0.0
      %1381 = vmatpush1.msra.mxu0 0.0
      %1382 = vmatprep.subr.mxu0 0.0
      %1383 = vmatpush1.msra.mxu0 0.0
      %1384 = vmatprep.subr.mxu0 0.0
      %1385 = vmatpush1.msra.mxu0 0.0
      %1386 = vmatprep.subr.mxu0 0.0
      %1387 = vmatpush1.msra.mxu0 0.0
      %1388 = vmatprep.subr.mxu0 0.0
      %1389 = vmatpush1.msra.mxu0 0.0
      %1390 = vmatprep.subr.mxu0 0.0
      %1391 = vmatpush1.msra.mxu0 0.0
      %1392 = vmatprep.subr.mxu0 0.0
      %1393 = vmatpush1.msra.mxu0 0.0
      %1394 = vmatprep.subr.mxu0 0.0
      %1395 = vmatpush1.msra.mxu0 0.0
      %1396 = vmatprep.mubr.f32.mxu0 0.0
      %1397 = vmatmul.mubr.f32.gmra.mrb[0].mxu0 %v1327
      %v1398 = vpop.f32.mrb[0].mxu0
      %v1399 = vadd.f32 0.0, %v1398
      %v1400 = vpop.f32.mrb[0].mxu0
      %1401 = vmatprep.mubr.f32.mxu0 0.0
      %1402 = vmatmul.mubr.f32.gmra.mrb[0].mxu0 %v1330
      %v1403 = vpop.f32.mrb[0].mxu0
      %v1404 = vadd.f32 0.0, %v1403
      %v1405 = vpop.f32.mrb[0].mxu0
      %1406 = vdwg.mxu0
      %v1407 = vld [vmem:[%s2] sm:$0xff]
      %v1408 = vld [vmem:[%s2 + $0x8] sm:$0xff]
      %v1409 = vld [vmem:[%s2 + $0x10] sm:$0xff]
      %v1410 = vld [vmem:[%s2 + $0x18] sm:$0xff]
      %v1411 = vld [vmem:[%s2 + $0x20] sm:$0xff]
      %v1412 = vld [vmem:[%s2 + $0x28] sm:$0xff]
      %v1413 = vld [vmem:[%s2 + $0x30] sm:$0xff]
      %v1414 = vld [vmem:[%s2 + $0x38] sm:$0xff]
      %v1415 = vld [vmem:[%s2 + $0x40] sm:$0xff]
      %v1416 = vld [vmem:[%s2 + $0x48] sm:$0xff]
      %v1417 = vld [vmem:[%s2 + $0x50] sm:$0xff]
      %v1418 = vld [vmem:[%s2 + $0x58] sm:$0xff]
      %v1419 = vld [vmem:[%s2 + $0x60] sm:$0xff]
      %v1420 = vld [vmem:[%s2 + $0x68] sm:$0xff]
      %v1421 = vld [vmem:[%s2 + $0x70] sm:$0xff]
      %v1422 = vld [vmem:[%s2 + $0x78] sm:$0xff]
      %1423 = vmatprep.subr.mxu0 0.0
      %1424 = vmatpush1.msra.mxu0 %v1407
      %1425 = vmatprep.subr.mxu0 0.0
      %1426 = vmatpush1.msra.mxu0 %v1408
      %1427 = vmatprep.subr.mxu0 0.0
      %1428 = vmatpush1.msra.mxu0 %v1409
      %1429 = vmatprep.subr.mxu0 0.0
      %1430 = vmatpush1.msra.mxu0 %v1410
      %1431 = vmatprep.subr.mxu0 0.0
      %1432 = vmatpush1.msra.mxu0 %v1411
      %1433 = vmatprep.subr.mxu0 0.0
      %1434 = vmatpush1.msra.mxu0 %v1412
      %1435 = vmatprep.subr.mxu0 0.0
      %1436 = vmatpush1.msra.mxu0 %v1413
      %1437 = vmatprep.subr.mxu0 0.0
      %1438 = vmatpush1.msra.mxu0 %v1414
      %1439 = vmatprep.subr.mxu0 0.0
      %1440 = vmatpush1.msra.mxu0 %v1415
      %1441 = vmatprep.subr.mxu0 0.0
      %1442 = vmatpush1.msra.mxu0 %v1416
      %1443 = vmatprep.subr.mxu0 0.0
      %1444 = vmatpush1.msra.mxu0 %v1417
      %1445 = vmatprep.subr.mxu0 0.0
      %1446 = vmatpush1.msra.mxu0 %v1418
      %1447 = vmatprep.subr.mxu0 0.0
      %1448 = vmatpush1.msra.mxu0 %v1419
      %1449 = vmatprep.subr.mxu0 0.0
      %1450 = vmatpush1.msra.mxu0 %v1420
      %1451 = vmatprep.subr.mxu0 0.0
      %1452 = vmatpush1.msra.mxu0 %v1421
      %1453 = vmatprep.subr.mxu0 0.0
      %1454 = vmatpush1.msra.mxu0 %v1422
      %1455 = vmatprep.subr.mxu0 0.0
      %1456 = vmatpush1.msra.mxu0 0.0
      %1457 = vmatprep.subr.mxu0 0.0
      %1458 = vmatpush1.msra.mxu0 0.0
      %1459 = vmatprep.subr.mxu0 0.0
      %1460 = vmatpush1.msra.mxu0 0.0
      %1461 = vmatprep.subr.mxu0 0.0
      %1462 = vmatpush1.msra.mxu0 0.0
      %1463 = vmatprep.subr.mxu0 0.0
      %1464 = vmatpush1.msra.mxu0 0.0
      %1465 = vmatprep.subr.mxu0 0.0
      %1466 = vmatpush1.msra.mxu0 0.0
      %1467 = vmatprep.subr.mxu0 0.0
      %1468 = vmatpush1.msra.mxu0 0.0
      %1469 = vmatprep.subr.mxu0 0.0
      %1470 = vmatpush1.msra.mxu0 0.0
      %1471 = vmatprep.subr.mxu0 0.0
      %1472 = vmatpush1.msra.mxu0 0.0
      %1473 = vmatprep.subr.mxu0 0.0
      %1474 = vmatpush1.msra.mxu0 0.0
      %1475 = vmatprep.subr.mxu0 0.0
      %1476 = vmatpush1.msra.mxu0 0.0
      %1477 = vmatprep.subr.mxu0 0.0
      %1478 = vmatpush1.msra.mxu0 0.0
      %1479 = vmatprep.subr.mxu0 0.0
      %1480 = vmatpush1.msra.mxu0 0.0
      %1481 = vmatprep.subr.mxu0 0.0
      %1482 = vmatpush1.msra.mxu0 0.0
      %1483 = vmatprep.subr.mxu0 0.0
      %1484 = vmatpush1.msra.mxu0 0.0
      %1485 = vmatprep.subr.mxu0 0.0
      %1486 = vmatpush1.msra.mxu0 0.0
      %1487 = vmatprep.mubr.f32.mxu0 0.0
      %1488 = vmatmul.mubr.f32.gmra.mrb[0].mxu0 %v1399
      %v1489 = vpop.f32.mrb[0].mxu0
      %v1490 = vadd.f32 0.0, %v1489
      %v1491 = vpop.f32.mrb[0].mxu0
      %1492 = vmatprep.mubr.f32.mxu0 0.0
      %1493 = vmatmul.mubr.f32.gmra.mrb[0].mxu0 %v1404
      %v1494 = vpop.f32.mrb[0].mxu0
      %v1495 = vadd.f32 0.0, %v1494
      %v1496 = vpop.f32.mrb[0].mxu0
      %1497 = vdwg.mxu0
      %v1498 = vmul.f32 %v1490, %v1490
      %v1499 = vmul.f32 %v1495, %v1495
      %v1500 = vadd.f32 %v1498, %v1499
      %1501 = vadd.xlane.f32.xlu0 %v1500
      %v1502 = vpop.xlane.xlu0 %1501
      %v1503 = vrot.slane %v1502, 4
      %v1504 = vadd.f32 %v1502, %v1503
      %v1505 = vrot.slane %v1504, 2
      %v1506 = vadd.f32 %v1504, %v1505
      %v1507 = vrot.slane %v1506, 1
      %v1508 = vadd.f32 %v1506, %v1507
      %s1509 = vtos %v1508
      %v1510 = vstv %s1509
      %v1511 = vrcp.pop %v1510
      %v1512 = vmul.f32 %v1323, %v1511
      %v1513 = vld [vmem:[#allocation5] sm:$0xff]
      %v1514 = vld [vmem:[#allocation5 + $0x8] sm:$0xff]
      %v1516 = vlaneseq
      %v1517 = vshrl.u32 %v1516, 7
      %v1518 = vsub.s32 0, %v1517
      %v1519 = vrot.slane %v1512, %v1518
      %1520 = vset.pattern.permute.xlu0 0
      %1521 = vperm.xlu0 %1520, %v1519
      %v1522 = vpop.permute.xlu0 %1521
      %v1524 = vmul.f32 %v1522, %v1321
      %v1525 = vmul.f32 %v1522, %v1322
      %v1526 = vadd.f32 %v1513, %v1524
      %v1527 = vadd.f32 %v1514, %v1525
      %1528 = vst [vmem:[#allocation5] sm:$0xff] %v1526
      %1529 = vst [vmem:[#allocation5 + $0x8] sm:$0xff] %v1527
      %v1530 = vld [vmem:[#allocation7] sm:$0xff]
      %v1531 = vld [vmem:[#allocation7 + $0x8] sm:$0xff]
      %v1532 = vmul.f32 %v1522, %v1490
      %v1533 = vmul.f32 %v1522, %v1495
      %v1534 = vsub.f32 %v1530, %v1532
      %v1535 = vsub.f32 %v1531, %v1533
      %1536 = vst [vmem:[#allocation7] sm:$0xff] %v1534
      %1537 = vst [vmem:[#allocation7 + $0x8] sm:$0xff] %v1535
      %v1538 = vld [vmem:[%s1] sm:$0xff]
      %v1539 = vld [vmem:[%s1 + $0x8] sm:$0xff]
      %v1541 = vsel %vm35, %v1538, 0
      %v1544 = vsel %vm35, %v1539, 0
      %1546 = vmatprep.subr.mxu0 0.0
      %1547 = vmatpush1.msra.mxu0 %v1534
      %1548 = vmatprep.subr.mxu0 0.0
      %1549 = vmatpush1.msra.mxu0 %v1535
      %1550 = vmatprep.subr.mxu0 0.0
      %1551 = vmatpush1.msra.mxu0 0.0
      %1552 = vmatprep.subr.mxu0 0.0
      %1553 = vmatpush1.msra.mxu0 0.0
      %1554 = vmatprep.subr.mxu0 0.0
      %1555 = vmatpush1.msra.mxu0 0.0
      %1556 = vmatprep.subr.mxu0 0.0
      %1557 = vmatpush1.msra.mxu0 0.0
      %1558 = vmatprep.subr.mxu0 0.0
      %1559 = vmatpush1.msra.mxu0 0.0
      %1560 = vmatprep.subr.mxu0 0.0
      %1561 = vmatpush1.msra.mxu0 0.0
      %1562 = vmatprep.subr.mxu0 0.0
      %1563 = vmatpush1.msra.mxu0 0.0
      %1564 = vmatprep.subr.mxu0 0.0
      %1565 = vmatpush1.msra.mxu0 0.0
      %1566 = vmatprep.subr.mxu0 0.0
      %1567 = vmatpush1.msra.mxu0 0.0
      %1568 = vmatprep.subr.mxu0 0.0
      %1569 = vmatpush1.msra.mxu0 0.0
      %1570 = vmatprep.subr.mxu0 0.0
      %1571 = vmatpush1.msra.mxu0 0.0
      %1572 = vmatprep.subr.mxu0 0.0
      %1573 = vmatpush1.msra.mxu0 0.0
      %1574 = vmatprep.subr.mxu0 0.0
      %1575 = vmatpush1.msra.mxu0 0.0
      %1576 = vmatprep.subr.mxu0 0.0
      %1577 = vmatpush1.msra.mxu0 0.0
      %1578 = vmatprep.subr.mxu0 0.0
      %1579 = vmatpush1.msra.mxu0 0.0
      %1580 = vmatprep.subr.mxu0 0.0
      %1581 = vmatpush1.msra.mxu0 0.0
      %1582 = vmatprep.subr.mxu0 0.0
      %1583 = vmatpush1.msra.mxu0 0.0
      %1584 = vmatprep.subr.mxu0 0.0
      %1585 = vmatpush1.msra.mxu0 0.0
      %1586 = vmatprep.subr.mxu0 0.0
      %1587 = vmatpush1.msra.mxu0 0.0
      %1588 = vmatprep.subr.mxu0 0.0
      %1589 = vmatpush1.msra.mxu0 0.0
      %1590 = vmatprep.subr.mxu0 0.0
      %1591 = vmatpush1.msra.mxu0 0.0
      %1592 = vmatprep.subr.mxu0 0.0
      %1593 = vmatpush1.msra.mxu0 0.0
      %1594 = vmatprep.subr.mxu0 0.0
      %1595 = vmatpush1.msra.mxu0 0.0
      %1596 = vmatprep.subr.mxu0 0.0
      %1597 = vmatpush1.msra.mxu0 0.0
      %1598 = vmatprep.subr.mxu0 0.0
      %1599 = vmatpush1.msra.mxu0 0.0
      %1600 = vmatprep.subr.mxu0 0.0
      %1601 = vmatpush1.msra.mxu0 0.0
      %1602 = vmatprep.subr.mxu0 0.0
      %1603 = vmatpush1.msra.mxu0 0.0
      %1604 = vmatprep.subr.mxu0 0.0
      %1605 = vmatpush1.msra.mxu0 0.0
      %1606 = vmatprep.subr.mxu0 0.0
      %1607 = vmatpush1.msra.mxu0 0.0
      %1608 = vmatprep.subr.mxu0 0.0
      %1609 = vmatpush1.msra.mxu0 0.0
      %1610 = vmatprep.mubr.f32.mxu0 0.0
      %1611 = vmatmul.mubr.f32.gmra.mrb[0].mxu0 %v1541
      %v1612 = vpop.f32.mrb[0].mxu0
      %v1613 = vadd.f32 0.0, %v1612
      %v1614 = vpop.f32.mrb[0].mxu0
      %1615 = vmatprep.mubr.f32.mxu0 0.0
      %1616 = vmatmul.mubr.f32.gmra.mrb[0].mxu0 %v1544
      %v1617 = vpop.f32.mrb[0].mxu0
      %v1618 = vadd.f32 0.0, %v1617
      %v1619 = vpop.f32.mrb[0].mxu0
      %1620 = vdwg.mxu0
      %v1621 = vld [vmem:[%s3] sm:$0xff]
      %v1622 = vld [vmem:[%s3 + $0x8] sm:$0xff]
      %v1623 = vld [vmem:[%s3 + $0x10] sm:$0xff]
      %v1624 = vld [vmem:[%s3 + $0x18] sm:$0xff]
      %v1625 = vld [vmem:[%s3 + $0x20] sm:$0xff]
      %v1626 = vld [vmem:[%s3 + $0x28] sm:$0xff]
      %v1627 = vld [vmem:[%s3 + $0x30] sm:$0xff]
      %v1628 = vld [vmem:[%s3 + $0x38] sm:$0xff]
      %v1629 = vld [vmem:[%s3 + $0x40] sm:$0xff]
      %v1630 = vld [vmem:[%s3 + $0x48] sm:$0xff]
      %v1631 = vld [vmem:[%s3 + $0x50] sm:$0xff]
      %v1632 = vld [vmem:[%s3 + $0x58] sm:$0xff]
      %v1633 = vld [vmem:[%s3 + $0x60] sm:$0xff]
      %v1634 = vld [vmem:[%s3 + $0x68] sm:$0xff]
      %v1635 = vld [vmem:[%s3 + $0x70] sm:$0xff]
      %v1636 = vld [vmem:[%s3 + $0x78] sm:$0xff]
      %1637 = vmatprep.subr.mxu0 0.0
      %1638 = vmatpush1.msra.mxu0 %v1621
      %1639 = vmatprep.subr.mxu0 0.0
      %1640 = vmatpush1.msra.mxu0 %v1622
      %1641 = vmatprep.subr.mxu0 0.0
      %1642 = vmatpush1.msra.mxu0 %v1623
      %1643 = vmatprep.subr.mxu0 0.0
      %1644 = vmatpush1.msra.mxu0 %v1624
      %1645 = vmatprep.subr.mxu0 0.0
      %1646 = vmatpush1.msra.mxu0 %v1625
      %1647 = vmatprep.subr.mxu0 0.0
      %1648 = vmatpush1.msra.mxu0 %v1626
      %1649 = vmatprep.subr.mxu0 0.0
      %1650 = vmatpush1.msra.mxu0 %v1627
      %1651 = vmatprep.subr.mxu0 0.0
      %1652 = vmatpush1.msra.mxu0 %v1628
      %1653 = vmatprep.subr.mxu0 0.0
      %1654 = vmatpush1.msra.mxu0 %v1629
      %1655 = vmatprep.subr.mxu0 0.0
      %1656 = vmatpush1.msra.mxu0 %v1630
      %1657 = vmatprep.subr.mxu0 0.0
      %1658 = vmatpush1.msra.mxu0 %v1631
      %1659 = vmatprep.subr.mxu0 0.0
      %1660 = vmatpush1.msra.mxu0 %v1632
      %1661 = vmatprep.subr.mxu0 0.0
      %1662 = vmatpush1.msra.mxu0 %v1633
      %1663 = vmatprep.subr.mxu0 0.0
      %1664 = vmatpush1.msra.mxu0 %v1634
      %1665 = vmatprep.subr.mxu0 0.0
      %1666 = vmatpush1.msra.mxu0 %v1635
      %1667 = vmatprep.subr.mxu0 0.0
      %1668 = vmatpush1.msra.mxu0 %v1636
      %1669 = vmatprep.subr.mxu0 0.0
      %1670 = vmatpush1.msra.mxu0 0.0
      %1671 = vmatprep.subr.mxu0 0.0
      %1672 = vmatpush1.msra.mxu0 0.0
      %1673 = vmatprep.subr.mxu0 0.0
      %1674 = vmatpush1.msra.mxu0 0.0
      %1675 = vmatprep.subr.mxu0 0.0
      %1676 = vmatpush1.msra.mxu0 0.0
      %1677 = vmatprep.subr.mxu0 0.0
      %1678 = vmatpush1.msra.mxu0 0.0
      %1679 = vmatprep.subr.mxu0 0.0
      %1680 = vmatpush1.msra.mxu0 0.0
      %1681 = vmatprep.subr.mxu0 0.0
      %1682 = vmatpush1.msra.mxu0 0.0
      %1683 = vmatprep.subr.mxu0 0.0
      %1684 = vmatpush1.msra.mxu0 0.0
      %1685 = vmatprep.subr.mxu0 0.0
      %1686 = vmatpush1.msra.mxu0 0.0
      %1687 = vmatprep.subr.mxu0 0.0
      %1688 = vmatpush1.msra.mxu0 0.0
      %1689 = vmatprep.subr.mxu0 0.0
      %1690 = vmatpush1.msra.mxu0 0.0
      %1691 = vmatprep.subr.mxu0 0.0
      %1692 = vmatpush1.msra.mxu0 0.0
      %1693 = vmatprep.subr.mxu0 0.0
      %1694 = vmatpush1.msra.mxu0 0.0
      %1695 = vmatprep.subr.mxu0 0.0
      %1696 = vmatpush1.msra.mxu0 0.0
      %1697 = vmatprep.subr.mxu0 0.0
      %1698 = vmatpush1.msra.mxu0 0.0
      %1699 = vmatprep.subr.mxu0 0.0
      %1700 = vmatpush1.msra.mxu0 0.0
      %1701 = vmatprep.mubr.f32.mxu0 0.0
      %1702 = vmatmul.mubr.f32.gmra.mrb[0].mxu0 %v1613
      %v1703 = vpop.f32.mrb[0].mxu0
      %v1704 = vadd.f32 0.0, %v1703
      %v1705 = vpop.f32.mrb[0].mxu0
      %1706 = vmatprep.mubr.f32.mxu0 0.0
      %1707 = vmatmul.mubr.f32.gmra.mrb[0].mxu0 %v1618
      %v1708 = vpop.f32.mrb[0].mxu0
      %v1709 = vadd.f32 0.0, %v1708
      %v1710 = vpop.f32.mrb[0].mxu0
      %1711 = vdwg.mxu0
      %v1712 = vmul.f32 %v1704, %v1704
      %v1713 = vmul.f32 %v1709, %v1709
      %v1714 = vadd.f32 %v1712, %v1713
      %1715 = vadd.xlane.f32.xlu0 %v1714
      %v1716 = vpop.xlane.xlu0 %1715
      %v1717 = vrot.slane %v1716, 4
      %v1718 = vadd.f32 %v1716, %v1717
      %v1719 = vrot.slane %v1718, 2
      %v1720 = vadd.f32 %v1718, %v1719
      %v1721 = vrot.slane %v1720, 1
      %v1722 = vadd.f32 %v1720, %v1721
      %s1723 = vtos %v1722
      %v1724 = vstv %s1723
      %v1725 = vrcp.pop %v1323
      %v1726 = vmul.f32 %v1724, %v1725
      %v1728 = vlaneseq
      %v1729 = vshrl.u32 %v1728, 7
      %v1730 = vsub.s32 0, %v1729
      %v1731 = vrot.slane %v1726, %v1730
      %1732 = vset.pattern.permute.xlu0 0
      %1733 = vperm.xlu0 %1732, %v1731
      %v1734 = vpop.permute.xlu0 %1733
      %v1736 = vmul.f32 %v1734, %v1321
      %v1737 = vmul.f32 %v1734, %v1322
      %v1738 = vadd.f32 %v1704, %v1736
      %v1739 = vadd.f32 %v1709, %v1737
      %1740 = vst [vmem:[#allocation2] sm:$0xff] %v1738
      %1741 = vst [vmem:[#allocation2 + $0x8] sm:$0xff] %v1739
      %1742 = vst.msk [vmem:[#allocation3] sm:$0x1] %vm430, %v1724
      %v1743 = vmul.f32 %v1534, %v1534
      %v1744 = vmul.f32 %v1535, %v1535
      %v1745 = vadd.f32 %v1743, %v1744
      %1746 = vadd.xlane.f32.xlu0 %v1745
      %v1747 = vpop.xlane.xlu0 %1746
      %v1748 = vrot.slane %v1747, 4
      %v1749 = vadd.f32 %v1747, %v1748
      %v1750 = vrot.slane %v1749, 2
      %v1751 = vadd.f32 %v1749, %v1750
      %v1752 = vrot.slane %v1751, 1
      %v1753 = vadd.f32 %v1751, %v1752
      %s1754 = vtos %v1753
      %p1755 = scmp.lt.f32.partialorder %s1754, %s224
      %s1756 = scalar_select %p1755, 1, 0
      %1757 = sst [smem:[%s239]] %s1756
    $region37: #{graph_cgls_forward.1} parent=1 // pred_fallthru
      _
    %s1758 = sld [smem:[#allocation4]]
    %p1759 = scmp.eq.s32.totalorder %s1758, 0
    // Predicated region
    $region38: #{graph_cgls_forward.1} parent=1 // pred_check
      %p1760 = pneg %p1759
    $region39: #{graph_cgls_forward.1} parent=1 // pred_check_branch
      %1762 = sbr.rel (%p1760) target = $region41
    $region40: #{graph_cgls_forward.1} parent=1 // pred_region
      %v1763 = vld [vmem:[#allocation2] sm:$0xff]
      %v1764 = vld [vmem:[#allocation2 + $0x8] sm:$0xff]
      %v1765 = vld [vmem:[#allocation3] sm:$0x1]
      %v1766 = vld [vmem:[%s0] sm:$0xff]
      %v1767 = vld [vmem:[%s0 + $0x8] sm:$0xff]
      %v1769 = vsel %vm35, %v1766, 0
      %v1772 = vsel %vm35, %v1767, 0
      %1774 = vmatprep.subr.mxu0 0.0
      %1775 = vmatpush1.msra.mxu0 %v1763
      %1776 = vmatprep.subr.mxu0 0.0
      %1777 = vmatpush1.msra.mxu0 %v1764
      %1778 = vmatprep.subr.mxu0 0.0
      %1779 = vmatpush1.msra.mxu0 0.0
      %1780 = vmatprep.subr.mxu0 0.0
      %1781 = vmatpush1.msra.mxu0 0.0
      %1782 = vmatprep.subr.mxu0 0.0
      %1783 = vmatpush1.msra.mxu0 0.0
      %1784 = vmatprep.subr.mxu0 0.0
      %1785 = vmatpush1.msra.mxu0 0.0
      %1786 = vmatprep.subr.mxu0 0.0
      %1787 = vmatpush1.msra.mxu0 0.0
      %1788 = vmatprep.subr.mxu0 0.0
      %1789 = vmatpush1.msra.mxu0 0.0
      %1790 = vmatprep.subr.mxu0 0.0
      %1791 = vmatpush1.msra.mxu0 0.0
      %1792 = vmatprep.subr.mxu0 0.0
      %1793 = vmatpush1.msra.mxu0 0.0
      %1794 = vmatprep.subr.mxu0 0.0
      %1795 = vmatpush1.msra.mxu0 0.0
      %1796 = vmatprep.subr.mxu0 0.0
      %1797 = vmatpush1.msra.mxu0 0.0
      %1798 = vmatprep.subr.mxu0 0.0
      %1799 = vmatpush1.msra.mxu0 0.0
      %1800 = vmatprep.subr.mxu0 0.0
      %1801 = vmatpush1.msra.mxu0 0.0
      %1802 = vmatprep.subr.mxu0 0.0
      %1803 = vmatpush1.msra.mxu0 0.0
      %1804 = vmatprep.subr.mxu0 0.0
      %1805 = vmatpush1.msra.mxu0 0.0
      %1806 = vmatprep.subr.mxu0 0.0
      %1807 = vmatpush1.msra.mxu0 0.0
      %1808 = vmatprep.subr.mxu0 0.0
      %1809 = vmatpush1.msra.mxu0 0.0
      %1810 = vmatprep.subr.mxu0 0.0
      %1811 = vmatpush1.msra.mxu0 0.0
      %1812 = vmatprep.subr.mxu0 0.0
      %1813 = vmatpush1.msra.mxu0 0.0
      %1814 = vmatprep.subr.mxu0 0.0
      %1815 = vmatpush1.msra.mxu0 0.0
      %1816 = vmatprep.subr.mxu0 0.0
      %1817 = vmatpush1.msra.mxu0 0.0
      %1818 = vmatprep.subr.mxu0 0.0
      %1819 = vmatpush1.msra.mxu0 0.0
      %1820 = vmatprep.subr.mxu0 0.0
      %1821 = vmatpush1.msra.mxu0 0.0
      %1822 = vmatprep.subr.mxu0 0.0
      %1823 = vmatpush1.msra.mxu0 0.0
      %1824 = vmatprep.subr.mxu0 0.0
      %1825 = vmatpush1.msra.mxu0 0.0
      %1826 = vmatprep.subr.mxu0 0.0
      %1827 = vmatpush1.msra.mxu0 0.0
      %1828 = vmatprep.subr.mxu0 0.0
      %1829 = vmatpush1.msra.mxu0 0.0
      %1830 = vmatprep.subr.mxu0 0.0
      %1831 = vmatpush1.msra.mxu0 0.0
      %1832 = vmatprep.subr.mxu0 0.0
      %1833 = vmatpush1.msra.mxu0 0.0
      %1834 = vmatprep.subr.mxu0 0.0
      %1835 = vmatpush1.msra.mxu0 0.0
      %1836 = vmatprep.subr.mxu0 0.0
      %1837 = vmatpush1.msra.mxu0 0.0
      %1838 = vmatprep.mubr.f32.mxu0 0.0
      %1839 = vmatmul.mubr.f32.gmra.mrb[0].mxu0 %v1769
      %v1840 = vpop.f32.mrb[0].mxu0
      %v1841 = vadd.f32 0.0, %v1840
      %v1842 = vpop.f32.mrb[0].mxu0
      %1843 = vmatprep.mubr.f32.mxu0 0.0
      %1844 = vmatmul.mubr.f32.gmra.mrb[0].mxu0 %v1772
      %v1845 = vpop.f32.mrb[0].mxu0
      %v1846 = vadd.f32 0.0, %v1845
      %v1847 = vpop.f32.mrb[0].mxu0
      %1848 = vdwg.mxu0
      %v1849 = vld [vmem:[%s2] sm:$0xff]
      %v1850 = vld [vmem:[%s2 + $0x8] sm:$0xff]
      %v1851 = vld [vmem:[%s2 + $0x10] sm:$0xff]
      %v1852 = vld [vmem:[%s2 + $0x18] sm:$0xff]
      %v1853 = vld [vmem:[%s2 + $0x20] sm:$0xff]
      %v1854 = vld [vmem:[%s2 + $0x28] sm:$0xff]
      %v1855 = vld [vmem:[%s2 + $0x30] sm:$0xff]
      %v1856 = vld [vmem:[%s2 + $0x38] sm:$0xff]
      %v1857 = vld [vmem:[%s2 + $0x40] sm:$0xff]
      %v1858 = vld [vmem:[%s2 + $0x48] sm:$0xff]
      %v1859 = vld [vmem:[%s2 + $0x50] sm:$0xff]
      %v1860 = vld [vmem:[%s2 + $0x58] sm:$0xff]
      %v1861 = vld [vmem:[%s2 + $0x60] sm:$0xff]
      %v1862 = vld [vmem:[%s2 + $0x68] sm:$0xff]
      %v1863 = vld [vmem:[%s2 + $0x70] sm:$0xff]
      %v1864 = vld [vmem:[%s2 + $0x78] sm:$0xff]
      %1865 = vmatprep.subr.mxu0 0.0
      %1866 = vmatpush1.msra.mxu0 %v1849
      %1867 = vmatprep.subr.mxu0 0.0
      %1868 = vmatpush1.msra.mxu0 %v1850
      %1869 = vmatprep.subr.mxu0 0.0
      %1870 = vmatpush1.msra.mxu0 %v1851
      %1871 = vmatprep.subr.mxu0 0.0
      %1872 = vmatpush1.msra.mxu0 %v1852
      %1873 = vmatprep.subr.mxu0 0.0
      %1874 = vmatpush1.msra.mxu0 %v1853
      %1875 = vmatprep.subr.mxu0 0.0
      %1876 = vmatpush1.msra.mxu0 %v1854
      %1877 = vmatprep.subr.mxu0 0.0
      %1878 = vmatpush1.msra.mxu0 %v1855
      %1879 = vmatprep.subr.mxu0 0.0
      %1880 = vmatpush1.msra.mxu0 %v1856
      %1881 = vmatprep.subr.mxu0 0.0
      %1882 = vmatpush1.msra.mxu0 %v1857
      %1883 = vmatprep.subr.mxu0 0.0
      %1884 = vmatpush1.msra.mxu0 %v1858
      %1885 = vmatprep.subr.mxu0 0.0
      %1886 = vmatpush1.msra.mxu0 %v1859
      %1887 = vmatprep.subr.mxu0 0.0
      %1888 = vmatpush1.msra.mxu0 %v1860
      %1889 = vmatprep.subr.mxu0 0.0
      %1890 = vmatpush1.msra.mxu0 %v1861
      %1891 = vmatprep.subr.mxu0 0.0
      %1892 = vmatpush1.msra.mxu0 %v1862
      %1893 = vmatprep.subr.mxu0 0.0
      %1894 = vmatpush1.msra.mxu0 %v1863
      %1895 = vmatprep.subr.mxu0 0.0
      %1896 = vmatpush1.msra.mxu0 %v1864
      %1897 = vmatprep.subr.mxu0 0.0
      %1898 = vmatpush1.msra.mxu0 0.0
      %1899 = vmatprep.subr.mxu0 0.0
      %1900 = vmatpush1.msra.mxu0 0.0
      %1901 = vmatprep.subr.mxu0 0.0
      %1902 = vmatpush1.msra.mxu0 0.0
      %1903 = vmatprep.subr.mxu0 0.0
      %1904 = vmatpush1.msra.mxu0 0.0
      %1905 = vmatprep.subr.mxu0 0.0
      %1906 = vmatpush1.msra.mxu0 0.0
      %1907 = vmatprep.subr.mxu0 0.0
      %1908 = vmatpush1.msra.mxu0 0.0
      %1909 = vmatprep.subr.mxu0 0.0
      %1910 = vmatpush1.msra.mxu0 0.0
      %1911 = vmatprep.subr.mxu0 0.0
      %1912 = vmatpush1.msra.mxu0 0.0
      %1913 = vmatprep.subr.mxu0 0.0
      %1914 = vmatpush1.msra.mxu0 0.0
      %1915 = vmatprep.subr.mxu0 0.0
      %1916 = vmatpush1.msra.mxu0 0.0
      %1917 = vmatprep.subr.mxu0 0.0
      %1918 = vmatpush1.msra.mxu0 0.0
      %1919 = vmatprep.subr.mxu0 0.0
      %1920 = vmatpush1.msra.mxu0 0.0
      %1921 = vmatprep.subr.mxu0 0.0
      %1922 = vmatpush1.msra.mxu0 0.0
      %1923 = vmatprep.subr.mxu0 0.0
      %1924 = vmatpush1.msra.mxu0 0.0
      %1925 = vmatprep.subr.mxu0 0.0
      %1926 = vmatpush1.msra.mxu0 0.0
      %1927 = vmatprep.subr.mxu0 0.0
      %1928 = vmatpush1.msra.mxu0 0.0
      %1929 = vmatprep.mubr.f32.mxu0 0.0
      %1930 = vmatmul.mubr.f32.gmra.mrb[0].mxu0 %v1841
      %v1931 = vpop.f32.mrb[0].mxu0
      %v1932 = vadd.f32 0.0, %v1931
      %v1933 = vpop.f32.mrb[0].mxu0
      %1934 = vmatprep.mubr.f32.mxu0 0.0
      %1935 = vmatmul.mubr.f32.gmra.mrb[0].mxu0 %v1846
      %v1936 = vpop.f32.mrb[0].mxu0
      %v1937 = vadd.f32 0.0, %v1936
      %v1938 = vpop.f32.mrb[0].mxu0
      %1939 = vdwg.mxu0
      %v1940 = vmul.f32 %v1932, %v1932
      %v1941 = vmul.f32 %v1937, %v1937
      %v1942 = vadd.f32 %v1940, %v1941
      %1943 = vadd.xlane.f32.xlu0 %v1942
      %v1944 = vpop.xlane.xlu0 %1943
      %v1945 = vrot.slane %v1944, 4
      %v1946 = vadd.f32 %v1944, %v1945
      %v1947 = vrot.slane %v1946, 2
      %v1948 = vadd.f32 %v1946, %v1947
      %v1949 = vrot.slane %v1948, 1
      %v1950 = vadd.f32 %v1948, %v1949
      %s1951 = vtos %v1950
      %v1952 = vstv %s1951
      %v1953 = vrcp.pop %v1952
      %v1954 = vmul.f32 %v1765, %v1953
      %v1955 = vld [vmem:[#allocation5] sm:$0xff]
      %v1956 = vld [vmem:[#allocation5 + $0x8] sm:$0xff]
      %v1958 = vlaneseq
      %v1959 = vshrl.u32 %v1958, 7
      %v1960 = vsub.s32 0, %v1959
      %v1961 = vrot.slane %v1954, %v1960
      %1962 = vset.pattern.permute.xlu0 0
      %1963 = vperm.xlu0 %1962, %v1961
      %v1964 = vpop.permute.xlu0 %1963
      %v1966 = vmul.f32 %v1964, %v1763
      %v1967 = vmul.f32 %v1964, %v1764
      %v1968 = vadd.f32 %v1955, %v1966
      %v1969 = vadd.f32 %v1956, %v1967
      %1970 = vst [vmem:[#allocation5] sm:$0xff] %v1968
      %1971 = vst [vmem:[#allocation5 + $0x8] sm:$0xff] %v1969
      %v1972 = vld [vmem:[#allocation7] sm:$0xff]
      %v1973 = vld [vmem:[#allocation7 + $0x8] sm:$0xff]
      %v1974 = vmul.f32 %v1964, %v1932
      %v1975 = vmul.f32 %v1964, %v1937
      %v1976 = vsub.f32 %v1972, %v1974
      %v1977 = vsub.f32 %v1973, %v1975
      %1978 = vst [vmem:[#allocation7] sm:$0xff] %v1976
      %1979 = vst [vmem:[#allocation7 + $0x8] sm:$0xff] %v1977
      %v1980 = vld [vmem:[%s1] sm:$0xff]
      %v1981 = vld [vmem:[%s1 + $0x8] sm:$0xff]
      %v1983 = vsel %vm35, %v1980, 0
      %v1986 = vsel %vm35, %v1981, 0
      %1988 = vmatprep.subr.mxu0 0.0
      %1989 = vmatpush1.msra.mxu0 %v1976
      %1990 = vmatprep.subr.mxu0 0.0
      %1991 = vmatpush1.msra.mxu0 %v1977
      %1992 = vmatprep.subr.mxu0 0.0
      %1993 = vmatpush1.msra.mxu0 0.0
      %1994 = vmatprep.subr.mxu0 0.0
      %1995 = vmatpush1.msra.mxu0 0.0
      %1996 = vmatprep.subr.mxu0 0.0
      %1997 = vmatpush1.msra.mxu0 0.0
      %1998 = vmatprep.subr.mxu0 0.0
      %1999 = vmatpush1.msra.mxu0 0.0
      %2000 = vmatprep.subr.mxu0 0.0
      %2001 = vmatpush1.msra.mxu0 0.0
      %2002 = vmatprep.subr.mxu0 0.0
      %2003 = vmatpush1.msra.mxu0 0.0
      %2004 = vmatprep.subr.mxu0 0.0
      %2005 = vmatpush1.msra.mxu0 0.0
      %2006 = vmatprep.subr.mxu0 0.0
      %2007 = vmatpush1.msra.mxu0 0.0
      %2008 = vmatprep.subr.mxu0 0.0
      %2009 = vmatpush1.msra.mxu0 0.0
      %2010 = vmatprep.subr.mxu0 0.0
      %2011 = vmatpush1.msra.mxu0 0.0
      %2012 = vmatprep.subr.mxu0 0.0
      %2013 = vmatpush1.msra.mxu0 0.0
      %2014 = vmatprep.subr.mxu0 0.0
      %2015 = vmatpush1.msra.mxu0 0.0
      %2016 = vmatprep.subr.mxu0 0.0
      %2017 = vmatpush1.msra.mxu0 0.0
      %2018 = vmatprep.subr.mxu0 0.0
      %2019 = vmatpush1.msra.mxu0 0.0
      %2020 = vmatprep.subr.mxu0 0.0
      %2021 = vmatpush1.msra.mxu0 0.0
      %2022 = vmatprep.subr.mxu0 0.0
      %2023 = vmatpush1.msra.mxu0 0.0
      %2024 = vmatprep.subr.mxu0 0.0
      %2025 = vmatpush1.msra.mxu0 0.0
      %2026 = vmatprep.subr.mxu0 0.0
      %2027 = vmatpush1.msra.mxu0 0.0
      %2028 = vmatprep.subr.mxu0 0.0
      %2029 = vmatpush1.msra.mxu0 0.0
      %2030 = vmatprep.subr.mxu0 0.0
      %2031 = vmatpush1.msra.mxu0 0.0
      %2032 = vmatprep.subr.mxu0 0.0
      %2033 = vmatpush1.msra.mxu0 0.0
      %2034 = vmatprep.subr.mxu0 0.0
      %2035 = vmatpush1.msra.mxu0 0.0
      %2036 = vmatprep.subr.mxu0 0.0
      %2037 = vmatpush1.msra.mxu0 0.0
      %2038 = vmatprep.subr.mxu0 0.0
      %2039 = vmatpush1.msra.mxu0 0.0
      %2040 = vmatprep.subr.mxu0 0.0
      %2041 = vmatpush1.msra.mxu0 0.0
      %2042 = vmatprep.subr.mxu0 0.0
      %2043 = vmatpush1.msra.mxu0 0.0
      %2044 = vmatprep.subr.mxu0 0.0
      %2045 = vmatpush1.msra.mxu0 0.0
      %2046 = vmatprep.subr.mxu0 0.0
      %2047 = vmatpush1.msra.mxu0 0.0
      %2048 = vmatprep.subr.mxu0 0.0
      %2049 = vmatpush1.msra.mxu0 0.0
      %2050 = vmatprep.subr.mxu0 0.0
      %2051 = vmatpush1.msra.mxu0 0.0
      %2052 = vmatprep.mubr.f32.mxu0 0.0
      %2053 = vmatmul.mubr.f32.gmra.mrb[0].mxu0 %v1983
      %v2054 = vpop.f32.mrb[0].mxu0
      %v2055 = vadd.f32 0.0, %v2054
      %v2056 = vpop.f32.mrb[0].mxu0
      %2057 = vmatprep.mubr.f32.mxu0 0.0
      %2058 = vmatmul.mubr.f32.gmra.mrb[0].mxu0 %v1986
      %v2059 = vpop.f32.mrb[0].mxu0
      %v2060 = vadd.f32 0.0, %v2059
      %v2061 = vpop.f32.mrb[0].mxu0
      %2062 = vdwg.mxu0
      %v2063 = vld [vmem:[%s3] sm:$0xff]
      %v2064 = vld [vmem:[%s3 + $0x8] sm:$0xff]
      %v2065 = vld [vmem:[%s3 + $0x10] sm:$0xff]
      %v2066 = vld [vmem:[%s3 + $0x18] sm:$0xff]
      %v2067 = vld [vmem:[%s3 + $0x20] sm:$0xff]
      %v2068 = vld [vmem:[%s3 + $0x28] sm:$0xff]
      %v2069 = vld [vmem:[%s3 + $0x30] sm:$0xff]
      %v2070 = vld [vmem:[%s3 + $0x38] sm:$0xff]
      %v2071 = vld [vmem:[%s3 + $0x40] sm:$0xff]
      %v2072 = vld [vmem:[%s3 + $0x48] sm:$0xff]
      %v2073 = vld [vmem:[%s3 + $0x50] sm:$0xff]
      %v2074 = vld [vmem:[%s3 + $0x58] sm:$0xff]
      %v2075 = vld [vmem:[%s3 + $0x60] sm:$0xff]
      %v2076 = vld [vmem:[%s3 + $0x68] sm:$0xff]
      %v2077 = vld [vmem:[%s3 + $0x70] sm:$0xff]
      %v2078 = vld [vmem:[%s3 + $0x78] sm:$0xff]
      %2079 = vmatprep.subr.mxu0 0.0
      %2080 = vmatpush1.msra.mxu0 %v2063
      %2081 = vmatprep.subr.mxu0 0.0
      %2082 = vmatpush1.msra.mxu0 %v2064
      %2083 = vmatprep.subr.mxu0 0.0
      %2084 = vmatpush1.msra.mxu0 %v2065
      %2085 = vmatprep.subr.mxu0 0.0
      %2086 = vmatpush1.msra.mxu0 %v2066
      %2087 = vmatprep.subr.mxu0 0.0
      %2088 = vmatpush1.msra.mxu0 %v2067
      %2089 = vmatprep.subr.mxu0 0.0
      %2090 = vmatpush1.msra.mxu0 %v2068
      %2091 = vmatprep.subr.mxu0 0.0
      %2092 = vmatpush1.msra.mxu0 %v2069
      %2093 = vmatprep.subr.mxu0 0.0
      %2094 = vmatpush1.msra.mxu0 %v2070
      %2095 = vmatprep.subr.mxu0 0.0
      %2096 = vmatpush1.msra.mxu0 %v2071
      %2097 = vmatprep.subr.mxu0 0.0
      %2098 = vmatpush1.msra.mxu0 %v2072
      %2099 = vmatprep.subr.mxu0 0.0
      %2100 = vmatpush1.msra.mxu0 %v2073
      %2101 = vmatprep.subr.mxu0 0.0
      %2102 = vmatpush1.msra.mxu0 %v2074
      %2103 = vmatprep.subr.mxu0 0.0
      %2104 = vmatpush1.msra.mxu0 %v2075
      %2105 = vmatprep.subr.mxu0 0.0
      %2106 = vmatpush1.msra.mxu0 %v2076
      %2107 = vmatprep.subr.mxu0 0.0
      %2108 = vmatpush1.msra.mxu0 %v2077
      %2109 = vmatprep.subr.mxu0 0.0
      %2110 = vmatpush1.msra.mxu0 %v2078
      %2111 = vmatprep.subr.mxu0 0.0
      %2112 = vmatpush1.msra.mxu0 0.0
      %2113 = vmatprep.subr.mxu0 0.0
      %2114 = vmatpush1.msra.mxu0 0.0
      %2115 = vmatprep.subr.mxu0 0.0
      %2116 = vmatpush1.msra.mxu0 0.0
      %2117 = vmatprep.subr.mxu0 0.0
      %2118 = vmatpush1.msra.mxu0 0.0
      %2119 = vmatprep.subr.mxu0 0.0
      %2120 = vmatpush1.msra.mxu0 0.0
      %2121 = vmatprep.subr.mxu0 0.0
      %2122 = vmatpush1.msra.mxu0 0.0
      %2123 = vmatprep.subr.mxu0 0.0
      %2124 = vmatpush1.msra.mxu0 0.0
      %2125 = vmatprep.subr.mxu0 0.0
      %2126 = vmatpush1.msra.mxu0 0.0
      %2127 = vmatprep.subr.mxu0 0.0
      %2128 = vmatpush1.msra.mxu0 0.0
      %2129 = vmatprep.subr.mxu0 0.0
      %2130 = vmatpush1.msra.mxu0 0.0
      %2131 = vmatprep.subr.mxu0 0.0
      %2132 = vmatpush1.msra.mxu0 0.0
      %2133 = vmatprep.subr.mxu0 0.0
      %2134 = vmatpush1.msra.mxu0 0.0
      %2135 = vmatprep.subr.mxu0 0.0
      %2136 = vmatpush1.msra.mxu0 0.0
      %2137 = vmatprep.subr.mxu0 0.0
      %2138 = vmatpush1.msra.mxu0 0.0
      %2139 = vmatprep.subr.mxu0 0.0
      %2140 = vmatpush1.msra.mxu0 0.0
      %2141 = vmatprep.subr.mxu0 0.0
      %2142 = vmatpush1.msra.mxu0 0.0
      %2143 = vmatprep.mubr.f32.mxu0 0.0
      %2144 = vmatmul.mubr.f32.gmra.mrb[0].mxu0 %v2055
      %v2145 = vpop.f32.mrb[0].mxu0
      %v2146 = vadd.f32 0.0, %v2145
      %v2147 = vpop.f32.mrb[0].mxu0
      %2148 = vmatprep.mubr.f32.mxu0 0.0
      %2149 = vmatmul.mubr.f32.gmra.mrb[0].mxu0 %v2060
      %v2150 = vpop.f32.mrb[0].mxu0
      %v2151 = vadd.f32 0.0, %v2150
      %v2152 = vpop.f32.mrb[0].mxu0
      %2153 = vdwg.mxu0
      %v2154 = vmul.f32 %v2146, %v2146
      %v2155 = vmul.f32 %v2151, %v2151
      %v2156 = vadd.f32 %v2154, %v2155
      %2157 = vadd.xlane.f32.xlu0 %v2156
      %v2158 = vpop.xlane.xlu0 %2157
      %v2159 = vrot.slane %v2158, 4
      %v2160 = vadd.f32 %v2158, %v2159
      %v2161 = vrot.slane %v2160, 2
      %v2162 = vadd.f32 %v2160, %v2161
      %v2163 = vrot.slane %v2162, 1
      %v2164 = vadd.f32 %v2162, %v2163
      %s2165 = vtos %v2164
      %v2166 = vstv %s2165
      %v2167 = vrcp.pop %v1765
      %v2168 = vmul.f32 %v2166, %v2167
      %v2170 = vlaneseq
      %v2171 = vshrl.u32 %v2170, 7
      %v2172 = vsub.s32 0, %v2171
      %v2173 = vrot.slane %v2168, %v2172
      %2174 = vset.pattern.permute.xlu0 0
      %2175 = vperm.xlu0 %2174, %v2173
      %v2176 = vpop.permute.xlu0 %2175
      %v2178 = vmul.f32 %v2176, %v1763
      %v2179 = vmul.f32 %v2176, %v1764
      %v2180 = vadd.f32 %v2146, %v2178
      %v2181 = vadd.f32 %v2151, %v2179
      %2182 = vst [vmem:[#allocation2] sm:$0xff] %v2180
      %2183 = vst [vmem:[#allocation2 + $0x8] sm:$0xff] %v2181
      %2184 = vst.msk [vmem:[#allocation3] sm:$0x1] %vm430, %v2166
      %v2185 = vmul.f32 %v1976, %v1976
      %v2186 = vmul.f32 %v1977, %v1977
      %v2187 = vadd.f32 %v2185, %v2186
      %2188 = vadd.xlane.f32.xlu0 %v2187
      %v2189 = vpop.xlane.xlu0 %2188
      %v2190 = vrot.slane %v2189, 4
      %v2191 = vadd.f32 %v2189, %v2190
      %v2192 = vrot.slane %v2191, 2
      %v2193 = vadd.f32 %v2191, %v2192
      %v2194 = vrot.slane %v2193, 1
      %v2195 = vadd.f32 %v2193, %v2194
      %s2196 = vtos %v2195
      %p2197 = scmp.lt.f32.partialorder %s2196, %s224
      %s2198 = scalar_select %p2197, 1, 0
      %2199 = sst [smem:[%s239]] %s2198
    $region41: #{graph_cgls_forward.1} parent=1 // pred_fallthru
      _
    %s2200 = sld [smem:[#allocation4]]
    %p2201 = scmp.eq.s32.totalorder %s2200, 0
    // Predicated region
    $region42: #{graph_cgls_forward.1} parent=1 // pred_check
      %p2202 = pneg %p2201
    $region43: #{graph_cgls_forward.1} parent=1 // pred_check_branch
      %2204 = sbr.rel (%p2202) target = $region45
    $region44: #{graph_cgls_forward.1} parent=1 // pred_region
      %v2205 = vld [vmem:[#allocation2] sm:$0xff]
      %v2206 = vld [vmem:[#allocation2 + $0x8] sm:$0xff]
      %v2207 = vld [vmem:[#allocation3] sm:$0x1]
      %v2208 = vld [vmem:[%s0] sm:$0xff]
      %v2209 = vld [vmem:[%s0 + $0x8] sm:$0xff]
      %v2211 = vsel %vm35, %v2208, 0
      %v2214 = vsel %vm35, %v2209, 0
      %2216 = vmatprep.subr.mxu0 0.0
      %2217 = vmatpush1.msra.mxu0 %v2205
      %2218 = vmatprep.subr.mxu0 0.0
      %2219 = vmatpush1.msra.mxu0 %v2206
      %2220 = vmatprep.subr.mxu0 0.0
      %2221 = vmatpush1.msra.mxu0 0.0
      %2222 = vmatprep.subr.mxu0 0.0
      %2223 = vmatpush1.msra.mxu0 0.0
      %2224 = vmatprep.subr.mxu0 0.0
      %2225 = vmatpush1.msra.mxu0 0.0
      %2226 = vmatprep.subr.mxu0 0.0
      %2227 = vmatpush1.msra.mxu0 0.0
      %2228 = vmatprep.subr.mxu0 0.0
      %2229 = vmatpush1.msra.mxu0 0.0
      %2230 = vmatprep.subr.mxu0 0.0
      %2231 = vmatpush1.msra.mxu0 0.0
      %2232 = vmatprep.subr.mxu0 0.0
      %2233 = vmatpush1.msra.mxu0 0.0
      %2234 = vmatprep.subr.mxu0 0.0
      %2235 = vmatpush1.msra.mxu0 0.0
      %2236 = vmatprep.subr.mxu0 0.0
      %2237 = vmatpush1.msra.mxu0 0.0
      %2238 = vmatprep.subr.mxu0 0.0
      %2239 = vmatpush1.msra.mxu0 0.0
      %2240 = vmatprep.subr.mxu0 0.0
      %2241 = vmatpush1.msra.mxu0 0.0
      %2242 = vmatprep.subr.mxu0 0.0
      %2243 = vmatpush1.msra.mxu0 0.0
      %2244 = vmatprep.subr.mxu0 0.0
      %2245 = vmatpush1.msra.mxu0 0.0
      %2246 = vmatprep.subr.mxu0 0.0
      %2247 = vmatpush1.msra.mxu0 0.0
      %2248 = vmatprep.subr.mxu0 0.0
      %2249 = vmatpush1.msra.mxu0 0.0
      %2250 = vmatprep.subr.mxu0 0.0
      %2251 = vmatpush1.msra.mxu0 0.0
      %2252 = vmatprep.subr.mxu0 0.0
      %2253 = vmatpush1.msra.mxu0 0.0
      %2254 = vmatprep.subr.mxu0 0.0
      %2255 = vmatpush1.msra.mxu0 0.0
      %2256 = vmatprep.subr.mxu0 0.0
      %2257 = vmatpush1.msra.mxu0 0.0
      %2258 = vmatprep.subr.mxu0 0.0
      %2259 = vmatpush1.msra.mxu0 0.0
      %2260 = vmatprep.subr.mxu0 0.0
      %2261 = vmatpush1.msra.mxu0 0.0
      %2262 = vmatprep.subr.mxu0 0.0
      %2263 = vmatpush1.msra.mxu0 0.0
      %2264 = vmatprep.subr.mxu0 0.0
      %2265 = vmatpush1.msra.mxu0 0.0
      %2266 = vmatprep.subr.mxu0 0.0
      %2267 = vmatpush1.msra.mxu0 0.0
      %2268 = vmatprep.subr.mxu0 0.0
      %2269 = vmatpush1.msra.mxu0 0.0
      %2270 = vmatprep.subr.mxu0 0.0
      %2271 = vmatpush1.msra.mxu0 0.0
      %2272 = vmatprep.subr.mxu0 0.0
      %2273 = vmatpush1.msra.mxu0 0.0
      %2274 = vmatprep.subr.mxu0 0.0
      %2275 = vmatpush1.msra.mxu0 0.0
      %2276 = vmatprep.subr.mxu0 0.0
      %2277 = vmatpush1.msra.mxu0 0.0
      %2278 = vmatprep.subr.mxu0 0.0
      %2279 = vmatpush1.msra.mxu0 0.0
      %2280 = vmatprep.mubr.f32.mxu0 0.0
      %2281 = vmatmul.mubr.f32.gmra.mrb[0].mxu0 %v2211
      %v2282 = vpop.f32.mrb[0].mxu0
      %v2283 = vadd.f32 0.0, %v2282
      %v2284 = vpop.f32.mrb[0].mxu0
      %2285 = vmatprep.mubr.f32.mxu0 0.0
      %2286 = vmatmul.mubr.f32.gmra.mrb[0].mxu0 %v2214
      %v2287 = vpop.f32.mrb[0].mxu0
      %v2288 = vadd.f32 0.0, %v2287
      %v2289 = vpop.f32.mrb[0].mxu0
      %2290 = vdwg.mxu0
      %v2291 = vld [vmem:[%s2] sm:$0xff]
      %v2292 = vld [vmem:[%s2 + $0x8] sm:$0xff]
      %v2293 = vld [vmem:[%s2 + $0x10] sm:$0xff]
      %v2294 = vld [vmem:[%s2 + $0x18] sm:$0xff]
      %v2295 = vld [vmem:[%s2 + $0x20] sm:$0xff]
      %v2296 = vld [vmem:[%s2 + $0x28] sm:$0xff]
      %v2297 = vld [vmem:[%s2 + $0x30] sm:$0xff]
      %v2298 = vld [vmem:[%s2 + $0x38] sm:$0xff]
      %v2299 = vld [vmem:[%s2 + $0x40] sm:$0xff]
      %v2300 = vld [vmem:[%s2 + $0x48] sm:$0xff]
      %v2301 = vld [vmem:[%s2 + $0x50] sm:$0xff]
      %v2302 = vld [vmem:[%s2 + $0x58] sm:$0xff]
      %v2303 = vld [vmem:[%s2 + $0x60] sm:$0xff]
      %v2304 = vld [vmem:[%s2 + $0x68] sm:$0xff]
      %v2305 = vld [vmem:[%s2 + $0x70] sm:$0xff]
      %v2306 = vld [vmem:[%s2 + $0x78] sm:$0xff]
      %2307 = vmatprep.subr.mxu0 0.0
      %2308 = vmatpush1.msra.mxu0 %v2291
      %2309 = vmatprep.subr.mxu0 0.0
      %2310 = vmatpush1.msra.mxu0 %v2292
      %2311 = vmatprep.subr.mxu0 0.0
      %2312 = vmatpush1.msra.mxu0 %v2293
      %2313 = vmatprep.subr.mxu0 0.0
      %2314 = vmatpush1.msra.mxu0 %v2294
      %2315 = vmatprep.subr.mxu0 0.0
      %2316 = vmatpush1.msra.mxu0 %v2295
      %2317 = vmatprep.subr.mxu0 0.0
      %2318 = vmatpush1.msra.mxu0 %v2296
      %2319 = vmatprep.subr.mxu0 0.0
      %2320 = vmatpush1.msra.mxu0 %v2297
      %2321 = vmatprep.subr.mxu0 0.0
      %2322 = vmatpush1.msra.mxu0 %v2298
      %2323 = vmatprep.subr.mxu0 0.0
      %2324 = vmatpush1.msra.mxu0 %v2299
      %2325 = vmatprep.subr.mxu0 0.0
      %2326 = vmatpush1.msra.mxu0 %v2300
      %2327 = vmatprep.subr.mxu0 0.0
      %2328 = vmatpush1.msra.mxu0 %v2301
      %2329 = vmatprep.subr.mxu0 0.0
      %2330 = vmatpush1.msra.mxu0 %v2302
      %2331 = vmatprep.subr.mxu0 0.0
      %2332 = vmatpush1.msra.mxu0 %v2303
      %2333 = vmatprep.subr.mxu0 0.0
      %2334 = vmatpush1.msra.mxu0 %v2304
      %2335 = vmatprep.subr.mxu0 0.0
      %2336 = vmatpush1.msra.mxu0 %v2305
      %2337 = vmatprep.subr.mxu0 0.0
      %2338 = vmatpush1.msra.mxu0 %v2306
      %2339 = vmatprep.subr.mxu0 0.0
      %2340 = vmatpush1.msra.mxu0 0.0
      %2341 = vmatprep.subr.mxu0 0.0
      %2342 = vmatpush1.msra.mxu0 0.0
      %2343 = vmatprep.subr.mxu0 0.0
      %2344 = vmatpush1.msra.mxu0 0.0
      %2345 = vmatprep.subr.mxu0 0.0
      %2346 = vmatpush1.msra.mxu0 0.0
      %2347 = vmatprep.subr.mxu0 0.0
      %2348 = vmatpush1.msra.mxu0 0.0
      %2349 = vmatprep.subr.mxu0 0.0
      %2350 = vmatpush1.msra.mxu0 0.0
      %2351 = vmatprep.subr.mxu0 0.0
      %2352 = vmatpush1.msra.mxu0 0.0
      %2353 = vmatprep.subr.mxu0 0.0
      %2354 = vmatpush1.msra.mxu0 0.0
      %2355 = vmatprep.subr.mxu0 0.0
      %2356 = vmatpush1.msra.mxu0 0.0
      %2357 = vmatprep.subr.mxu0 0.0
      %2358 = vmatpush1.msra.mxu0 0.0
      %2359 = vmatprep.subr.mxu0 0.0
      %2360 = vmatpush1.msra.mxu0 0.0
      %2361 = vmatprep.subr.mxu0 0.0
      %2362 = vmatpush1.msra.mxu0 0.0
      %2363 = vmatprep.subr.mxu0 0.0
      %2364 = vmatpush1.msra.mxu0 0.0
      %2365 = vmatprep.subr.mxu0 0.0
      %2366 = vmatpush1.msra.mxu0 0.0
      %2367 = vmatprep.subr.mxu0 0.0
      %2368 = vmatpush1.msra.mxu0 0.0
      %2369 = vmatprep.subr.mxu0 0.0
      %2370 = vmatpush1.msra.mxu0 0.0
      %2371 = vmatprep.mubr.f32.mxu0 0.0
      %2372 = vmatmul.mubr.f32.gmra.mrb[0].mxu0 %v2283
      %v2373 = vpop.f32.mrb[0].mxu0
      %v2374 = vadd.f32 0.0, %v2373
      %v2375 = vpop.f32.mrb[0].mxu0
      %2376 = vmatprep.mubr.f32.mxu0 0.0
      %2377 = vmatmul.mubr.f32.gmra.mrb[0].mxu0 %v2288
      %v2378 = vpop.f32.mrb[0].mxu0
      %v2379 = vadd.f32 0.0, %v2378
      %v2380 = vpop.f32.mrb[0].mxu0
      %2381 = vdwg.mxu0
      %v2382 = vmul.f32 %v2374, %v2374
      %v2383 = vmul.f32 %v2379, %v2379
      %v2384 = vadd.f32 %v2382, %v2383
      %2385 = vadd.xlane.f32.xlu0 %v2384
      %v2386 = vpop.xlane.xlu0 %2385
      %v2387 = vrot.slane %v2386, 4
      %v2388 = vadd.f32 %v2386, %v2387
      %v2389 = vrot.slane %v2388, 2
      %v2390 = vadd.f32 %v2388, %v2389
      %v2391 = vrot.slane %v2390, 1
      %v2392 = vadd.f32 %v2390, %v2391
      %s2393 = vtos %v2392
      %v2394 = vstv %s2393
      %v2395 = vrcp.pop %v2394
      %v2396 = vmul.f32 %v2207, %v2395
      %v2397 = vld [vmem:[#allocation5] sm:$0xff]
      %v2398 = vld [vmem:[#allocation5 + $0x8] sm:$0xff]
      %v2400 = vlaneseq
      %v2401 = vshrl.u32 %v2400, 7
      %v2402 = vsub.s32 0, %v2401
      %v2403 = vrot.slane %v2396, %v2402
      %2404 = vset.pattern.permute.xlu0 0
      %2405 = vperm.xlu0 %2404, %v2403
      %v2406 = vpop.permute.xlu0 %2405
      %v2408 = vmul.f32 %v2406, %v2205
      %v2409 = vmul.f32 %v2406, %v2206
      %v2410 = vadd.f32 %v2397, %v2408
      %v2411 = vadd.f32 %v2398, %v2409
      %2412 = vst [vmem:[#allocation5] sm:$0xff] %v2410
      %2413 = vst [vmem:[#allocation5 + $0x8] sm:$0xff] %v2411
      %v2414 = vld [vmem:[#allocation7] sm:$0xff]
      %v2415 = vld [vmem:[#allocation7 + $0x8] sm:$0xff]
      %v2416 = vmul.f32 %v2406, %v2374
      %v2417 = vmul.f32 %v2406, %v2379
      %v2418 = vsub.f32 %v2414, %v2416
      %v2419 = vsub.f32 %v2415, %v2417
      %2420 = vst [vmem:[#allocation7] sm:$0xff] %v2418
      %2421 = vst [vmem:[#allocation7 + $0x8] sm:$0xff] %v2419
      %v2422 = vld [vmem:[%s1] sm:$0xff]
      %v2423 = vld [vmem:[%s1 + $0x8] sm:$0xff]
      %v2425 = vsel %vm35, %v2422, 0
      %v2428 = vsel %vm35, %v2423, 0
      %2430 = vmatprep.subr.mxu0 0.0
      %2431 = vmatpush1.msra.mxu0 %v2418
      %2432 = vmatprep.subr.mxu0 0.0
      %2433 = vmatpush1.msra.mxu0 %v2419
      %2434 = vmatprep.subr.mxu0 0.0
      %2435 = vmatpush1.msra.mxu0 0.0
      %2436 = vmatprep.subr.mxu0 0.0
      %2437 = vmatpush1.msra.mxu0 0.0
      %2438 = vmatprep.subr.mxu0 0.0
      %2439 = vmatpush1.msra.mxu0 0.0
      %2440 = vmatprep.subr.mxu0 0.0
      %2441 = vmatpush1.msra.mxu0 0.0
      %2442 = vmatprep.subr.mxu0 0.0
      %2443 = vmatpush1.msra.mxu0 0.0
      %2444 = vmatprep.subr.mxu0 0.0
      %2445 = vmatpush1.msra.mxu0 0.0
      %2446 = vmatprep.subr.mxu0 0.0
      %2447 = vmatpush1.msra.mxu0 0.0
      %2448 = vmatprep.subr.mxu0 0.0
      %2449 = vmatpush1.msra.mxu0 0.0
      %2450 = vmatprep.subr.mxu0 0.0
      %2451 = vmatpush1.msra.mxu0 0.0
      %2452 = vmatprep.subr.mxu0 0.0
      %2453 = vmatpush1.msra.mxu0 0.0
      %2454 = vmatprep.subr.mxu0 0.0
      %2455 = vmatpush1.msra.mxu0 0.0
      %2456 = vmatprep.subr.mxu0 0.0
      %2457 = vmatpush1.msra.mxu0 0.0
      %2458 = vmatprep.subr.mxu0 0.0
      %2459 = vmatpush1.msra.mxu0 0.0
      %2460 = vmatprep.subr.mxu0 0.0
      %2461 = vmatpush1.msra.mxu0 0.0
      %2462 = vmatprep.subr.mxu0 0.0
      %2463 = vmatpush1.msra.mxu0 0.0
      %2464 = vmatprep.subr.mxu0 0.0
      %2465 = vmatpush1.msra.mxu0 0.0
      %2466 = vmatprep.subr.mxu0 0.0
      %2467 = vmatpush1.msra.mxu0 0.0
      %2468 = vmatprep.subr.mxu0 0.0
      %2469 = vmatpush1.msra.mxu0 0.0
      %2470 = vmatprep.subr.mxu0 0.0
      %2471 = vmatpush1.msra.mxu0 0.0
      %2472 = vmatprep.subr.mxu0 0.0
      %2473 = vmatpush1.msra.mxu0 0.0
      %2474 = vmatprep.subr.mxu0 0.0
      %2475 = vmatpush1.msra.mxu0 0.0
      %2476 = vmatprep.subr.mxu0 0.0
      %2477 = vmatpush1.msra.mxu0 0.0
      %2478 = vmatprep.subr.mxu0 0.0
      %2479 = vmatpush1.msra.mxu0 0.0
      %2480 = vmatprep.subr.mxu0 0.0
      %2481 = vmatpush1.msra.mxu0 0.0
      %2482 = vmatprep.subr.mxu0 0.0
      %2483 = vmatpush1.msra.mxu0 0.0
      %2484 = vmatprep.subr.mxu0 0.0
      %2485 = vmatpush1.msra.mxu0 0.0
      %2486 = vmatprep.subr.mxu0 0.0
      %2487 = vmatpush1.msra.mxu0 0.0
      %2488 = vmatprep.subr.mxu0 0.0
      %2489 = vmatpush1.msra.mxu0 0.0
      %2490 = vmatprep.subr.mxu0 0.0
      %2491 = vmatpush1.msra.mxu0 0.0
      %2492 = vmatprep.subr.mxu0 0.0
      %2493 = vmatpush1.msra.mxu0 0.0
      %2494 = vmatprep.mubr.f32.mxu0 0.0
      %2495 = vmatmul.mubr.f32.gmra.mrb[0].mxu0 %v2425
      %v2496 = vpop.f32.mrb[0].mxu0
      %v2497 = vadd.f32 0.0, %v2496
      %v2498 = vpop.f32.mrb[0].mxu0
      %2499 = vmatprep.mubr.f32.mxu0 0.0
      %2500 = vmatmul.mubr.f32.gmra.mrb[0].mxu0 %v2428
      %v2501 = vpop.f32.mrb[0].mxu0
      %v2502 = vadd.f32 0.0, %v2501
      %v2503 = vpop.f32.mrb[0].mxu0
      %2504 = vdwg.mxu0
      %v2505 = vld [vmem:[%s3] sm:$0xff]
      %v2506 = vld [vmem:[%s3 + $0x8] sm:$0xff]
      %v2507 = vld [vmem:[%s3 + $0x10] sm:$0xff]
      %v2508 = vld [vmem:[%s3 + $0x18] sm:$0xff]
      %v2509 = vld [vmem:[%s3 + $0x20] sm:$0xff]
      %v2510 = vld [vmem:[%s3 + $0x28] sm:$0xff]
      %v2511 = vld [vmem:[%s3 + $0x30] sm:$0xff]
      %v2512 = vld [vmem:[%s3 + $0x38] sm:$0xff]
      %v2513 = vld [vmem:[%s3 + $0x40] sm:$0xff]
      %v2514 = vld [vmem:[%s3 + $0x48] sm:$0xff]
      %v2515 = vld [vmem:[%s3 + $0x50] sm:$0xff]
      %v2516 = vld [vmem:[%s3 + $0x58] sm:$0xff]
      %v2517 = vld [vmem:[%s3 + $0x60] sm:$0xff]
      %v2518 = vld [vmem:[%s3 + $0x68] sm:$0xff]
      %v2519 = vld [vmem:[%s3 + $0x70] sm:$0xff]
      %v2520 = vld [vmem:[%s3 + $0x78] sm:$0xff]
      %2521 = vmatprep.subr.mxu0 0.0
      %2522 = vmatpush1.msra.mxu0 %v2505
      %2523 = vmatprep.subr.mxu0 0.0
      %2524 = vmatpush1.msra.mxu0 %v2506
      %2525 = vmatprep.subr.mxu0 0.0
      %2526 = vmatpush1.msra.mxu0 %v2507
      %2527 = vmatprep.subr.mxu0 0.0
      %2528 = vmatpush1.msra.mxu0 %v2508
      %2529 = vmatprep.subr.mxu0 0.0
      %2530 = vmatpush1.msra.mxu0 %v2509
      %2531 = vmatprep.subr.mxu0 0.0
      %2532 = vmatpush1.msra.mxu0 %v2510
      %2533 = vmatprep.subr.mxu0 0.0
      %2534 = vmatpush1.msra.mxu0 %v2511
      %2535 = vmatprep.subr.mxu0 0.0
      %2536 = vmatpush1.msra.mxu0 %v2512
      %2537 = vmatprep.subr.mxu0 0.0
      %2538 = vmatpush1.msra.mxu0 %v2513
      %2539 = vmatprep.subr.mxu0 0.0
      %2540 = vmatpush1.msra.mxu0 %v2514
      %2541 = vmatprep.subr.mxu0 0.0
      %2542 = vmatpush1.msra.mxu0 %v2515
      %2543 = vmatprep.subr.mxu0 0.0
      %2544 = vmatpush1.msra.mxu0 %v2516
      %2545 = vmatprep.subr.mxu0 0.0
      %2546 = vmatpush1.msra.mxu0 %v2517
      %2547 = vmatprep.subr.mxu0 0.0
      %2548 = vmatpush1.msra.mxu0 %v2518
      %2549 = vmatprep.subr.mxu0 0.0
      %2550 = vmatpush1.msra.mxu0 %v2519
      %2551 = vmatprep.subr.mxu0 0.0
      %2552 = vmatpush1.msra.mxu0 %v2520
      %2553 = vmatprep.subr.mxu0 0.0
      %2554 = vmatpush1.msra.mxu0 0.0
      %2555 = vmatprep.subr.mxu0 0.0
      %2556 = vmatpush1.msra.mxu0 0.0
      %2557 = vmatprep.subr.mxu0 0.0
      %2558 = vmatpush1.msra.mxu0 0.0
      %2559 = vmatprep.subr.mxu0 0.0
      %2560 = vmatpush1.msra.mxu0 0.0
      %2561 = vmatprep.subr.mxu0 0.0
      %2562 = vmatpush1.msra.mxu0 0.0
      %2563 = vmatprep.subr.mxu0 0.0
      %2564 = vmatpush1.msra.mxu0 0.0
      %2565 = vmatprep.subr.mxu0 0.0
      %2566 = vmatpush1.msra.mxu0 0.0
      %2567 = vmatprep.subr.mxu0 0.0
      %2568 = vmatpush1.msra.mxu0 0.0
      %2569 = vmatprep.subr.mxu0 0.0
      %2570 = vmatpush1.msra.mxu0 0.0
      %2571 = vmatprep.subr.mxu0 0.0
      %2572 = vmatpush1.msra.mxu0 0.0
      %2573 = vmatprep.subr.mxu0 0.0
      %2574 = vmatpush1.msra.mxu0 0.0
      %2575 = vmatprep.subr.mxu0 0.0
      %2576 = vmatpush1.msra.mxu0 0.0
      %2577 = vmatprep.subr.mxu0 0.0
      %2578 = vmatpush1.msra.mxu0 0.0
      %2579 = vmatprep.subr.mxu0 0.0
      %2580 = vmatpush1.msra.mxu0 0.0
      %2581 = vmatprep.subr.mxu0 0.0
      %2582 = vmatpush1.msra.mxu0 0.0
      %2583 = vmatprep.subr.mxu0 0.0
      %2584 = vmatpush1.msra.mxu0 0.0
      %2585 = vmatprep.mubr.f32.mxu0 0.0
      %2586 = vmatmul.mubr.f32.gmra.mrb[0].mxu0 %v2497
      %v2587 = vpop.f32.mrb[0].mxu0
      %v2588 = vadd.f32 0.0, %v2587
      %v2589 = vpop.f32.mrb[0].mxu0
      %2590 = vmatprep.mubr.f32.mxu0 0.0
      %2591 = vmatmul.mubr.f32.gmra.mrb[0].mxu0 %v2502
      %v2592 = vpop.f32.mrb[0].mxu0
      %v2593 = vadd.f32 0.0, %v2592
      %v2594 = vpop.f32.mrb[0].mxu0
      %2595 = vdwg.mxu0
      %v2596 = vmul.f32 %v2588, %v2588
      %v2597 = vmul.f32 %v2593, %v2593
      %v2598 = vadd.f32 %v2596, %v2597
      %2599 = vadd.xlane.f32.xlu0 %v2598
      %v2600 = vpop.xlane.xlu0 %2599
      %v2601 = vrot.slane %v2600, 4
      %v2602 = vadd.f32 %v2600, %v2601
      %v2603 = vrot.slane %v2602, 2
      %v2604 = vadd.f32 %v2602, %v2603
      %v2605 = vrot.slane %v2604, 1
      %v2606 = vadd.f32 %v2604, %v2605
      %s2607 = vtos %v2606
      %v2608 = vstv %s2607
      %v2609 = vrcp.pop %v2207
      %v2610 = vmul.f32 %v2608, %v2609
      %v2612 = vlaneseq
      %v2613 = vshrl.u32 %v2612, 7
      %v2614 = vsub.s32 0, %v2613
      %v2615 = vrot.slane %v2610, %v2614
      %2616 = vset.pattern.permute.xlu0 0
      %2617 = vperm.xlu0 %2616, %v2615
      %v2618 = vpop.permute.xlu0 %2617
      %v2620 = vmul.f32 %v2618, %v2205
      %v2621 = vmul.f32 %v2618, %v2206
      %v2622 = vadd.f32 %v2588, %v2620
      %v2623 = vadd.f32 %v2593, %v2621
      %2624 = vst [vmem:[#allocation2] sm:$0xff] %v2622
      %2625 = vst [vmem:[#allocation2 + $0x8] sm:$0xff] %v2623
      %2626 = vst.msk [vmem:[#allocation3] sm:$0x1] %vm430, %v2608
      %v2627 = vmul.f32 %v2418, %v2418
      %v2628 = vmul.f32 %v2419, %v2419
      %v2629 = vadd.f32 %v2627, %v2628
      %2630 = vadd.xlane.f32.xlu0 %v2629
      %v2631 = vpop.xlane.xlu0 %2630
      %v2632 = vrot.slane %v2631, 4
      %v2633 = vadd.f32 %v2631, %v2632
      %v2634 = vrot.slane %v2633, 2
      %v2635 = vadd.f32 %v2633, %v2634
      %v2636 = vrot.slane %v2635, 1
      %v2637 = vadd.f32 %v2635, %v2636
      %s2638 = vtos %v2637
      %p2639 = scmp.lt.f32.partialorder %s2638, %s224
      %s2640 = scalar_select %p2639, 1, 0
      %2641 = sst [smem:[%s239]] %s2640
    $region45: #{graph_cgls_forward.1} parent=1 // pred_fallthru
      _
    %s2642 = sld [smem:[#allocation4]]
    %p2643 = scmp.eq.s32.totalorder %s2642, 0
    // Predicated region
    $region46: #{graph_cgls_forward.1} parent=1 // pred_check
      %p2644 = pneg %p2643
    $region47: #{graph_cgls_forward.1} parent=1 // pred_check_branch
      %2646 = sbr.rel (%p2644) target = $region49
    $region48: #{graph_cgls_forward.1} parent=1 // pred_region
      %v2647 = vld [vmem:[#allocation2] sm:$0xff]
      %v2648 = vld [vmem:[#allocation2 + $0x8] sm:$0xff]
      %v2649 = vld [vmem:[#allocation3] sm:$0x1]
      %v2650 = vld [vmem:[%s0] sm:$0xff]
      %v2651 = vld [vmem:[%s0 + $0x8] sm:$0xff]
      %v2653 = vsel %vm35, %v2650, 0
      %v2656 = vsel %vm35, %v2651, 0
      %2658 = vmatprep.subr.mxu0 0.0
      %2659 = vmatpush1.msra.mxu0 %v2647
      %2660 = vmatprep.subr.mxu0 0.0
      %2661 = vmatpush1.msra.mxu0 %v2648
      %2662 = vmatprep.subr.mxu0 0.0
      %2663 = vmatpush1.msra.mxu0 0.0
      %2664 = vmatprep.subr.mxu0 0.0
      %2665 = vmatpush1.msra.mxu0 0.0
      %2666 = vmatprep.subr.mxu0 0.0
      %2667 = vmatpush1.msra.mxu0 0.0
      %2668 = vmatprep.subr.mxu0 0.0
      %2669 = vmatpush1.msra.mxu0 0.0
      %2670 = vmatprep.subr.mxu0 0.0
      %2671 = vmatpush1.msra.mxu0 0.0
      %2672 = vmatprep.subr.mxu0 0.0
      %2673 = vmatpush1.msra.mxu0 0.0
      %2674 = vmatprep.subr.mxu0 0.0
      %2675 = vmatpush1.msra.mxu0 0.0
      %2676 = vmatprep.subr.mxu0 0.0
      %2677 = vmatpush1.msra.mxu0 0.0
      %2678 = vmatprep.subr.mxu0 0.0
      %2679 = vmatpush1.msra.mxu0 0.0
      %2680 = vmatprep.subr.mxu0 0.0
      %2681 = vmatpush1.msra.mxu0 0.0
      %2682 = vmatprep.subr.mxu0 0.0
      %2683 = vmatpush1.msra.mxu0 0.0
      %2684 = vmatprep.subr.mxu0 0.0
      %2685 = vmatpush1.msra.mxu0 0.0
      %2686 = vmatprep.subr.mxu0 0.0
      %2687 = vmatpush1.msra.mxu0 0.0
      %2688 = vmatprep.subr.mxu0 0.0
      %2689 = vmatpush1.msra.mxu0 0.0
      %2690 = vmatprep.subr.mxu0 0.0
      %2691 = vmatpush1.msra.mxu0 0.0
      %2692 = vmatprep.subr.mxu0 0.0
      %2693 = vmatpush1.msra.mxu0 0.0
      %2694 = vmatprep.subr.mxu0 0.0
      %2695 = vmatpush1.msra.mxu0 0.0
      %2696 = vmatprep.subr.mxu0 0.0
      %2697 = vmatpush1.msra.mxu0 0.0
      %2698 = vmatprep.subr.mxu0 0.0
      %2699 = vmatpush1.msra.mxu0 0.0
      %2700 = vmatprep.subr.mxu0 0.0
      %2701 = vmatpush1.msra.mxu0 0.0
      %2702 = vmatprep.subr.mxu0 0.0
      %2703 = vmatpush1.msra.mxu0 0.0
      %2704 = vmatprep.subr.mxu0 0.0
      %2705 = vmatpush1.msra.mxu0 0.0
      %2706 = vmatprep.subr.mxu0 0.0
      %2707 = vmatpush1.msra.mxu0 0.0
      %2708 = vmatprep.subr.mxu0 0.0
      %2709 = vmatpush1.msra.mxu0 0.0
      %2710 = vmatprep.subr.mxu0 0.0
      %2711 = vmatpush1.msra.mxu0 0.0
      %2712 = vmatprep.subr.mxu0 0.0
      %2713 = vmatpush1.msra.mxu0 0.0
      %2714 = vmatprep.subr.mxu0 0.0
      %2715 = vmatpush1.msra.mxu0 0.0
      %2716 = vmatprep.subr.mxu0 0.0
      %2717 = vmatpush1.msra.mxu0 0.0
      %2718 = vmatprep.subr.mxu0 0.0
      %2719 = vmatpush1.msra.mxu0 0.0
      %2720 = vmatprep.subr.mxu0 0.0
      %2721 = vmatpush1.msra.mxu0 0.0
      %2722 = vmatprep.mubr.f32.mxu0 0.0
      %2723 = vmatmul.mubr.f32.gmra.mrb[0].mxu0 %v2653
      %v2724 = vpop.f32.mrb[0].mxu0
      %v2725 = vadd.f32 0.0, %v2724
      %v2726 = vpop.f32.mrb[0].mxu0
      %2727 = vmatprep.mubr.f32.mxu0 0.0
      %2728 = vmatmul.mubr.f32.gmra.mrb[0].mxu0 %v2656
      %v2729 = vpop.f32.mrb[0].mxu0
      %v2730 = vadd.f32 0.0, %v2729
      %v2731 = vpop.f32.mrb[0].mxu0
      %2732 = vdwg.mxu0
      %v2733 = vld [vmem:[%s2] sm:$0xff]
      %v2734 = vld [vmem:[%s2 + $0x8] sm:$0xff]
      %v2735 = vld [vmem:[%s2 + $0x10] sm:$0xff]
      %v2736 = vld [vmem:[%s2 + $0x18] sm:$0xff]
      %v2737 = vld [vmem:[%s2 + $0x20] sm:$0xff]
      %v2738 = vld [vmem:[%s2 + $0x28] sm:$0xff]
      %v2739 = vld [vmem:[%s2 + $0x30] sm:$0xff]
      %v2740 = vld [vmem:[%s2 + $0x38] sm:$0xff]
      %v2741 = vld [vmem:[%s2 + $0x40] sm:$0xff]
      %v2742 = vld [vmem:[%s2 + $0x48] sm:$0xff]
      %v2743 = vld [vmem:[%s2 + $0x50] sm:$0xff]
      %v2744 = vld [vmem:[%s2 + $0x58] sm:$0xff]
      %v2745 = vld [vmem:[%s2 + $0x60] sm:$0xff]
      %v2746 = vld [vmem:[%s2 + $0x68] sm:$0xff]
      %v2747 = vld [vmem:[%s2 + $0x70] sm:$0xff]
      %v2748 = vld [vmem:[%s2 + $0x78] sm:$0xff]
      %2749 = vmatprep.subr.mxu0 0.0
      %2750 = vmatpush1.msra.mxu0 %v2733
      %2751 = vmatprep.subr.mxu0 0.0
      %2752 = vmatpush1.msra.mxu0 %v2734
      %2753 = vmatprep.subr.mxu0 0.0
      %2754 = vmatpush1.msra.mxu0 %v2735
      %2755 = vmatprep.subr.mxu0 0.0
      %2756 = vmatpush1.msra.mxu0 %v2736
      %2757 = vmatprep.subr.mxu0 0.0
      %2758 = vmatpush1.msra.mxu0 %v2737
      %2759 = vmatprep.subr.mxu0 0.0
      %2760 = vmatpush1.msra.mxu0 %v2738
      %2761 = vmatprep.subr.mxu0 0.0
      %2762 = vmatpush1.msra.mxu0 %v2739
      %2763 = vmatprep.subr.mxu0 0.0
      %2764 = vmatpush1.msra.mxu0 %v2740
      %2765 = vmatprep.subr.mxu0 0.0
      %2766 = vmatpush1.msra.mxu0 %v2741
      %2767 = vmatprep.subr.mxu0 0.0
      %2768 = vmatpush1.msra.mxu0 %v2742
      %2769 = vmatprep.subr.mxu0 0.0
      %2770 = vmatpush1.msra.mxu0 %v2743
      %2771 = vmatprep.subr.mxu0 0.0
      %2772 = vmatpush1.msra.mxu0 %v2744
      %2773 = vmatprep.subr.mxu0 0.0
      %2774 = vmatpush1.msra.mxu0 %v2745
      %2775 = vmatprep.subr.mxu0 0.0
      %2776 = vmatpush1.msra.mxu0 %v2746
      %2777 = vmatprep.subr.mxu0 0.0
      %2778 = vmatpush1.msra.mxu0 %v2747
      %2779 = vmatprep.subr.mxu0 0.0
      %2780 = vmatpush1.msra.mxu0 %v2748
      %2781 = vmatprep.subr.mxu0 0.0
      %2782 = vmatpush1.msra.mxu0 0.0
      %2783 = vmatprep.subr.mxu0 0.0
      %2784 = vmatpush1.msra.mxu0 0.0
      %2785 = vmatprep.subr.mxu0 0.0
      %2786 = vmatpush1.msra.mxu0 0.0
      %2787 = vmatprep.subr.mxu0 0.0
      %2788 = vmatpush1.msra.mxu0 0.0
      %2789 = vmatprep.subr.mxu0 0.0
      %2790 = vmatpush1.msra.mxu0 0.0
      %2791 = vmatprep.subr.mxu0 0.0
      %2792 = vmatpush1.msra.mxu0 0.0
      %2793 = vmatprep.subr.mxu0 0.0
      %2794 = vmatpush1.msra.mxu0 0.0
      %2795 = vmatprep.subr.mxu0 0.0
      %2796 = vmatpush1.msra.mxu0 0.0
      %2797 = vmatprep.subr.mxu0 0.0
      %2798 = vmatpush1.msra.mxu0 0.0
      %2799 = vmatprep.subr.mxu0 0.0
      %2800 = vmatpush1.msra.mxu0 0.0
      %2801 = vmatprep.subr.mxu0 0.0
      %2802 = vmatpush1.msra.mxu0 0.0
      %2803 = vmatprep.subr.mxu0 0.0
      %2804 = vmatpush1.msra.mxu0 0.0
      %2805 = vmatprep.subr.mxu0 0.0
      %2806 = vmatpush1.msra.mxu0 0.0
      %2807 = vmatprep.subr.mxu0 0.0
      %2808 = vmatpush1.msra.mxu0 0.0
      %2809 = vmatprep.subr.mxu0 0.0
      %2810 = vmatpush1.msra.mxu0 0.0
      %2811 = vmatprep.subr.mxu0 0.0
      %2812 = vmatpush1.msra.mxu0 0.0
      %2813 = vmatprep.mubr.f32.mxu0 0.0
      %2814 = vmatmul.mubr.f32.gmra.mrb[0].mxu0 %v2725
      %v2815 = vpop.f32.mrb[0].mxu0
      %v2816 = vadd.f32 0.0, %v2815
      %v2817 = vpop.f32.mrb[0].mxu0
      %2818 = vmatprep.mubr.f32.mxu0 0.0
      %2819 = vmatmul.mubr.f32.gmra.mrb[0].mxu0 %v2730
      %v2820 = vpop.f32.mrb[0].mxu0
      %v2821 = vadd.f32 0.0, %v2820
      %v2822 = vpop.f32.mrb[0].mxu0
      %2823 = vdwg.mxu0
      %v2824 = vmul.f32 %v2816, %v2816
      %v2825 = vmul.f32 %v2821, %v2821
      %v2826 = vadd.f32 %v2824, %v2825
      %2827 = vadd.xlane.f32.xlu0 %v2826
      %v2828 = vpop.xlane.xlu0 %2827
      %v2829 = vrot.slane %v2828, 4
      %v2830 = vadd.f32 %v2828, %v2829
      %v2831 = vrot.slane %v2830, 2
      %v2832 = vadd.f32 %v2830, %v2831
      %v2833 = vrot.slane %v2832, 1
      %v2834 = vadd.f32 %v2832, %v2833
      %s2835 = vtos %v2834
      %v2836 = vstv %s2835
      %v2837 = vrcp.pop %v2836
      %v2838 = vmul.f32 %v2649, %v2837
      %v2839 = vld [vmem:[#allocation5] sm:$0xff]
      %v2840 = vld [vmem:[#allocation5 + $0x8] sm:$0xff]
      %v2842 = vlaneseq
      %v2843 = vshrl.u32 %v2842, 7
      %v2844 = vsub.s32 0, %v2843
      %v2845 = vrot.slane %v2838, %v2844
      %2846 = vset.pattern.permute.xlu0 0
      %2847 = vperm.xlu0 %2846, %v2845
      %v2848 = vpop.permute.xlu0 %2847
      %v2850 = vmul.f32 %v2848, %v2647
      %v2851 = vmul.f32 %v2848, %v2648
      %v2852 = vadd.f32 %v2839, %v2850
      %v2853 = vadd.f32 %v2840, %v2851
      %2854 = vst [vmem:[#allocation5] sm:$0xff] %v2852
      %2855 = vst [vmem:[#allocation5 + $0x8] sm:$0xff] %v2853
      %v2856 = vld [vmem:[#allocation7] sm:$0xff]
      %v2857 = vld [vmem:[#allocation7 + $0x8] sm:$0xff]
      %v2858 = vmul.f32 %v2848, %v2816
      %v2859 = vmul.f32 %v2848, %v2821
      %v2860 = vsub.f32 %v2856, %v2858
      %v2861 = vsub.f32 %v2857, %v2859
      %2862 = vst [vmem:[#allocation7] sm:$0xff] %v2860
      %2863 = vst [vmem:[#allocation7 + $0x8] sm:$0xff] %v2861
      %v2864 = vld [vmem:[%s1] sm:$0xff]
      %v2865 = vld [vmem:[%s1 + $0x8] sm:$0xff]
      %v2867 = vsel %vm35, %v2864, 0
      %v2870 = vsel %vm35, %v2865, 0
      %2872 = vmatprep.subr.mxu0 0.0
      %2873 = vmatpush1.msra.mxu0 %v2860
      %2874 = vmatprep.subr.mxu0 0.0
      %2875 = vmatpush1.msra.mxu0 %v2861
      %2876 = vmatprep.subr.mxu0 0.0
      %2877 = vmatpush1.msra.mxu0 0.0
      %2878 = vmatprep.subr.mxu0 0.0
      %2879 = vmatpush1.msra.mxu0 0.0
      %2880 = vmatprep.subr.mxu0 0.0
      %2881 = vmatpush1.msra.mxu0 0.0
      %2882 = vmatprep.subr.mxu0 0.0
      %2883 = vmatpush1.msra.mxu0 0.0
      %2884 = vmatprep.subr.mxu0 0.0
      %2885 = vmatpush1.msra.mxu0 0.0
      %2886 = vmatprep.subr.mxu0 0.0
      %2887 = vmatpush1.msra.mxu0 0.0
      %2888 = vmatprep.subr.mxu0 0.0
      %2889 = vmatpush1.msra.mxu0 0.0
      %2890 = vmatprep.subr.mxu0 0.0
      %2891 = vmatpush1.msra.mxu0 0.0
      %2892 = vmatprep.subr.mxu0 0.0
      %2893 = vmatpush1.msra.mxu0 0.0
      %2894 = vmatprep.subr.mxu0 0.0
      %2895 = vmatpush1.msra.mxu0 0.0
      %2896 = vmatprep.subr.mxu0 0.0
      %2897 = vmatpush1.msra.mxu0 0.0
      %2898 = vmatprep.subr.mxu0 0.0
      %2899 = vmatpush1.msra.mxu0 0.0
      %2900 = vmatprep.subr.mxu0 0.0
      %2901 = vmatpush1.msra.mxu0 0.0
      %2902 = vmatprep.subr.mxu0 0.0
      %2903 = vmatpush1.msra.mxu0 0.0
      %2904 = vmatprep.subr.mxu0 0.0
      %2905 = vmatpush1.msra.mxu0 0.0
      %2906 = vmatprep.subr.mxu0 0.0
      %2907 = vmatpush1.msra.mxu0 0.0
      %2908 = vmatprep.subr.mxu0 0.0
      %2909 = vmatpush1.msra.mxu0 0.0
      %2910 = vmatprep.subr.mxu0 0.0
      %2911 = vmatpush1.msra.mxu0 0.0
      %2912 = vmatprep.subr.mxu0 0.0
      %2913 = vmatpush1.msra.mxu0 0.0
      %2914 = vmatprep.subr.mxu0 0.0
      %2915 = vmatpush1.msra.mxu0 0.0
      %2916 = vmatprep.subr.mxu0 0.0
      %2917 = vmatpush1.msra.mxu0 0.0
      %2918 = vmatprep.subr.mxu0 0.0
      %2919 = vmatpush1.msra.mxu0 0.0
      %2920 = vmatprep.subr.mxu0 0.0
      %2921 = vmatpush1.msra.mxu0 0.0
      %2922 = vmatprep.subr.mxu0 0.0
      %2923 = vmatpush1.msra.mxu0 0.0
      %2924 = vmatprep.subr.mxu0 0.0
      %2925 = vmatpush1.msra.mxu0 0.0
      %2926 = vmatprep.subr.mxu0 0.0
      %2927 = vmatpush1.msra.mxu0 0.0
      %2928 = vmatprep.subr.mxu0 0.0
      %2929 = vmatpush1.msra.mxu0 0.0
      %2930 = vmatprep.subr.mxu0 0.0
      %2931 = vmatpush1.msra.mxu0 0.0
      %2932 = vmatprep.subr.mxu0 0.0
      %2933 = vmatpush1.msra.mxu0 0.0
      %2934 = vmatprep.subr.mxu0 0.0
      %2935 = vmatpush1.msra.mxu0 0.0
      %2936 = vmatprep.mubr.f32.mxu0 0.0
      %2937 = vmatmul.mubr.f32.gmra.mrb[0].mxu0 %v2867
      %v2938 = vpop.f32.mrb[0].mxu0
      %v2939 = vadd.f32 0.0, %v2938
      %v2940 = vpop.f32.mrb[0].mxu0
      %2941 = vmatprep.mubr.f32.mxu0 0.0
      %2942 = vmatmul.mubr.f32.gmra.mrb[0].mxu0 %v2870
      %v2943 = vpop.f32.mrb[0].mxu0
      %v2944 = vadd.f32 0.0, %v2943
      %v2945 = vpop.f32.mrb[0].mxu0
      %2946 = vdwg.mxu0
      %v2947 = vld [vmem:[%s3] sm:$0xff]
      %v2948 = vld [vmem:[%s3 + $0x8] sm:$0xff]
      %v2949 = vld [vmem:[%s3 + $0x10] sm:$0xff]
      %v2950 = vld [vmem:[%s3 + $0x18] sm:$0xff]
      %v2951 = vld [vmem:[%s3 + $0x20] sm:$0xff]
      %v2952 = vld [vmem:[%s3 + $0x28] sm:$0xff]
      %v2953 = vld [vmem:[%s3 + $0x30] sm:$0xff]
      %v2954 = vld [vmem:[%s3 + $0x38] sm:$0xff]
      %v2955 = vld [vmem:[%s3 + $0x40] sm:$0xff]
      %v2956 = vld [vmem:[%s3 + $0x48] sm:$0xff]
      %v2957 = vld [vmem:[%s3 + $0x50] sm:$0xff]
      %v2958 = vld [vmem:[%s3 + $0x58] sm:$0xff]
      %v2959 = vld [vmem:[%s3 + $0x60] sm:$0xff]
      %v2960 = vld [vmem:[%s3 + $0x68] sm:$0xff]
      %v2961 = vld [vmem:[%s3 + $0x70] sm:$0xff]
      %v2962 = vld [vmem:[%s3 + $0x78] sm:$0xff]
      %2963 = vmatprep.subr.mxu0 0.0
      %2964 = vmatpush1.msra.mxu0 %v2947
      %2965 = vmatprep.subr.mxu0 0.0
      %2966 = vmatpush1.msra.mxu0 %v2948
      %2967 = vmatprep.subr.mxu0 0.0
      %2968 = vmatpush1.msra.mxu0 %v2949
      %2969 = vmatprep.subr.mxu0 0.0
      %2970 = vmatpush1.msra.mxu0 %v2950
      %2971 = vmatprep.subr.mxu0 0.0
      %2972 = vmatpush1.msra.mxu0 %v2951
      %2973 = vmatprep.subr.mxu0 0.0
      %2974 = vmatpush1.msra.mxu0 %v2952
      %2975 = vmatprep.subr.mxu0 0.0
      %2976 = vmatpush1.msra.mxu0 %v2953
      %2977 = vmatprep.subr.mxu0 0.0
      %2978 = vmatpush1.msra.mxu0 %v2954
      %2979 = vmatprep.subr.mxu0 0.0
      %2980 = vmatpush1.msra.mxu0 %v2955
      %2981 = vmatprep.subr.mxu0 0.0
      %2982 = vmatpush1.msra.mxu0 %v2956
      %2983 = vmatprep.subr.mxu0 0.0
      %2984 = vmatpush1.msra.mxu0 %v2957
      %2985 = vmatprep.subr.mxu0 0.0
      %2986 = vmatpush1.msra.mxu0 %v2958
      %2987 = vmatprep.subr.mxu0 0.0
      %2988 = vmatpush1.msra.mxu0 %v2959
      %2989 = vmatprep.subr.mxu0 0.0
      %2990 = vmatpush1.msra.mxu0 %v2960
      %2991 = vmatprep.subr.mxu0 0.0
      %2992 = vmatpush1.msra.mxu0 %v2961
      %2993 = vmatprep.subr.mxu0 0.0
      %2994 = vmatpush1.msra.mxu0 %v2962
      %2995 = vmatprep.subr.mxu0 0.0
      %2996 = vmatpush1.msra.mxu0 0.0
      %2997 = vmatprep.subr.mxu0 0.0
      %2998 = vmatpush1.msra.mxu0 0.0
      %2999 = vmatprep.subr.mxu0 0.0
      %3000 = vmatpush1.msra.mxu0 0.0
      %3001 = vmatprep.subr.mxu0 0.0
      %3002 = vmatpush1.msra.mxu0 0.0
      %3003 = vmatprep.subr.mxu0 0.0
      %3004 = vmatpush1.msra.mxu0 0.0
      %3005 = vmatprep.subr.mxu0 0.0
      %3006 = vmatpush1.msra.mxu0 0.0
      %3007 = vmatprep.subr.mxu0 0.0
      %3008 = vmatpush1.msra.mxu0 0.0
      %3009 = vmatprep.subr.mxu0 0.0
      %3010 = vmatpush1.msra.mxu0 0.0
      %3011 = vmatprep.subr.mxu0 0.0
      %3012 = vmatpush1.msra.mxu0 0.0
      %3013 = vmatprep.subr.mxu0 0.0
      %3014 = vmatpush1.msra.mxu0 0.0
      %3015 = vmatprep.subr.mxu0 0.0
      %3016 = vmatpush1.msra.mxu0 0.0
      %3017 = vmatprep.subr.mxu0 0.0
      %3018 = vmatpush1.msra.mxu0 0.0
      %3019 = vmatprep.subr.mxu0 0.0
      %3020 = vmatpush1.msra.mxu0 0.0
      %3021 = vmatprep.subr.mxu0 0.0
      %3022 = vmatpush1.msra.mxu0 0.0
      %3023 = vmatprep.subr.mxu0 0.0
      %3024 = vmatpush1.msra.mxu0 0.0
      %3025 = vmatprep.subr.mxu0 0.0
      %3026 = vmatpush1.msra.mxu0 0.0
      %3027 = vmatprep.mubr.f32.mxu0 0.0
      %3028 = vmatmul.mubr.f32.gmra.mrb[0].mxu0 %v2939
      %v3029 = vpop.f32.mrb[0].mxu0
      %v3030 = vadd.f32 0.0, %v3029
      %v3031 = vpop.f32.mrb[0].mxu0
      %3032 = vmatprep.mubr.f32.mxu0 0.0
      %3033 = vmatmul.mubr.f32.gmra.mrb[0].mxu0 %v2944
      %v3034 = vpop.f32.mrb[0].mxu0
      %v3035 = vadd.f32 0.0, %v3034
      %v3036 = vpop.f32.mrb[0].mxu0
      %3037 = vdwg.mxu0
      %v3038 = vmul.f32 %v3030, %v3030
      %v3039 = vmul.f32 %v3035, %v3035
      %v3040 = vadd.f32 %v3038, %v3039
      %3041 = vadd.xlane.f32.xlu0 %v3040
      %v3042 = vpop.xlane.xlu0 %3041
      %v3043 = vrot.slane %v3042, 4
      %v3044 = vadd.f32 %v3042, %v3043
      %v3045 = vrot.slane %v3044, 2
      %v3046 = vadd.f32 %v3044, %v3045
      %v3047 = vrot.slane %v3046, 1
      %v3048 = vadd.f32 %v3046, %v3047
      %s3049 = vtos %v3048
      %v3050 = vstv %s3049
      %v3051 = vrcp.pop %v2649
      %v3052 = vmul.f32 %v3050, %v3051
      %v3054 = vlaneseq
      %v3055 = vshrl.u32 %v3054, 7
      %v3056 = vsub.s32 0, %v3055
      %v3057 = vrot.slane %v3052, %v3056
      %3058 = vset.pattern.permute.xlu0 0
      %3059 = vperm.xlu0 %3058, %v3057
      %v3060 = vpop.permute.xlu0 %3059
      %v3062 = vmul.f32 %v3060, %v2647
      %v3063 = vmul.f32 %v3060, %v2648
      %v3064 = vadd.f32 %v3030, %v3062
      %v3065 = vadd.f32 %v3035, %v3063
      %3066 = vst [vmem:[#allocation2] sm:$0xff] %v3064
      %3067 = vst [vmem:[#allocation2 + $0x8] sm:$0xff] %v3065
      %3068 = vst.msk [vmem:[#allocation3] sm:$0x1] %vm430, %v3050
      %v3069 = vmul.f32 %v2860, %v2860
      %v3070 = vmul.f32 %v2861, %v2861
      %v3071 = vadd.f32 %v3069, %v3070
      %3072 = vadd.xlane.f32.xlu0 %v3071
      %v3073 = vpop.xlane.xlu0 %3072
      %v3074 = vrot.slane %v3073, 4
      %v3075 = vadd.f32 %v3073, %v3074
      %v3076 = vrot.slane %v3075, 2
      %v3077 = vadd.f32 %v3075, %v3076
      %v3078 = vrot.slane %v3077, 1
      %v3079 = vadd.f32 %v3077, %v3078
      %s3080 = vtos %v3079
      %p3081 = scmp.lt.f32.partialorder %s3080, %s224
      %s3082 = scalar_select %p3081, 1, 0
      %3083 = sst [smem:[%s239]] %s3082
    $region49: #{graph_cgls_forward.1} parent=1 // pred_fallthru
      _
    %s3084 = sld [smem:[#allocation4]]
    %p3085 = scmp.eq.s32.totalorder %s3084, 0
    // Predicated region
    $region50: #{graph_cgls_forward.1} parent=1 // pred_check
      %p3086 = pneg %p3085
    $region51: #{graph_cgls_forward.1} parent=1 // pred_check_branch
      %3088 = sbr.rel (%p3086) target = $region53
    $region52: #{graph_cgls_forward.1} parent=1 // pred_region
      %v3089 = vld [vmem:[#allocation2] sm:$0xff]
      %v3090 = vld [vmem:[#allocation2 + $0x8] sm:$0xff]
      %v3091 = vld [vmem:[#allocation3] sm:$0x1]
      %v3092 = vld [vmem:[%s0] sm:$0xff]
      %v3093 = vld [vmem:[%s0 + $0x8] sm:$0xff]
      %v3095 = vsel %vm35, %v3092, 0
      %v3098 = vsel %vm35, %v3093, 0
      %3100 = vmatprep.subr.mxu0 0.0
      %3101 = vmatpush1.msra.mxu0 %v3089
      %3102 = vmatprep.subr.mxu0 0.0
      %3103 = vmatpush1.msra.mxu0 %v3090
      %3104 = vmatprep.subr.mxu0 0.0
      %3105 = vmatpush1.msra.mxu0 0.0
      %3106 = vmatprep.subr.mxu0 0.0
      %3107 = vmatpush1.msra.mxu0 0.0
      %3108 = vmatprep.subr.mxu0 0.0
      %3109 = vmatpush1.msra.mxu0 0.0
      %3110 = vmatprep.subr.mxu0 0.0
      %3111 = vmatpush1.msra.mxu0 0.0
      %3112 = vmatprep.subr.mxu0 0.0
      %3113 = vmatpush1.msra.mxu0 0.0
      %3114 = vmatprep.subr.mxu0 0.0
      %3115 = vmatpush1.msra.mxu0 0.0
      %3116 = vmatprep.subr.mxu0 0.0
      %3117 = vmatpush1.msra.mxu0 0.0
      %3118 = vmatprep.subr.mxu0 0.0
      %3119 = vmatpush1.msra.mxu0 0.0
      %3120 = vmatprep.subr.mxu0 0.0
      %3121 = vmatpush1.msra.mxu0 0.0
      %3122 = vmatprep.subr.mxu0 0.0
      %3123 = vmatpush1.msra.mxu0 0.0
      %3124 = vmatprep.subr.mxu0 0.0
      %3125 = vmatpush1.msra.mxu0 0.0
      %3126 = vmatprep.subr.mxu0 0.0
      %3127 = vmatpush1.msra.mxu0 0.0
      %3128 = vmatprep.subr.mxu0 0.0
      %3129 = vmatpush1.msra.mxu0 0.0
      %3130 = vmatprep.subr.mxu0 0.0
      %3131 = vmatpush1.msra.mxu0 0.0
      %3132 = vmatprep.subr.mxu0 0.0
      %3133 = vmatpush1.msra.mxu0 0.0
      %3134 = vmatprep.subr.mxu0 0.0
      %3135 = vmatpush1.msra.mxu0 0.0
      %3136 = vmatprep.subr.mxu0 0.0
      %3137 = vmatpush1.msra.mxu0 0.0
      %3138 = vmatprep.subr.mxu0 0.0
      %3139 = vmatpush1.msra.mxu0 0.0
      %3140 = vmatprep.subr.mxu0 0.0
      %3141 = vmatpush1.msra.mxu0 0.0
      %3142 = vmatprep.subr.mxu0 0.0
      %3143 = vmatpush1.msra.mxu0 0.0
      %3144 = vmatprep.subr.mxu0 0.0
      %3145 = vmatpush1.msra.mxu0 0.0
      %3146 = vmatprep.subr.mxu0 0.0
      %3147 = vmatpush1.msra.mxu0 0.0
      %3148 = vmatprep.subr.mxu0 0.0
      %3149 = vmatpush1.msra.mxu0 0.0
      %3150 = vmatprep.subr.mxu0 0.0
      %3151 = vmatpush1.msra.mxu0 0.0
      %3152 = vmatprep.subr.mxu0 0.0
      %3153 = vmatpush1.msra.mxu0 0.0
      %3154 = vmatprep.subr.mxu0 0.0
      %3155 = vmatpush1.msra.mxu0 0.0
      %3156 = vmatprep.subr.mxu0 0.0
      %3157 = vmatpush1.msra.mxu0 0.0
      %3158 = vmatprep.subr.mxu0 0.0
      %3159 = vmatpush1.msra.mxu0 0.0
      %3160 = vmatprep.subr.mxu0 0.0
      %3161 = vmatpush1.msra.mxu0 0.0
      %3162 = vmatprep.subr.mxu0 0.0
      %3163 = vmatpush1.msra.mxu0 0.0
      %3164 = vmatprep.mubr.f32.mxu0 0.0
      %3165 = vmatmul.mubr.f32.gmra.mrb[0].mxu0 %v3095
      %v3166 = vpop.f32.mrb[0].mxu0
      %v3167 = vadd.f32 0.0, %v3166
      %v3168 = vpop.f32.mrb[0].mxu0
      %3169 = vmatprep.mubr.f32.mxu0 0.0
      %3170 = vmatmul.mubr.f32.gmra.mrb[0].mxu0 %v3098
      %v3171 = vpop.f32.mrb[0].mxu0
      %v3172 = vadd.f32 0.0, %v3171
      %v3173 = vpop.f32.mrb[0].mxu0
      %3174 = vdwg.mxu0
      %v3175 = vld [vmem:[%s2] sm:$0xff]
      %v3176 = vld [vmem:[%s2 + $0x8] sm:$0xff]
      %v3177 = vld [vmem:[%s2 + $0x10] sm:$0xff]
      %v3178 = vld [vmem:[%s2 + $0x18] sm:$0xff]
      %v3179 = vld [vmem:[%s2 + $0x20] sm:$0xff]
      %v3180 = vld [vmem:[%s2 + $0x28] sm:$0xff]
      %v3181 = vld [vmem:[%s2 + $0x30] sm:$0xff]
      %v3182 = vld [vmem:[%s2 + $0x38] sm:$0xff]
      %v3183 = vld [vmem:[%s2 + $0x40] sm:$0xff]
      %v3184 = vld [vmem:[%s2 + $0x48] sm:$0xff]
      %v3185 = vld [vmem:[%s2 + $0x50] sm:$0xff]
      %v3186 = vld [vmem:[%s2 + $0x58] sm:$0xff]
      %v3187 = vld [vmem:[%s2 + $0x60] sm:$0xff]
      %v3188 = vld [vmem:[%s2 + $0x68] sm:$0xff]
      %v3189 = vld [vmem:[%s2 + $0x70] sm:$0xff]
      %v3190 = vld [vmem:[%s2 + $0x78] sm:$0xff]
      %3191 = vmatprep.subr.mxu0 0.0
      %3192 = vmatpush1.msra.mxu0 %v3175
      %3193 = vmatprep.subr.mxu0 0.0
      %3194 = vmatpush1.msra.mxu0 %v3176
      %3195 = vmatprep.subr.mxu0 0.0
      %3196 = vmatpush1.msra.mxu0 %v3177
      %3197 = vmatprep.subr.mxu0 0.0
      %3198 = vmatpush1.msra.mxu0 %v3178
      %3199 = vmatprep.subr.mxu0 0.0
      %3200 = vmatpush1.msra.mxu0 %v3179
      %3201 = vmatprep.subr.mxu0 0.0
      %3202 = vmatpush1.msra.mxu0 %v3180
      %3203 = vmatprep.subr.mxu0 0.0
      %3204 = vmatpush1.msra.mxu0 %v3181
      %3205 = vmatprep.subr.mxu0 0.0
      %3206 = vmatpush1.msra.mxu0 %v3182
      %3207 = vmatprep.subr.mxu0 0.0
      %3208 = vmatpush1.msra.mxu0 %v3183
      %3209 = vmatprep.subr.mxu0 0.0
      %3210 = vmatpush1.msra.mxu0 %v3184
      %3211 = vmatprep.subr.mxu0 0.0
      %3212 = vmatpush1.msra.mxu0 %v3185
      %3213 = vmatprep.subr.mxu0 0.0
      %3214 = vmatpush1.msra.mxu0 %v3186
      %3215 = vmatprep.subr.mxu0 0.0
      %3216 = vmatpush1.msra.mxu0 %v3187
      %3217 = vmatprep.subr.mxu0 0.0
      %3218 = vmatpush1.msra.mxu0 %v3188
      %3219 = vmatprep.subr.mxu0 0.0
      %3220 = vmatpush1.msra.mxu0 %v3189
      %3221 = vmatprep.subr.mxu0 0.0
      %3222 = vmatpush1.msra.mxu0 %v3190
      %3223 = vmatprep.subr.mxu0 0.0
      %3224 = vmatpush1.msra.mxu0 0.0
      %3225 = vmatprep.subr.mxu0 0.0
      %3226 = vmatpush1.msra.mxu0 0.0
      %3227 = vmatprep.subr.mxu0 0.0
      %3228 = vmatpush1.msra.mxu0 0.0
      %3229 = vmatprep.subr.mxu0 0.0
      %3230 = vmatpush1.msra.mxu0 0.0
      %3231 = vmatprep.subr.mxu0 0.0
      %3232 = vmatpush1.msra.mxu0 0.0
      %3233 = vmatprep.subr.mxu0 0.0
      %3234 = vmatpush1.msra.mxu0 0.0
      %3235 = vmatprep.subr.mxu0 0.0
      %3236 = vmatpush1.msra.mxu0 0.0
      %3237 = vmatprep.subr.mxu0 0.0
      %3238 = vmatpush1.msra.mxu0 0.0
      %3239 = vmatprep.subr.mxu0 0.0
      %3240 = vmatpush1.msra.mxu0 0.0
      %3241 = vmatprep.subr.mxu0 0.0
      %3242 = vmatpush1.msra.mxu0 0.0
      %3243 = vmatprep.subr.mxu0 0.0
      %3244 = vmatpush1.msra.mxu0 0.0
      %3245 = vmatprep.subr.mxu0 0.0
      %3246 = vmatpush1.msra.mxu0 0.0
      %3247 = vmatprep.subr.mxu0 0.0
      %3248 = vmatpush1.msra.mxu0 0.0
      %3249 = vmatprep.subr.mxu0 0.0
      %3250 = vmatpush1.msra.mxu0 0.0
      %3251 = vmatprep.subr.mxu0 0.0
      %3252 = vmatpush1.msra.mxu0 0.0
      %3253 = vmatprep.subr.mxu0 0.0
      %3254 = vmatpush1.msra.mxu0 0.0
      %3255 = vmatprep.mubr.f32.mxu0 0.0
      %3256 = vmatmul.mubr.f32.gmra.mrb[0].mxu0 %v3167
      %v3257 = vpop.f32.mrb[0].mxu0
      %v3258 = vadd.f32 0.0, %v3257
      %v3259 = vpop.f32.mrb[0].mxu0
      %3260 = vmatprep.mubr.f32.mxu0 0.0
      %3261 = vmatmul.mubr.f32.gmra.mrb[0].mxu0 %v3172
      %v3262 = vpop.f32.mrb[0].mxu0
      %v3263 = vadd.f32 0.0, %v3262
      %v3264 = vpop.f32.mrb[0].mxu0
      %3265 = vdwg.mxu0
      %v3266 = vmul.f32 %v3258, %v3258
      %v3267 = vmul.f32 %v3263, %v3263
      %v3268 = vadd.f32 %v3266, %v3267
      %3269 = vadd.xlane.f32.xlu0 %v3268
      %v3270 = vpop.xlane.xlu0 %3269
      %v3271 = vrot.slane %v3270, 4
      %v3272 = vadd.f32 %v3270, %v3271
      %v3273 = vrot.slane %v3272, 2
      %v3274 = vadd.f32 %v3272, %v3273
      %v3275 = vrot.slane %v3274, 1
      %v3276 = vadd.f32 %v3274, %v3275
      %s3277 = vtos %v3276
      %v3278 = vstv %s3277
      %v3279 = vrcp.pop %v3278
      %v3280 = vmul.f32 %v3091, %v3279
      %v3281 = vld [vmem:[#allocation5] sm:$0xff]
      %v3282 = vld [vmem:[#allocation5 + $0x8] sm:$0xff]
      %v3284 = vlaneseq
      %v3285 = vshrl.u32 %v3284, 7
      %v3286 = vsub.s32 0, %v3285
      %v3287 = vrot.slane %v3280, %v3286
      %3288 = vset.pattern.permute.xlu0 0
      %3289 = vperm.xlu0 %3288, %v3287
      %v3290 = vpop.permute.xlu0 %3289
      %v3292 = vmul.f32 %v3290, %v3089
      %v3293 = vmul.f32 %v3290, %v3090
      %v3294 = vadd.f32 %v3281, %v3292
      %v3295 = vadd.f32 %v3282, %v3293
      %3296 = vst [vmem:[#allocation5] sm:$0xff] %v3294
      %3297 = vst [vmem:[#allocation5 + $0x8] sm:$0xff] %v3295
      %v3298 = vld [vmem:[#allocation7] sm:$0xff]
      %v3299 = vld [vmem:[#allocation7 + $0x8] sm:$0xff]
      %v3300 = vmul.f32 %v3290, %v3258
      %v3301 = vmul.f32 %v3290, %v3263
      %v3302 = vsub.f32 %v3298, %v3300
      %v3303 = vsub.f32 %v3299, %v3301
      %3304 = vst [vmem:[#allocation7] sm:$0xff] %v3302
      %3305 = vst [vmem:[#allocation7 + $0x8] sm:$0xff] %v3303
      %v3306 = vld [vmem:[%s1] sm:$0xff]
      %v3307 = vld [vmem:[%s1 + $0x8] sm:$0xff]
      %v3309 = vsel %vm35, %v3306, 0
      %v3312 = vsel %vm35, %v3307, 0
      %3314 = vmatprep.subr.mxu0 0.0
      %3315 = vmatpush1.msra.mxu0 %v3302
      %3316 = vmatprep.subr.mxu0 0.0
      %3317 = vmatpush1.msra.mxu0 %v3303
      %3318 = vmatprep.subr.mxu0 0.0
      %3319 = vmatpush1.msra.mxu0 0.0
      %3320 = vmatprep.subr.mxu0 0.0
      %3321 = vmatpush1.msra.mxu0 0.0
      %3322 = vmatprep.subr.mxu0 0.0
      %3323 = vmatpush1.msra.mxu0 0.0
      %3324 = vmatprep.subr.mxu0 0.0
      %3325 = vmatpush1.msra.mxu0 0.0
      %3326 = vmatprep.subr.mxu0 0.0
      %3327 = vmatpush1.msra.mxu0 0.0
      %3328 = vmatprep.subr.mxu0 0.0
      %3329 = vmatpush1.msra.mxu0 0.0
      %3330 = vmatprep.subr.mxu0 0.0
      %3331 = vmatpush1.msra.mxu0 0.0
      %3332 = vmatprep.subr.mxu0 0.0
      %3333 = vmatpush1.msra.mxu0 0.0
      %3334 = vmatprep.subr.mxu0 0.0
      %3335 = vmatpush1.msra.mxu0 0.0
      %3336 = vmatprep.subr.mxu0 0.0
      %3337 = vmatpush1.msra.mxu0 0.0
      %3338 = vmatprep.subr.mxu0 0.0
      %3339 = vmatpush1.msra.mxu0 0.0
      %3340 = vmatprep.subr.mxu0 0.0
      %3341 = vmatpush1.msra.mxu0 0.0
      %3342 = vmatprep.subr.mxu0 0.0
      %3343 = vmatpush1.msra.mxu0 0.0
      %3344 = vmatprep.subr.mxu0 0.0
      %3345 = vmatpush1.msra.mxu0 0.0
      %3346 = vmatprep.subr.mxu0 0.0
      %3347 = vmatpush1.msra.mxu0 0.0
      %3348 = vmatprep.subr.mxu0 0.0
      %3349 = vmatpush1.msra.mxu0 0.0
      %3350 = vmatprep.subr.mxu0 0.0
      %3351 = vmatpush1.msra.mxu0 0.0
      %3352 = vmatprep.subr.mxu0 0.0
      %3353 = vmatpush1.msra.mxu0 0.0
      %3354 = vmatprep.subr.mxu0 0.0
      %3355 = vmatpush1.msra.mxu0 0.0
      %3356 = vmatprep.subr.mxu0 0.0
      %3357 = vmatpush1.msra.mxu0 0.0
      %3358 = vmatprep.subr.mxu0 0.0
      %3359 = vmatpush1.msra.mxu0 0.0
      %3360 = vmatprep.subr.mxu0 0.0
      %3361 = vmatpush1.msra.mxu0 0.0
      %3362 = vmatprep.subr.mxu0 0.0
      %3363 = vmatpush1.msra.mxu0 0.0
      %3364 = vmatprep.subr.mxu0 0.0
      %3365 = vmatpush1.msra.mxu0 0.0
      %3366 = vmatprep.subr.mxu0 0.0
      %3367 = vmatpush1.msra.mxu0 0.0
      %3368 = vmatprep.subr.mxu0 0.0
      %3369 = vmatpush1.msra.mxu0 0.0
      %3370 = vmatprep.subr.mxu0 0.0
      %3371 = vmatpush1.msra.mxu0 0.0
      %3372 = vmatprep.subr.mxu0 0.0
      %3373 = vmatpush1.msra.mxu0 0.0
      %3374 = vmatprep.subr.mxu0 0.0
      %3375 = vmatpush1.msra.mxu0 0.0
      %3376 = vmatprep.subr.mxu0 0.0
      %3377 = vmatpush1.msra.mxu0 0.0
      %3378 = vmatprep.mubr.f32.mxu0 0.0
      %3379 = vmatmul.mubr.f32.gmra.mrb[0].mxu0 %v3309
      %v3380 = vpop.f32.mrb[0].mxu0
      %v3381 = vadd.f32 0.0, %v3380
      %v3382 = vpop.f32.mrb[0].mxu0
      %3383 = vmatprep.mubr.f32.mxu0 0.0
      %3384 = vmatmul.mubr.f32.gmra.mrb[0].mxu0 %v3312
      %v3385 = vpop.f32.mrb[0].mxu0
      %v3386 = vadd.f32 0.0, %v3385
      %v3387 = vpop.f32.mrb[0].mxu0
      %3388 = vdwg.mxu0
      %v3389 = vld [vmem:[%s3] sm:$0xff]
      %v3390 = vld [vmem:[%s3 + $0x8] sm:$0xff]
      %v3391 = vld [vmem:[%s3 + $0x10] sm:$0xff]
      %v3392 = vld [vmem:[%s3 + $0x18] sm:$0xff]
      %v3393 = vld [vmem:[%s3 + $0x20] sm:$0xff]
      %v3394 = vld [vmem:[%s3 + $0x28] sm:$0xff]
      %v3395 = vld [vmem:[%s3 + $0x30] sm:$0xff]
      %v3396 = vld [vmem:[%s3 + $0x38] sm:$0xff]
      %v3397 = vld [vmem:[%s3 + $0x40] sm:$0xff]
      %v3398 = vld [vmem:[%s3 + $0x48] sm:$0xff]
      %v3399 = vld [vmem:[%s3 + $0x50] sm:$0xff]
      %v3400 = vld [vmem:[%s3 + $0x58] sm:$0xff]
      %v3401 = vld [vmem:[%s3 + $0x60] sm:$0xff]
      %v3402 = vld [vmem:[%s3 + $0x68] sm:$0xff]
      %v3403 = vld [vmem:[%s3 + $0x70] sm:$0xff]
      %v3404 = vld [vmem:[%s3 + $0x78] sm:$0xff]
      %3405 = vmatprep.subr.mxu0 0.0
      %3406 = vmatpush1.msra.mxu0 %v3389
      %3407 = vmatprep.subr.mxu0 0.0
      %3408 = vmatpush1.msra.mxu0 %v3390
      %3409 = vmatprep.subr.mxu0 0.0
      %3410 = vmatpush1.msra.mxu0 %v3391
      %3411 = vmatprep.subr.mxu0 0.0
      %3412 = vmatpush1.msra.mxu0 %v3392
      %3413 = vmatprep.subr.mxu0 0.0
      %3414 = vmatpush1.msra.mxu0 %v3393
      %3415 = vmatprep.subr.mxu0 0.0
      %3416 = vmatpush1.msra.mxu0 %v3394
      %3417 = vmatprep.subr.mxu0 0.0
      %3418 = vmatpush1.msra.mxu0 %v3395
      %3419 = vmatprep.subr.mxu0 0.0
      %3420 = vmatpush1.msra.mxu0 %v3396
      %3421 = vmatprep.subr.mxu0 0.0
      %3422 = vmatpush1.msra.mxu0 %v3397
      %3423 = vmatprep.subr.mxu0 0.0
      %3424 = vmatpush1.msra.mxu0 %v3398
      %3425 = vmatprep.subr.mxu0 0.0
      %3426 = vmatpush1.msra.mxu0 %v3399
      %3427 = vmatprep.subr.mxu0 0.0
      %3428 = vmatpush1.msra.mxu0 %v3400
      %3429 = vmatprep.subr.mxu0 0.0
      %3430 = vmatpush1.msra.mxu0 %v3401
      %3431 = vmatprep.subr.mxu0 0.0
      %3432 = vmatpush1.msra.mxu0 %v3402
      %3433 = vmatprep.subr.mxu0 0.0
      %3434 = vmatpush1.msra.mxu0 %v3403
      %3435 = vmatprep.subr.mxu0 0.0
      %3436 = vmatpush1.msra.mxu0 %v3404
      %3437 = vmatprep.subr.mxu0 0.0
      %3438 = vmatpush1.msra.mxu0 0.0
      %3439 = vmatprep.subr.mxu0 0.0
      %3440 = vmatpush1.msra.mxu0 0.0
      %3441 = vmatprep.subr.mxu0 0.0
      %3442 = vmatpush1.msra.mxu0 0.0
      %3443 = vmatprep.subr.mxu0 0.0
      %3444 = vmatpush1.msra.mxu0 0.0
      %3445 = vmatprep.subr.mxu0 0.0
      %3446 = vmatpush1.msra.mxu0 0.0
      %3447 = vmatprep.subr.mxu0 0.0
      %3448 = vmatpush1.msra.mxu0 0.0
      %3449 = vmatprep.subr.mxu0 0.0
      %3450 = vmatpush1.msra.mxu0 0.0
      %3451 = vmatprep.subr.mxu0 0.0
      %3452 = vmatpush1.msra.mxu0 0.0
      %3453 = vmatprep.subr.mxu0 0.0
      %3454 = vmatpush1.msra.mxu0 0.0
      %3455 = vmatprep.subr.mxu0 0.0
      %3456 = vmatpush1.msra.mxu0 0.0
      %3457 = vmatprep.subr.mxu0 0.0
      %3458 = vmatpush1.msra.mxu0 0.0
      %3459 = vmatprep.subr.mxu0 0.0
      %3460 = vmatpush1.msra.mxu0 0.0
      %3461 = vmatprep.subr.mxu0 0.0
      %3462 = vmatpush1.msra.mxu0 0.0
      %3463 = vmatprep.subr.mxu0 0.0
      %3464 = vmatpush1.msra.mxu0 0.0
      %3465 = vmatprep.subr.mxu0 0.0
      %3466 = vmatpush1.msra.mxu0 0.0
      %3467 = vmatprep.subr.mxu0 0.0
      %3468 = vmatpush1.msra.mxu0 0.0
      %3469 = vmatprep.mubr.f32.mxu0 0.0
      %3470 = vmatmul.mubr.f32.gmra.mrb[0].mxu0 %v3381
      %v3471 = vpop.f32.mrb[0].mxu0
      %v3472 = vadd.f32 0.0, %v3471
      %v3473 = vpop.f32.mrb[0].mxu0
      %3474 = vmatprep.mubr.f32.mxu0 0.0
      %3475 = vmatmul.mubr.f32.gmra.mrb[0].mxu0 %v3386
      %v3476 = vpop.f32.mrb[0].mxu0
      %v3477 = vadd.f32 0.0, %v3476
      %v3478 = vpop.f32.mrb[0].mxu0
      %3479 = vdwg.mxu0
      %v3480 = vmul.f32 %v3472, %v3472
      %v3481 = vmul.f32 %v3477, %v3477
      %v3482 = vadd.f32 %v3480, %v3481
      %3483 = vadd.xlane.f32.xlu0 %v3482
      %v3484 = vpop.xlane.xlu0 %3483
      %v3485 = vrot.slane %v3484, 4
      %v3486 = vadd.f32 %v3484, %v3485
      %v3487 = vrot.slane %v3486, 2
      %v3488 = vadd.f32 %v3486, %v3487
      %v3489 = vrot.slane %v3488, 1
      %v3490 = vadd.f32 %v3488, %v3489
      %s3491 = vtos %v3490
      %v3492 = vstv %s3491
      %v3493 = vrcp.pop %v3091
      %v3494 = vmul.f32 %v3492, %v3493
      %v3496 = vlaneseq
      %v3497 = vshrl.u32 %v3496, 7
      %v3498 = vsub.s32 0, %v3497
      %v3499 = vrot.slane %v3494, %v3498
      %3500 = vset.pattern.permute.xlu0 0
      %3501 = vperm.xlu0 %3500, %v3499
      %v3502 = vpop.permute.xlu0 %3501
      %v3504 = vmul.f32 %v3502, %v3089
      %v3505 = vmul.f32 %v3502, %v3090
      %v3506 = vadd.f32 %v3472, %v3504
      %v3507 = vadd.f32 %v3477, %v3505
      %3508 = vst [vmem:[#allocation2] sm:$0xff] %v3506
      %3509 = vst [vmem:[#allocation2 + $0x8] sm:$0xff] %v3507
      %3510 = vst.msk [vmem:[#allocation3] sm:$0x1] %vm430, %v3492
      %v3511 = vmul.f32 %v3302, %v3302
      %v3512 = vmul.f32 %v3303, %v3303
      %v3513 = vadd.f32 %v3511, %v3512
      %3514 = vadd.xlane.f32.xlu0 %v3513
      %v3515 = vpop.xlane.xlu0 %3514
      %v3516 = vrot.slane %v3515, 4
      %v3517 = vadd.f32 %v3515, %v3516
      %v3518 = vrot.slane %v3517, 2
      %v3519 = vadd.f32 %v3517, %v3518
      %v3520 = vrot.slane %v3519, 1
      %v3521 = vadd.f32 %v3519, %v3520
      %s3522 = vtos %v3521
      %p3523 = scmp.lt.f32.partialorder %s3522, %s224
      %s3524 = scalar_select %p3523, 1, 0
      %3525 = sst [smem:[%s239]] %s3524
    $region53: #{graph_cgls_forward.1} parent=1 // pred_fallthru
      _
    %s3526 = sld [smem:[#allocation4]]
    %p3527 = scmp.eq.s32.totalorder %s3526, 0
    // Predicated region
    $region54: #{graph_cgls_forward.1} parent=1 // pred_check
      %p3528 = pneg %p3527
    $region55: #{graph_cgls_forward.1} parent=1 // pred_check_branch
      %3530 = sbr.rel (%p3528) target = $region57
    $region56: #{graph_cgls_forward.1} parent=1 // pred_region
      %v3531 = vld [vmem:[#allocation2] sm:$0xff]
      %v3532 = vld [vmem:[#allocation2 + $0x8] sm:$0xff]
      %v3533 = vld [vmem:[#allocation3] sm:$0x1]
      %v3534 = vld [vmem:[%s0] sm:$0xff]
      %v3535 = vld [vmem:[%s0 + $0x8] sm:$0xff]
      %v3537 = vsel %vm35, %v3534, 0
      %v3540 = vsel %vm35, %v3535, 0
      %3542 = vmatprep.subr.mxu0 0.0
      %3543 = vmatpush1.msra.mxu0 %v3531
      %3544 = vmatprep.subr.mxu0 0.0
      %3545 = vmatpush1.msra.mxu0 %v3532
      %3546 = vmatprep.subr.mxu0 0.0
      %3547 = vmatpush1.msra.mxu0 0.0
      %3548 = vmatprep.subr.mxu0 0.0
      %3549 = vmatpush1.msra.mxu0 0.0
      %3550 = vmatprep.subr.mxu0 0.0
      %3551 = vmatpush1.msra.mxu0 0.0
      %3552 = vmatprep.subr.mxu0 0.0
      %3553 = vmatpush1.msra.mxu0 0.0
      %3554 = vmatprep.subr.mxu0 0.0
      %3555 = vmatpush1.msra.mxu0 0.0
      %3556 = vmatprep.subr.mxu0 0.0
      %3557 = vmatpush1.msra.mxu0 0.0
      %3558 = vmatprep.subr.mxu0 0.0
      %3559 = vmatpush1.msra.mxu0 0.0
      %3560 = vmatprep.subr.mxu0 0.0
      %3561 = vmatpush1.msra.mxu0 0.0
      %3562 = vmatprep.subr.mxu0 0.0
      %3563 = vmatpush1.msra.mxu0 0.0
      %3564 = vmatprep.subr.mxu0 0.0
      %3565 = vmatpush1.msra.mxu0 0.0
      %3566 = vmatprep.subr.mxu0 0.0
      %3567 = vmatpush1.msra.mxu0 0.0
      %3568 = vmatprep.subr.mxu0 0.0
      %3569 = vmatpush1.msra.mxu0 0.0
      %3570 = vmatprep.subr.mxu0 0.0
      %3571 = vmatpush1.msra.mxu0 0.0
      %3572 = vmatprep.subr.mxu0 0.0
      %3573 = vmatpush1.msra.mxu0 0.0
      %3574 = vmatprep.subr.mxu0 0.0
      %3575 = vmatpush1.msra.mxu0 0.0
      %3576 = vmatprep.subr.mxu0 0.0
      %3577 = vmatpush1.msra.mxu0 0.0
      %3578 = vmatprep.subr.mxu0 0.0
      %3579 = vmatpush1.msra.mxu0 0.0
      %3580 = vmatprep.subr.mxu0 0.0
      %3581 = vmatpush1.msra.mxu0 0.0
      %3582 = vmatprep.subr.mxu0 0.0
      %3583 = vmatpush1.msra.mxu0 0.0
      %3584 = vmatprep.subr.mxu0 0.0
      %3585 = vmatpush1.msra.mxu0 0.0
      %3586 = vmatprep.subr.mxu0 0.0
      %3587 = vmatpush1.msra.mxu0 0.0
      %3588 = vmatprep.subr.mxu0 0.0
      %3589 = vmatpush1.msra.mxu0 0.0
      %3590 = vmatprep.subr.mxu0 0.0
      %3591 = vmatpush1.msra.mxu0 0.0
      %3592 = vmatprep.subr.mxu0 0.0
      %3593 = vmatpush1.msra.mxu0 0.0
      %3594 = vmatprep.subr.mxu0 0.0
      %3595 = vmatpush1.msra.mxu0 0.0
      %3596 = vmatprep.subr.mxu0 0.0
      %3597 = vmatpush1.msra.mxu0 0.0
      %3598 = vmatprep.subr.mxu0 0.0
      %3599 = vmatpush1.msra.mxu0 0.0
      %3600 = vmatprep.subr.mxu0 0.0
      %3601 = vmatpush1.msra.mxu0 0.0
      %3602 = vmatprep.subr.mxu0 0.0
      %3603 = vmatpush1.msra.mxu0 0.0
      %3604 = vmatprep.subr.mxu0 0.0
      %3605 = vmatpush1.msra.mxu0 0.0
      %3606 = vmatprep.mubr.f32.mxu0 0.0
      %3607 = vmatmul.mubr.f32.gmra.mrb[0].mxu0 %v3537
      %v3608 = vpop.f32.mrb[0].mxu0
      %v3609 = vadd.f32 0.0, %v3608
      %v3610 = vpop.f32.mrb[0].mxu0
      %3611 = vmatprep.mubr.f32.mxu0 0.0
      %3612 = vmatmul.mubr.f32.gmra.mrb[0].mxu0 %v3540
      %v3613 = vpop.f32.mrb[0].mxu0
      %v3614 = vadd.f32 0.0, %v3613
      %v3615 = vpop.f32.mrb[0].mxu0
      %3616 = vdwg.mxu0
      %v3617 = vld [vmem:[%s2] sm:$0xff]
      %v3618 = vld [vmem:[%s2 + $0x8] sm:$0xff]
      %v3619 = vld [vmem:[%s2 + $0x10] sm:$0xff]
      %v3620 = vld [vmem:[%s2 + $0x18] sm:$0xff]
      %v3621 = vld [vmem:[%s2 + $0x20] sm:$0xff]
      %v3622 = vld [vmem:[%s2 + $0x28] sm:$0xff]
      %v3623 = vld [vmem:[%s2 + $0x30] sm:$0xff]
      %v3624 = vld [vmem:[%s2 + $0x38] sm:$0xff]
      %v3625 = vld [vmem:[%s2 + $0x40] sm:$0xff]
      %v3626 = vld [vmem:[%s2 + $0x48] sm:$0xff]
      %v3627 = vld [vmem:[%s2 + $0x50] sm:$0xff]
      %v3628 = vld [vmem:[%s2 + $0x58] sm:$0xff]
      %v3629 = vld [vmem:[%s2 + $0x60] sm:$0xff]
      %v3630 = vld [vmem:[%s2 + $0x68] sm:$0xff]
      %v3631 = vld [vmem:[%s2 + $0x70] sm:$0xff]
      %v3632 = vld [vmem:[%s2 + $0x78] sm:$0xff]
      %3633 = vmatprep.subr.mxu0 0.0
      %3634 = vmatpush1.msra.mxu0 %v3617
      %3635 = vmatprep.subr.mxu0 0.0
      %3636 = vmatpush1.msra.mxu0 %v3618
      %3637 = vmatprep.subr.mxu0 0.0
      %3638 = vmatpush1.msra.mxu0 %v3619
      %3639 = vmatprep.subr.mxu0 0.0
      %3640 = vmatpush1.msra.mxu0 %v3620
      %3641 = vmatprep.subr.mxu0 0.0
      %3642 = vmatpush1.msra.mxu0 %v3621
      %3643 = vmatprep.subr.mxu0 0.0
      %3644 = vmatpush1.msra.mxu0 %v3622
      %3645 = vmatprep.subr.mxu0 0.0
      %3646 = vmatpush1.msra.mxu0 %v3623
      %3647 = vmatprep.subr.mxu0 0.0
      %3648 = vmatpush1.msra.mxu0 %v3624
      %3649 = vmatprep.subr.mxu0 0.0
      %3650 = vmatpush1.msra.mxu0 %v3625
      %3651 = vmatprep.subr.mxu0 0.0
      %3652 = vmatpush1.msra.mxu0 %v3626
      %3653 = vmatprep.subr.mxu0 0.0
      %3654 = vmatpush1.msra.mxu0 %v3627
      %3655 = vmatprep.subr.mxu0 0.0
      %3656 = vmatpush1.msra.mxu0 %v3628
      %3657 = vmatprep.subr.mxu0 0.0
      %3658 = vmatpush1.msra.mxu0 %v3629
      %3659 = vmatprep.subr.mxu0 0.0
      %3660 = vmatpush1.msra.mxu0 %v3630
      %3661 = vmatprep.subr.mxu0 0.0
      %3662 = vmatpush1.msra.mxu0 %v3631
      %3663 = vmatprep.subr.mxu0 0.0
      %3664 = vmatpush1.msra.mxu0 %v3632
      %3665 = vmatprep.subr.mxu0 0.0
      %3666 = vmatpush1.msra.mxu0 0.0
      %3667 = vmatprep.subr.mxu0 0.0
      %3668 = vmatpush1.msra.mxu0 0.0
      %3669 = vmatprep.subr.mxu0 0.0
      %3670 = vmatpush1.msra.mxu0 0.0
      %3671 = vmatprep.subr.mxu0 0.0
      %3672 = vmatpush1.msra.mxu0 0.0
      %3673 = vmatprep.subr.mxu0 0.0
      %3674 = vmatpush1.msra.mxu0 0.0
      %3675 = vmatprep.subr.mxu0 0.0
      %3676 = vmatpush1.msra.mxu0 0.0
      %3677 = vmatprep.subr.mxu0 0.0
      %3678 = vmatpush1.msra.mxu0 0.0
      %3679 = vmatprep.subr.mxu0 0.0
      %3680 = vmatpush1.msra.mxu0 0.0
      %3681 = vmatprep.subr.mxu0 0.0
      %3682 = vmatpush1.msra.mxu0 0.0
      %3683 = vmatprep.subr.mxu0 0.0
      %3684 = vmatpush1.msra.mxu0 0.0
      %3685 = vmatprep.subr.mxu0 0.0
      %3686 = vmatpush1.msra.mxu0 0.0
      %3687 = vmatprep.subr.mxu0 0.0
      %3688 = vmatpush1.msra.mxu0 0.0
      %3689 = vmatprep.subr.mxu0 0.0
      %3690 = vmatpush1.msra.mxu0 0.0
      %3691 = vmatprep.subr.mxu0 0.0
      %3692 = vmatpush1.msra.mxu0 0.0
      %3693 = vmatprep.subr.mxu0 0.0
      %3694 = vmatpush1.msra.mxu0 0.0
      %3695 = vmatprep.subr.mxu0 0.0
      %3696 = vmatpush1.msra.mxu0 0.0
      %3697 = vmatprep.mubr.f32.mxu0 0.0
      %3698 = vmatmul.mubr.f32.gmra.mrb[0].mxu0 %v3609
      %v3699 = vpop.f32.mrb[0].mxu0
      %v3700 = vadd.f32 0.0, %v3699
      %v3701 = vpop.f32.mrb[0].mxu0
      %3702 = vmatprep.mubr.f32.mxu0 0.0
      %3703 = vmatmul.mubr.f32.gmra.mrb[0].mxu0 %v3614
      %v3704 = vpop.f32.mrb[0].mxu0
      %v3705 = vadd.f32 0.0, %v3704
      %v3706 = vpop.f32.mrb[0].mxu0
      %3707 = vdwg.mxu0
      %v3708 = vmul.f32 %v3700, %v3700
      %v3709 = vmul.f32 %v3705, %v3705
      %v3710 = vadd.f32 %v3708, %v3709
      %3711 = vadd.xlane.f32.xlu0 %v3710
      %v3712 = vpop.xlane.xlu0 %3711
      %v3713 = vrot.slane %v3712, 4
      %v3714 = vadd.f32 %v3712, %v3713
      %v3715 = vrot.slane %v3714, 2
      %v3716 = vadd.f32 %v3714, %v3715
      %v3717 = vrot.slane %v3716, 1
      %v3718 = vadd.f32 %v3716, %v3717
      %s3719 = vtos %v3718
      %v3720 = vstv %s3719
      %v3721 = vrcp.pop %v3720
      %v3722 = vmul.f32 %v3533, %v3721
      %v3723 = vld [vmem:[#allocation5] sm:$0xff]
      %v3724 = vld [vmem:[#allocation5 + $0x8] sm:$0xff]
      %v3726 = vlaneseq
      %v3727 = vshrl.u32 %v3726, 7
      %v3728 = vsub.s32 0, %v3727
      %v3729 = vrot.slane %v3722, %v3728
      %3730 = vset.pattern.permute.xlu0 0
      %3731 = vperm.xlu0 %3730, %v3729
      %v3732 = vpop.permute.xlu0 %3731
      %v3734 = vmul.f32 %v3732, %v3531
      %v3735 = vmul.f32 %v3732, %v3532
      %v3736 = vadd.f32 %v3723, %v3734
      %v3737 = vadd.f32 %v3724, %v3735
      %3738 = vst [vmem:[#allocation5] sm:$0xff] %v3736
      %3739 = vst [vmem:[#allocation5 + $0x8] sm:$0xff] %v3737
      %v3740 = vld [vmem:[#allocation7] sm:$0xff]
      %v3741 = vld [vmem:[#allocation7 + $0x8] sm:$0xff]
      %v3742 = vmul.f32 %v3732, %v3700
      %v3743 = vmul.f32 %v3732, %v3705
      %v3744 = vsub.f32 %v3740, %v3742
      %v3745 = vsub.f32 %v3741, %v3743
      %3746 = vst [vmem:[#allocation7] sm:$0xff] %v3744
      %3747 = vst [vmem:[#allocation7 + $0x8] sm:$0xff] %v3745
      %v3748 = vld [vmem:[%s1] sm:$0xff]
      %v3749 = vld [vmem:[%s1 + $0x8] sm:$0xff]
      %v3751 = vsel %vm35, %v3748, 0
      %v3754 = vsel %vm35, %v3749, 0
      %3756 = vmatprep.subr.mxu0 0.0
      %3757 = vmatpush1.msra.mxu0 %v3744
      %3758 = vmatprep.subr.mxu0 0.0
      %3759 = vmatpush1.msra.mxu0 %v3745
      %3760 = vmatprep.subr.mxu0 0.0
      %3761 = vmatpush1.msra.mxu0 0.0
      %3762 = vmatprep.subr.mxu0 0.0
      %3763 = vmatpush1.msra.mxu0 0.0
      %3764 = vmatprep.subr.mxu0 0.0
      %3765 = vmatpush1.msra.mxu0 0.0
      %3766 = vmatprep.subr.mxu0 0.0
      %3767 = vmatpush1.msra.mxu0 0.0
      %3768 = vmatprep.subr.mxu0 0.0
      %3769 = vmatpush1.msra.mxu0 0.0
      %3770 = vmatprep.subr.mxu0 0.0
      %3771 = vmatpush1.msra.mxu0 0.0
      %3772 = vmatprep.subr.mxu0 0.0
      %3773 = vmatpush1.msra.mxu0 0.0
      %3774 = vmatprep.subr.mxu0 0.0
      %3775 = vmatpush1.msra.mxu0 0.0
      %3776 = vmatprep.subr.mxu0 0.0
      %3777 = vmatpush1.msra.mxu0 0.0
      %3778 = vmatprep.subr.mxu0 0.0
      %3779 = vmatpush1.msra.mxu0 0.0
      %3780 = vmatprep.subr.mxu0 0.0
      %3781 = vmatpush1.msra.mxu0 0.0
      %3782 = vmatprep.subr.mxu0 0.0
      %3783 = vmatpush1.msra.mxu0 0.0
      %3784 = vmatprep.subr.mxu0 0.0
      %3785 = vmatpush1.msra.mxu0 0.0
      %3786 = vmatprep.subr.mxu0 0.0
      %3787 = vmatpush1.msra.mxu0 0.0
      %3788 = vmatprep.subr.mxu0 0.0
      %3789 = vmatpush1.msra.mxu0 0.0
      %3790 = vmatprep.subr.mxu0 0.0
      %3791 = vmatpush1.msra.mxu0 0.0
      %3792 = vmatprep.subr.mxu0 0.0
      %3793 = vmatpush1.msra.mxu0 0.0
      %3794 = vmatprep.subr.mxu0 0.0
      %3795 = vmatpush1.msra.mxu0 0.0
      %3796 = vmatprep.subr.mxu0 0.0
      %3797 = vmatpush1.msra.mxu0 0.0
      %3798 = vmatprep.subr.mxu0 0.0
      %3799 = vmatpush1.msra.mxu0 0.0
      %3800 = vmatprep.subr.mxu0 0.0
      %3801 = vmatpush1.msra.mxu0 0.0
      %3802 = vmatprep.subr.mxu0 0.0
      %3803 = vmatpush1.msra.mxu0 0.0
      %3804 = vmatprep.subr.mxu0 0.0
      %3805 = vmatpush1.msra.mxu0 0.0
      %3806 = vmatprep.subr.mxu0 0.0
      %3807 = vmatpush1.msra.mxu0 0.0
      %3808 = vmatprep.subr.mxu0 0.0
      %3809 = vmatpush1.msra.mxu0 0.0
      %3810 = vmatprep.subr.mxu0 0.0
      %3811 = vmatpush1.msra.mxu0 0.0
      %3812 = vmatprep.subr.mxu0 0.0
      %3813 = vmatpush1.msra.mxu0 0.0
      %3814 = vmatprep.subr.mxu0 0.0
      %3815 = vmatpush1.msra.mxu0 0.0
      %3816 = vmatprep.subr.mxu0 0.0
      %3817 = vmatpush1.msra.mxu0 0.0
      %3818 = vmatprep.subr.mxu0 0.0
      %3819 = vmatpush1.msra.mxu0 0.0
      %3820 = vmatprep.mubr.f32.mxu0 0.0
      %3821 = vmatmul.mubr.f32.gmra.mrb[0].mxu0 %v3751
      %v3822 = vpop.f32.mrb[0].mxu0
      %v3823 = vadd.f32 0.0, %v3822
      %v3824 = vpop.f32.mrb[0].mxu0
      %3825 = vmatprep.mubr.f32.mxu0 0.0
      %3826 = vmatmul.mubr.f32.gmra.mrb[0].mxu0 %v3754
      %v3827 = vpop.f32.mrb[0].mxu0
      %v3828 = vadd.f32 0.0, %v3827
      %v3829 = vpop.f32.mrb[0].mxu0
      %3830 = vdwg.mxu0
      %v3831 = vld [vmem:[%s3] sm:$0xff]
      %v3832 = vld [vmem:[%s3 + $0x8] sm:$0xff]
      %v3833 = vld [vmem:[%s3 + $0x10] sm:$0xff]
      %v3834 = vld [vmem:[%s3 + $0x18] sm:$0xff]
      %v3835 = vld [vmem:[%s3 + $0x20] sm:$0xff]
      %v3836 = vld [vmem:[%s3 + $0x28] sm:$0xff]
      %v3837 = vld [vmem:[%s3 + $0x30] sm:$0xff]
      %v3838 = vld [vmem:[%s3 + $0x38] sm:$0xff]
      %v3839 = vld [vmem:[%s3 + $0x40] sm:$0xff]
      %v3840 = vld [vmem:[%s3 + $0x48] sm:$0xff]
      %v3841 = vld [vmem:[%s3 + $0x50] sm:$0xff]
      %v3842 = vld [vmem:[%s3 + $0x58] sm:$0xff]
      %v3843 = vld [vmem:[%s3 + $0x60] sm:$0xff]
      %v3844 = vld [vmem:[%s3 + $0x68] sm:$0xff]
      %v3845 = vld [vmem:[%s3 + $0x70] sm:$0xff]
      %v3846 = vld [vmem:[%s3 + $0x78] sm:$0xff]
      %3847 = vmatprep.subr.mxu0 0.0
      %3848 = vmatpush1.msra.mxu0 %v3831
      %3849 = vmatprep.subr.mxu0 0.0
      %3850 = vmatpush1.msra.mxu0 %v3832
      %3851 = vmatprep.subr.mxu0 0.0
      %3852 = vmatpush1.msra.mxu0 %v3833
      %3853 = vmatprep.subr.mxu0 0.0
      %3854 = vmatpush1.msra.mxu0 %v3834
      %3855 = vmatprep.subr.mxu0 0.0
      %3856 = vmatpush1.msra.mxu0 %v3835
      %3857 = vmatprep.subr.mxu0 0.0
      %3858 = vmatpush1.msra.mxu0 %v3836
      %3859 = vmatprep.subr.mxu0 0.0
      %3860 = vmatpush1.msra.mxu0 %v3837
      %3861 = vmatprep.subr.mxu0 0.0
      %3862 = vmatpush1.msra.mxu0 %v3838
      %3863 = vmatprep.subr.mxu0 0.0
      %3864 = vmatpush1.msra.mxu0 %v3839
      %3865 = vmatprep.subr.mxu0 0.0
      %3866 = vmatpush1.msra.mxu0 %v3840
      %3867 = vmatprep.subr.mxu0 0.0
      %3868 = vmatpush1.msra.mxu0 %v3841
      %3869 = vmatprep.subr.mxu0 0.0
      %3870 = vmatpush1.msra.mxu0 %v3842
      %3871 = vmatprep.subr.mxu0 0.0
      %3872 = vmatpush1.msra.mxu0 %v3843
      %3873 = vmatprep.subr.mxu0 0.0
      %3874 = vmatpush1.msra.mxu0 %v3844
      %3875 = vmatprep.subr.mxu0 0.0
      %3876 = vmatpush1.msra.mxu0 %v3845
      %3877 = vmatprep.subr.mxu0 0.0
      %3878 = vmatpush1.msra.mxu0 %v3846
      %3879 = vmatprep.subr.mxu0 0.0
      %3880 = vmatpush1.msra.mxu0 0.0
      %3881 = vmatprep.subr.mxu0 0.0
      %3882 = vmatpush1.msra.mxu0 0.0
      %3883 = vmatprep.subr.mxu0 0.0
      %3884 = vmatpush1.msra.mxu0 0.0
      %3885 = vmatprep.subr.mxu0 0.0
      %3886 = vmatpush1.msra.mxu0 0.0
      %3887 = vmatprep.subr.mxu0 0.0
      %3888 = vmatpush1.msra.mxu0 0.0
      %3889 = vmatprep.subr.mxu0 0.0
      %3890 = vmatpush1.msra.mxu0 0.0
      %3891 = vmatprep.subr.mxu0 0.0
      %3892 = vmatpush1.msra.mxu0 0.0
      %3893 = vmatprep.subr.mxu0 0.0
      %3894 = vmatpush1.msra.mxu0 0.0
      %3895 = vmatprep.subr.mxu0 0.0
      %3896 = vmatpush1.msra.mxu0 0.0
      %3897 = vmatprep.subr.mxu0 0.0
      %3898 = vmatpush1.msra.mxu0 0.0
      %3899 = vmatprep.subr.mxu0 0.0
      %3900 = vmatpush1.msra.mxu0 0.0
      %3901 = vmatprep.subr.mxu0 0.0
      %3902 = vmatpush1.msra.mxu0 0.0
      %3903 = vmatprep.subr.mxu0 0.0
      %3904 = vmatpush1.msra.mxu0 0.0
      %3905 = vmatprep.subr.mxu0 0.0
      %3906 = vmatpush1.msra.mxu0 0.0
      %3907 = vmatprep.subr.mxu0 0.0
      %3908 = vmatpush1.msra.mxu0 0.0
      %3909 = vmatprep.subr.mxu0 0.0
      %3910 = vmatpush1.msra.mxu0 0.0
      %3911 = vmatprep.mubr.f32.mxu0 0.0
      %3912 = vmatmul.mubr.f32.gmra.mrb[0].mxu0 %v3823
      %v3913 = vpop.f32.mrb[0].mxu0
      %v3914 = vadd.f32 0.0, %v3913
      %v3915 = vpop.f32.mrb[0].mxu0
      %3916 = vmatprep.mubr.f32.mxu0 0.0
      %3917 = vmatmul.mubr.f32.gmra.mrb[0].mxu0 %v3828
      %v3918 = vpop.f32.mrb[0].mxu0
      %v3919 = vadd.f32 0.0, %v3918
      %v3920 = vpop.f32.mrb[0].mxu0
      %3921 = vdwg.mxu0
      %v3922 = vmul.f32 %v3914, %v3914
      %v3923 = vmul.f32 %v3919, %v3919
      %v3924 = vadd.f32 %v3922, %v3923
      %3925 = vadd.xlane.f32.xlu0 %v3924
      %v3926 = vpop.xlane.xlu0 %3925
      %v3927 = vrot.slane %v3926, 4
      %v3928 = vadd.f32 %v3926, %v3927
      %v3929 = vrot.slane %v3928, 2
      %v3930 = vadd.f32 %v3928, %v3929
      %v3931 = vrot.slane %v3930, 1
      %v3932 = vadd.f32 %v3930, %v3931
      %s3933 = vtos %v3932
      %v3934 = vstv %s3933
      %v3935 = vrcp.pop %v3533
      %v3936 = vmul.f32 %v3934, %v3935
      %v3938 = vlaneseq
      %v3939 = vshrl.u32 %v3938, 7
      %v3940 = vsub.s32 0, %v3939
      %v3941 = vrot.slane %v3936, %v3940
      %3942 = vset.pattern.permute.xlu0 0
      %3943 = vperm.xlu0 %3942, %v3941
      %v3944 = vpop.permute.xlu0 %3943
      %v3946 = vmul.f32 %v3944, %v3531
      %v3947 = vmul.f32 %v3944, %v3532
      %v3948 = vadd.f32 %v3914, %v3946
      %v3949 = vadd.f32 %v3919, %v3947
      %3950 = vst [vmem:[#allocation2] sm:$0xff] %v3948
      %3951 = vst [vmem:[#allocation2 + $0x8] sm:$0xff] %v3949
      %3952 = vst.msk [vmem:[#allocation3] sm:$0x1] %vm430, %v3934
      %v3953 = vmul.f32 %v3744, %v3744
      %v3954 = vmul.f32 %v3745, %v3745
      %v3955 = vadd.f32 %v3953, %v3954
      %3956 = vadd.xlane.f32.xlu0 %v3955
      %v3957 = vpop.xlane.xlu0 %3956
      %v3958 = vrot.slane %v3957, 4
      %v3959 = vadd.f32 %v3957, %v3958
      %v3960 = vrot.slane %v3959, 2
      %v3961 = vadd.f32 %v3959, %v3960
      %v3962 = vrot.slane %v3961, 1
      %v3963 = vadd.f32 %v3961, %v3962
      %s3964 = vtos %v3963
      %p3965 = scmp.lt.f32.partialorder %s3964, %s224
      %s3966 = scalar_select %p3965, 1, 0
      %3967 = sst [smem:[%s239]] %s3966
    $region57: #{graph_cgls_forward.1} parent=1 // pred_fallthru
      _
    %s3968 = sld [smem:[#allocation4]]
    %p3969 = scmp.eq.s32.totalorder %s3968, 0
    // Predicated region
    $region58: #{graph_cgls_forward.1} parent=1 // pred_check
      %p3970 = pneg %p3969
    $region59: #{graph_cgls_forward.1} parent=1 // pred_check_branch
      %3972 = sbr.rel (%p3970) target = $region61
    $region60: #{graph_cgls_forward.1} parent=1 // pred_region
      %v3973 = vld [vmem:[#allocation2] sm:$0xff]
      %v3974 = vld [vmem:[#allocation2 + $0x8] sm:$0xff]
      %v3975 = vld [vmem:[#allocation3] sm:$0x1]
      %v3976 = vld [vmem:[%s0] sm:$0xff]
      %v3977 = vld [vmem:[%s0 + $0x8] sm:$0xff]
      %v3979 = vsel %vm35, %v3976, 0
      %v3982 = vsel %vm35, %v3977, 0
      %3984 = vmatprep.subr.mxu0 0.0
      %3985 = vmatpush1.msra.mxu0 %v3973
      %3986 = vmatprep.subr.mxu0 0.0
      %3987 = vmatpush1.msra.mxu0 %v3974
      %3988 = vmatprep.subr.mxu0 0.0
      %3989 = vmatpush1.msra.mxu0 0.0
      %3990 = vmatprep.subr.mxu0 0.0
      %3991 = vmatpush1.msra.mxu0 0.0
      %3992 = vmatprep.subr.mxu0 0.0
      %3993 = vmatpush1.msra.mxu0 0.0
      %3994 = vmatprep.subr.mxu0 0.0
      %3995 = vmatpush1.msra.mxu0 0.0
      %3996 = vmatprep.subr.mxu0 0.0
      %3997 = vmatpush1.msra.mxu0 0.0
      %3998 = vmatprep.subr.mxu0 0.0
      %3999 = vmatpush1.msra.mxu0 0.0
      %4000 = vmatprep.subr.mxu0 0.0
      %4001 = vmatpush1.msra.mxu0 0.0
      %4002 = vmatprep.subr.mxu0 0.0
      %4003 = vmatpush1.msra.mxu0 0.0
      %4004 = vmatprep.subr.mxu0 0.0
      %4005 = vmatpush1.msra.mxu0 0.0
      %4006 = vmatprep.subr.mxu0 0.0
      %4007 = vmatpush1.msra.mxu0 0.0
      %4008 = vmatprep.subr.mxu0 0.0
      %4009 = vmatpush1.msra.mxu0 0.0
      %4010 = vmatprep.subr.mxu0 0.0
      %4011 = vmatpush1.msra.mxu0 0.0
      %4012 = vmatprep.subr.mxu0 0.0
      %4013 = vmatpush1.msra.mxu0 0.0
      %4014 = vmatprep.subr.mxu0 0.0
      %4015 = vmatpush1.msra.mxu0 0.0
      %4016 = vmatprep.subr.mxu0 0.0
      %4017 = vmatpush1.msra.mxu0 0.0
      %4018 = vmatprep.subr.mxu0 0.0
      %4019 = vmatpush1.msra.mxu0 0.0
      %4020 = vmatprep.subr.mxu0 0.0
      %4021 = vmatpush1.msra.mxu0 0.0
      %4022 = vmatprep.subr.mxu0 0.0
      %4023 = vmatpush1.msra.mxu0 0.0
      %4024 = vmatprep.subr.mxu0 0.0
      %4025 = vmatpush1.msra.mxu0 0.0
      %4026 = vmatprep.subr.mxu0 0.0
      %4027 = vmatpush1.msra.mxu0 0.0
      %4028 = vmatprep.subr.mxu0 0.0
      %4029 = vmatpush1.msra.mxu0 0.0
      %4030 = vmatprep.subr.mxu0 0.0
      %4031 = vmatpush1.msra.mxu0 0.0
      %4032 = vmatprep.subr.mxu0 0.0
      %4033 = vmatpush1.msra.mxu0 0.0
      %4034 = vmatprep.subr.mxu0 0.0
      %4035 = vmatpush1.msra.mxu0 0.0
      %4036 = vmatprep.subr.mxu0 0.0
      %4037 = vmatpush1.msra.mxu0 0.0
      %4038 = vmatprep.subr.mxu0 0.0
      %4039 = vmatpush1.msra.mxu0 0.0
      %4040 = vmatprep.subr.mxu0 0.0
      %4041 = vmatpush1.msra.mxu0 0.0
      %4042 = vmatprep.subr.mxu0 0.0
      %4043 = vmatpush1.msra.mxu0 0.0
      %4044 = vmatprep.subr.mxu0 0.0
      %4045 = vmatpush1.msra.mxu0 0.0
      %4046 = vmatprep.subr.mxu0 0.0
      %4047 = vmatpush1.msra.mxu0 0.0
      %4048 = vmatprep.mubr.f32.mxu0 0.0
      %4049 = vmatmul.mubr.f32.gmra.mrb[0].mxu0 %v3979
      %v4050 = vpop.f32.mrb[0].mxu0
      %v4051 = vadd.f32 0.0, %v4050
      %v4052 = vpop.f32.mrb[0].mxu0
      %4053 = vmatprep.mubr.f32.mxu0 0.0
      %4054 = vmatmul.mubr.f32.gmra.mrb[0].mxu0 %v3982
      %v4055 = vpop.f32.mrb[0].mxu0
      %v4056 = vadd.f32 0.0, %v4055
      %v4057 = vpop.f32.mrb[0].mxu0
      %4058 = vdwg.mxu0
      %v4059 = vld [vmem:[%s2] sm:$0xff]
      %v4060 = vld [vmem:[%s2 + $0x8] sm:$0xff]
      %v4061 = vld [vmem:[%s2 + $0x10] sm:$0xff]
      %v4062 = vld [vmem:[%s2 + $0x18] sm:$0xff]
      %v4063 = vld [vmem:[%s2 + $0x20] sm:$0xff]
      %v4064 = vld [vmem:[%s2 + $0x28] sm:$0xff]
      %v4065 = vld [vmem:[%s2 + $0x30] sm:$0xff]
      %v4066 = vld [vmem:[%s2 + $0x38] sm:$0xff]
      %v4067 = vld [vmem:[%s2 + $0x40] sm:$0xff]
      %v4068 = vld [vmem:[%s2 + $0x48] sm:$0xff]
      %v4069 = vld [vmem:[%s2 + $0x50] sm:$0xff]
      %v4070 = vld [vmem:[%s2 + $0x58] sm:$0xff]
      %v4071 = vld [vmem:[%s2 + $0x60] sm:$0xff]
      %v4072 = vld [vmem:[%s2 + $0x68] sm:$0xff]
      %v4073 = vld [vmem:[%s2 + $0x70] sm:$0xff]
      %v4074 = vld [vmem:[%s2 + $0x78] sm:$0xff]
      %4075 = vmatprep.subr.mxu0 0.0
      %4076 = vmatpush1.msra.mxu0 %v4059
      %4077 = vmatprep.subr.mxu0 0.0
      %4078 = vmatpush1.msra.mxu0 %v4060
      %4079 = vmatprep.subr.mxu0 0.0
      %4080 = vmatpush1.msra.mxu0 %v4061
      %4081 = vmatprep.subr.mxu0 0.0
      %4082 = vmatpush1.msra.mxu0 %v4062
      %4083 = vmatprep.subr.mxu0 0.0
      %4084 = vmatpush1.msra.mxu0 %v4063
      %4085 = vmatprep.subr.mxu0 0.0
      %4086 = vmatpush1.msra.mxu0 %v4064
      %4087 = vmatprep.subr.mxu0 0.0
      %4088 = vmatpush1.msra.mxu0 %v4065
      %4089 = vmatprep.subr.mxu0 0.0
      %4090 = vmatpush1.msra.mxu0 %v4066
      %4091 = vmatprep.subr.mxu0 0.0
      %4092 = vmatpush1.msra.mxu0 %v4067
      %4093 = vmatprep.subr.mxu0 0.0
      %4094 = vmatpush1.msra.mxu0 %v4068
      %4095 = vmatprep.subr.mxu0 0.0
      %4096 = vmatpush1.msra.mxu0 %v4069
      %4097 = vmatprep.subr.mxu0 0.0
      %4098 = vmatpush1.msra.mxu0 %v4070
      %4099 = vmatprep.subr.mxu0 0.0
      %4100 = vmatpush1.msra.mxu0 %v4071
      %4101 = vmatprep.subr.mxu0 0.0
      %4102 = vmatpush1.msra.mxu0 %v4072
      %4103 = vmatprep.subr.mxu0 0.0
      %4104 = vmatpush1.msra.mxu0 %v4073
      %4105 = vmatprep.subr.mxu0 0.0
      %4106 = vmatpush1.msra.mxu0 %v4074
      %4107 = vmatprep.subr.mxu0 0.0
      %4108 = vmatpush1.msra.mxu0 0.0
      %4109 = vmatprep.subr.mxu0 0.0
      %4110 = vmatpush1.msra.mxu0 0.0
      %4111 = vmatprep.subr.mxu0 0.0
      %4112 = vmatpush1.msra.mxu0 0.0
      %4113 = vmatprep.subr.mxu0 0.0
      %4114 = vmatpush1.msra.mxu0 0.0
      %4115 = vmatprep.subr.mxu0 0.0
      %4116 = vmatpush1.msra.mxu0 0.0
      %4117 = vmatprep.subr.mxu0 0.0
      %4118 = vmatpush1.msra.mxu0 0.0
      %4119 = vmatprep.subr.mxu0 0.0
      %4120 = vmatpush1.msra.mxu0 0.0
      %4121 = vmatprep.subr.mxu0 0.0
      %4122 = vmatpush1.msra.mxu0 0.0
      %4123 = vmatprep.subr.mxu0 0.0
      %4124 = vmatpush1.msra.mxu0 0.0
      %4125 = vmatprep.subr.mxu0 0.0
      %4126 = vmatpush1.msra.mxu0 0.0
      %4127 = vmatprep.subr.mxu0 0.0
      %4128 = vmatpush1.msra.mxu0 0.0
      %4129 = vmatprep.subr.mxu0 0.0
      %4130 = vmatpush1.msra.mxu0 0.0
      %4131 = vmatprep.subr.mxu0 0.0
      %4132 = vmatpush1.msra.mxu0 0.0
      %4133 = vmatprep.subr.mxu0 0.0
      %4134 = vmatpush1.msra.mxu0 0.0
      %4135 = vmatprep.subr.mxu0 0.0
      %4136 = vmatpush1.msra.mxu0 0.0
      %4137 = vmatprep.subr.mxu0 0.0
      %4138 = vmatpush1.msra.mxu0 0.0
      %4139 = vmatprep.mubr.f32.mxu0 0.0
      %4140 = vmatmul.mubr.f32.gmra.mrb[0].mxu0 %v4051
      %v4141 = vpop.f32.mrb[0].mxu0
      %v4142 = vadd.f32 0.0, %v4141
      %v4143 = vpop.f32.mrb[0].mxu0
      %4144 = vmatprep.mubr.f32.mxu0 0.0
      %4145 = vmatmul.mubr.f32.gmra.mrb[0].mxu0 %v4056
      %v4146 = vpop.f32.mrb[0].mxu0
      %v4147 = vadd.f32 0.0, %v4146
      %v4148 = vpop.f32.mrb[0].mxu0
      %4149 = vdwg.mxu0
      %v4150 = vmul.f32 %v4142, %v4142
      %v4151 = vmul.f32 %v4147, %v4147
      %v4152 = vadd.f32 %v4150, %v4151
      %4153 = vadd.xlane.f32.xlu0 %v4152
      %v4154 = vpop.xlane.xlu0 %4153
      %v4155 = vrot.slane %v4154, 4
      %v4156 = vadd.f32 %v4154, %v4155
      %v4157 = vrot.slane %v4156, 2
      %v4158 = vadd.f32 %v4156, %v4157
      %v4159 = vrot.slane %v4158, 1
      %v4160 = vadd.f32 %v4158, %v4159
      %s4161 = vtos %v4160
      %v4162 = vstv %s4161
      %v4163 = vrcp.pop %v4162
      %v4164 = vmul.f32 %v3975, %v4163
      %v4165 = vld [vmem:[#allocation5] sm:$0xff]
      %v4166 = vld [vmem:[#allocation5 + $0x8] sm:$0xff]
      %v4168 = vlaneseq
      %v4169 = vshrl.u32 %v4168, 7
      %v4170 = vsub.s32 0, %v4169
      %v4171 = vrot.slane %v4164, %v4170
      %4172 = vset.pattern.permute.xlu0 0
      %4173 = vperm.xlu0 %4172, %v4171
      %v4174 = vpop.permute.xlu0 %4173
      %v4176 = vmul.f32 %v4174, %v3973
      %v4177 = vmul.f32 %v4174, %v3974
      %v4178 = vadd.f32 %v4165, %v4176
      %v4179 = vadd.f32 %v4166, %v4177
      %4180 = vst [vmem:[#allocation5] sm:$0xff] %v4178
      %4181 = vst [vmem:[#allocation5 + $0x8] sm:$0xff] %v4179
      %v4182 = vld [vmem:[#allocation7] sm:$0xff]
      %v4183 = vld [vmem:[#allocation7 + $0x8] sm:$0xff]
      %v4184 = vmul.f32 %v4174, %v4142
      %v4185 = vmul.f32 %v4174, %v4147
      %v4186 = vsub.f32 %v4182, %v4184
      %v4187 = vsub.f32 %v4183, %v4185
      %4188 = vst [vmem:[#allocation7] sm:$0xff] %v4186
      %4189 = vst [vmem:[#allocation7 + $0x8] sm:$0xff] %v4187
      %v4190 = vld [vmem:[%s1] sm:$0xff]
      %v4191 = vld [vmem:[%s1 + $0x8] sm:$0xff]
      %v4193 = vsel %vm35, %v4190, 0
      %v4196 = vsel %vm35, %v4191, 0
      %4198 = vmatprep.subr.mxu0 0.0
      %4199 = vmatpush1.msra.mxu0 %v4186
      %4200 = vmatprep.subr.mxu0 0.0
      %4201 = vmatpush1.msra.mxu0 %v4187
      %4202 = vmatprep.subr.mxu0 0.0
      %4203 = vmatpush1.msra.mxu0 0.0
      %4204 = vmatprep.subr.mxu0 0.0
      %4205 = vmatpush1.msra.mxu0 0.0
      %4206 = vmatprep.subr.mxu0 0.0
      %4207 = vmatpush1.msra.mxu0 0.0
      %4208 = vmatprep.subr.mxu0 0.0
      %4209 = vmatpush1.msra.mxu0 0.0
      %4210 = vmatprep.subr.mxu0 0.0
      %4211 = vmatpush1.msra.mxu0 0.0
      %4212 = vmatprep.subr.mxu0 0.0
      %4213 = vmatpush1.msra.mxu0 0.0
      %4214 = vmatprep.subr.mxu0 0.0
      %4215 = vmatpush1.msra.mxu0 0.0
      %4216 = vmatprep.subr.mxu0 0.0
      %4217 = vmatpush1.msra.mxu0 0.0
      %4218 = vmatprep.subr.mxu0 0.0
      %4219 = vmatpush1.msra.mxu0 0.0
      %4220 = vmatprep.subr.mxu0 0.0
      %4221 = vmatpush1.msra.mxu0 0.0
      %4222 = vmatprep.subr.mxu0 0.0
      %4223 = vmatpush1.msra.mxu0 0.0
      %4224 = vmatprep.subr.mxu0 0.0
      %4225 = vmatpush1.msra.mxu0 0.0
      %4226 = vmatprep.subr.mxu0 0.0
      %4227 = vmatpush1.msra.mxu0 0.0
      %4228 = vmatprep.subr.mxu0 0.0
      %4229 = vmatpush1.msra.mxu0 0.0
      %4230 = vmatprep.subr.mxu0 0.0
      %4231 = vmatpush1.msra.mxu0 0.0
      %4232 = vmatprep.subr.mxu0 0.0
      %4233 = vmatpush1.msra.mxu0 0.0
      %4234 = vmatprep.subr.mxu0 0.0
      %4235 = vmatpush1.msra.mxu0 0.0
      %4236 = vmatprep.subr.mxu0 0.0
      %4237 = vmatpush1.msra.mxu0 0.0
      %4238 = vmatprep.subr.mxu0 0.0
      %4239 = vmatpush1.msra.mxu0 0.0
      %4240 = vmatprep.subr.mxu0 0.0
      %4241 = vmatpush1.msra.mxu0 0.0
      %4242 = vmatprep.subr.mxu0 0.0
      %4243 = vmatpush1.msra.mxu0 0.0
      %4244 = vmatprep.subr.mxu0 0.0
      %4245 = vmatpush1.msra.mxu0 0.0
      %4246 = vmatprep.subr.mxu0 0.0
      %4247 = vmatpush1.msra.mxu0 0.0
      %4248 = vmatprep.subr.mxu0 0.0
      %4249 = vmatpush1.msra.mxu0 0.0
      %4250 = vmatprep.subr.mxu0 0.0
      %4251 = vmatpush1.msra.mxu0 0.0
      %4252 = vmatprep.subr.mxu0 0.0
      %4253 = vmatpush1.msra.mxu0 0.0
      %4254 = vmatprep.subr.mxu0 0.0
      %4255 = vmatpush1.msra.mxu0 0.0
      %4256 = vmatprep.subr.mxu0 0.0
      %4257 = vmatpush1.msra.mxu0 0.0
      %4258 = vmatprep.subr.mxu0 0.0
      %4259 = vmatpush1.msra.mxu0 0.0
      %4260 = vmatprep.subr.mxu0 0.0
      %4261 = vmatpush1.msra.mxu0 0.0
      %4262 = vmatprep.mubr.f32.mxu0 0.0
      %4263 = vmatmul.mubr.f32.gmra.mrb[0].mxu0 %v4193
      %v4264 = vpop.f32.mrb[0].mxu0
      %v4265 = vadd.f32 0.0, %v4264
      %v4266 = vpop.f32.mrb[0].mxu0
      %4267 = vmatprep.mubr.f32.mxu0 0.0
      %4268 = vmatmul.mubr.f32.gmra.mrb[0].mxu0 %v4196
      %v4269 = vpop.f32.mrb[0].mxu0
      %v4270 = vadd.f32 0.0, %v4269
      %v4271 = vpop.f32.mrb[0].mxu0
      %4272 = vdwg.mxu0
      %v4273 = vld [vmem:[%s3] sm:$0xff]
      %v4274 = vld [vmem:[%s3 + $0x8] sm:$0xff]
      %v4275 = vld [vmem:[%s3 + $0x10] sm:$0xff]
      %v4276 = vld [vmem:[%s3 + $0x18] sm:$0xff]
      %v4277 = vld [vmem:[%s3 + $0x20] sm:$0xff]
      %v4278 = vld [vmem:[%s3 + $0x28] sm:$0xff]
      %v4279 = vld [vmem:[%s3 + $0x30] sm:$0xff]
      %v4280 = vld [vmem:[%s3 + $0x38] sm:$0xff]
      %v4281 = vld [vmem:[%s3 + $0x40] sm:$0xff]
      %v4282 = vld [vmem:[%s3 + $0x48] sm:$0xff]
      %v4283 = vld [vmem:[%s3 + $0x50] sm:$0xff]
      %v4284 = vld [vmem:[%s3 + $0x58] sm:$0xff]
      %v4285 = vld [vmem:[%s3 + $0x60] sm:$0xff]
      %v4286 = vld [vmem:[%s3 + $0x68] sm:$0xff]
      %v4287 = vld [vmem:[%s3 + $0x70] sm:$0xff]
      %v4288 = vld [vmem:[%s3 + $0x78] sm:$0xff]
      %4289 = vmatprep.subr.mxu0 0.0
      %4290 = vmatpush1.msra.mxu0 %v4273
      %4291 = vmatprep.subr.mxu0 0.0
      %4292 = vmatpush1.msra.mxu0 %v4274
      %4293 = vmatprep.subr.mxu0 0.0
      %4294 = vmatpush1.msra.mxu0 %v4275
      %4295 = vmatprep.subr.mxu0 0.0
      %4296 = vmatpush1.msra.mxu0 %v4276
      %4297 = vmatprep.subr.mxu0 0.0
      %4298 = vmatpush1.msra.mxu0 %v4277
      %4299 = vmatprep.subr.mxu0 0.0
      %4300 = vmatpush1.msra.mxu0 %v4278
      %4301 = vmatprep.subr.mxu0 0.0
      %4302 = vmatpush1.msra.mxu0 %v4279
      %4303 = vmatprep.subr.mxu0 0.0
      %4304 = vmatpush1.msra.mxu0 %v4280
      %4305 = vmatprep.subr.mxu0 0.0
      %4306 = vmatpush1.msra.mxu0 %v4281
      %4307 = vmatprep.subr.mxu0 0.0
      %4308 = vmatpush1.msra.mxu0 %v4282
      %4309 = vmatprep.subr.mxu0 0.0
      %4310 = vmatpush1.msra.mxu0 %v4283
      %4311 = vmatprep.subr.mxu0 0.0
      %4312 = vmatpush1.msra.mxu0 %v4284
      %4313 = vmatprep.subr.mxu0 0.0
      %4314 = vmatpush1.msra.mxu0 %v4285
      %4315 = vmatprep.subr.mxu0 0.0
      %4316 = vmatpush1.msra.mxu0 %v4286
      %4317 = vmatprep.subr.mxu0 0.0
      %4318 = vmatpush1.msra.mxu0 %v4287
      %4319 = vmatprep.subr.mxu0 0.0
      %4320 = vmatpush1.msra.mxu0 %v4288
      %4321 = vmatprep.subr.mxu0 0.0
      %4322 = vmatpush1.msra.mxu0 0.0
      %4323 = vmatprep.subr.mxu0 0.0
      %4324 = vmatpush1.msra.mxu0 0.0
      %4325 = vmatprep.subr.mxu0 0.0
      %4326 = vmatpush1.msra.mxu0 0.0
      %4327 = vmatprep.subr.mxu0 0.0
      %4328 = vmatpush1.msra.mxu0 0.0
      %4329 = vmatprep.subr.mxu0 0.0
      %4330 = vmatpush1.msra.mxu0 0.0
      %4331 = vmatprep.subr.mxu0 0.0
      %4332 = vmatpush1.msra.mxu0 0.0
      %4333 = vmatprep.subr.mxu0 0.0
      %4334 = vmatpush1.msra.mxu0 0.0
      %4335 = vmatprep.subr.mxu0 0.0
      %4336 = vmatpush1.msra.mxu0 0.0
      %4337 = vmatprep.subr.mxu0 0.0
      %4338 = vmatpush1.msra.mxu0 0.0
      %4339 = vmatprep.subr.mxu0 0.0
      %4340 = vmatpush1.msra.mxu0 0.0
      %4341 = vmatprep.subr.mxu0 0.0
      %4342 = vmatpush1.msra.mxu0 0.0
      %4343 = vmatprep.subr.mxu0 0.0
      %4344 = vmatpush1.msra.mxu0 0.0
      %4345 = vmatprep.subr.mxu0 0.0
      %4346 = vmatpush1.msra.mxu0 0.0
      %4347 = vmatprep.subr.mxu0 0.0
      %4348 = vmatpush1.msra.mxu0 0.0
      %4349 = vmatprep.subr.mxu0 0.0
      %4350 = vmatpush1.msra.mxu0 0.0
      %4351 = vmatprep.subr.mxu0 0.0
      %4352 = vmatpush1.msra.mxu0 0.0
      %4353 = vmatprep.mubr.f32.mxu0 0.0
      %4354 = vmatmul.mubr.f32.gmra.mrb[0].mxu0 %v4265
      %v4355 = vpop.f32.mrb[0].mxu0
      %v4356 = vadd.f32 0.0, %v4355
      %v4357 = vpop.f32.mrb[0].mxu0
      %4358 = vmatprep.mubr.f32.mxu0 0.0
      %4359 = vmatmul.mubr.f32.gmra.mrb[0].mxu0 %v4270
      %v4360 = vpop.f32.mrb[0].mxu0
      %v4361 = vadd.f32 0.0, %v4360
      %v4362 = vpop.f32.mrb[0].mxu0
      %4363 = vdwg.mxu0
      %v4364 = vmul.f32 %v4356, %v4356
      %v4365 = vmul.f32 %v4361, %v4361
      %v4366 = vadd.f32 %v4364, %v4365
      %4367 = vadd.xlane.f32.xlu0 %v4366
      %v4368 = vpop.xlane.xlu0 %4367
      %v4369 = vrot.slane %v4368, 4
      %v4370 = vadd.f32 %v4368, %v4369
      %v4371 = vrot.slane %v4370, 2
      %v4372 = vadd.f32 %v4370, %v4371
      %v4373 = vrot.slane %v4372, 1
      %v4374 = vadd.f32 %v4372, %v4373
      %s4375 = vtos %v4374
      %v4376 = vstv %s4375
      %v4377 = vrcp.pop %v3975
      %v4378 = vmul.f32 %v4376, %v4377
      %v4380 = vlaneseq
      %v4381 = vshrl.u32 %v4380, 7
      %v4382 = vsub.s32 0, %v4381
      %v4383 = vrot.slane %v4378, %v4382
      %4384 = vset.pattern.permute.xlu0 0
      %4385 = vperm.xlu0 %4384, %v4383
      %v4386 = vpop.permute.xlu0 %4385
      %v4388 = vmul.f32 %v4386, %v3973
      %v4389 = vmul.f32 %v4386, %v3974
      %v4390 = vadd.f32 %v4356, %v4388
      %v4391 = vadd.f32 %v4361, %v4389
      %4392 = vst [vmem:[#allocation2] sm:$0xff] %v4390
      %4393 = vst [vmem:[#allocation2 + $0x8] sm:$0xff] %v4391
      %4394 = vst.msk [vmem:[#allocation3] sm:$0x1] %vm430, %v4376
      %v4395 = vmul.f32 %v4186, %v4186
      %v4396 = vmul.f32 %v4187, %v4187
      %v4397 = vadd.f32 %v4395, %v4396
      %4398 = vadd.xlane.f32.xlu0 %v4397
      %v4399 = vpop.xlane.xlu0 %4398
      %v4400 = vrot.slane %v4399, 4
      %v4401 = vadd.f32 %v4399, %v4400
      %v4402 = vrot.slane %v4401, 2
      %v4403 = vadd.f32 %v4401, %v4402
      %v4404 = vrot.slane %v4403, 1
      %v4405 = vadd.f32 %v4403, %v4404
      %s4406 = vtos %v4405
      %p4407 = scmp.lt.f32.partialorder %s4406, %s224
      %s4408 = scalar_select %p4407, 1, 0
      %4409 = sst [smem:[%s239]] %s4408
    $region61: #{graph_cgls_forward.1} parent=1 // pred_fallthru
      _
    %s4410 = sld [smem:[#allocation4]]
    %p4411 = scmp.eq.s32.totalorder %s4410, 0
    // Predicated region
    $region62: #{graph_cgls_forward.1} parent=1 // pred_check
      %p4412 = pneg %p4411
    $region63: #{graph_cgls_forward.1} parent=1 // pred_check_branch
      %4414 = sbr.rel (%p4412) target = $region65
    $region64: #{graph_cgls_forward.1} parent=1 // pred_region
      %v4415 = vld [vmem:[#allocation2] sm:$0xff]
      %v4416 = vld [vmem:[#allocation2 + $0x8] sm:$0xff]
      %v4417 = vld [vmem:[#allocation3] sm:$0x1]
      %v4418 = vld [vmem:[%s0] sm:$0xff]
      %v4419 = vld [vmem:[%s0 + $0x8] sm:$0xff]
      %v4421 = vsel %vm35, %v4418, 0
      %v4424 = vsel %vm35, %v4419, 0
      %4426 = vmatprep.subr.mxu0 0.0
      %4427 = vmatpush1.msra.mxu0 %v4415
      %4428 = vmatprep.subr.mxu0 0.0
      %4429 = vmatpush1.msra.mxu0 %v4416
      %4430 = vmatprep.subr.mxu0 0.0
      %4431 = vmatpush1.msra.mxu0 0.0
      %4432 = vmatprep.subr.mxu0 0.0
      %4433 = vmatpush1.msra.mxu0 0.0
      %4434 = vmatprep.subr.mxu0 0.0
      %4435 = vmatpush1.msra.mxu0 0.0
      %4436 = vmatprep.subr.mxu0 0.0
      %4437 = vmatpush1.msra.mxu0 0.0
      %4438 = vmatprep.subr.mxu0 0.0
      %4439 = vmatpush1.msra.mxu0 0.0
      %4440 = vmatprep.subr.mxu0 0.0
      %4441 = vmatpush1.msra.mxu0 0.0
      %4442 = vmatprep.subr.mxu0 0.0
      %4443 = vmatpush1.msra.mxu0 0.0
      %4444 = vmatprep.subr.mxu0 0.0
      %4445 = vmatpush1.msra.mxu0 0.0
      %4446 = vmatprep.subr.mxu0 0.0
      %4447 = vmatpush1.msra.mxu0 0.0
      %4448 = vmatprep.subr.mxu0 0.0
      %4449 = vmatpush1.msra.mxu0 0.0
      %4450 = vmatprep.subr.mxu0 0.0
      %4451 = vmatpush1.msra.mxu0 0.0
      %4452 = vmatprep.subr.mxu0 0.0
      %4453 = vmatpush1.msra.mxu0 0.0
      %4454 = vmatprep.subr.mxu0 0.0
      %4455 = vmatpush1.msra.mxu0 0.0
      %4456 = vmatprep.subr.mxu0 0.0
      %4457 = vmatpush1.msra.mxu0 0.0
      %4458 = vmatprep.subr.mxu0 0.0
      %4459 = vmatpush1.msra.mxu0 0.0
      %4460 = vmatprep.subr.mxu0 0.0
      %4461 = vmatpush1.msra.mxu0 0.0
      %4462 = vmatprep.subr.mxu0 0.0
      %4463 = vmatpush1.msra.mxu0 0.0
      %4464 = vmatprep.subr.mxu0 0.0
      %4465 = vmatpush1.msra.mxu0 0.0
      %4466 = vmatprep.subr.mxu0 0.0
      %4467 = vmatpush1.msra.mxu0 0.0
      %4468 = vmatprep.subr.mxu0 0.0
      %4469 = vmatpush1.msra.mxu0 0.0
      %4470 = vmatprep.subr.mxu0 0.0
      %4471 = vmatpush1.msra.mxu0 0.0
      %4472 = vmatprep.subr.mxu0 0.0
      %4473 = vmatpush1.msra.mxu0 0.0
      %4474 = vmatprep.subr.mxu0 0.0
      %4475 = vmatpush1.msra.mxu0 0.0
      %4476 = vmatprep.subr.mxu0 0.0
      %4477 = vmatpush1.msra.mxu0 0.0
      %4478 = vmatprep.subr.mxu0 0.0
      %4479 = vmatpush1.msra.mxu0 0.0
      %4480 = vmatprep.subr.mxu0 0.0
      %4481 = vmatpush1.msra.mxu0 0.0
      %4482 = vmatprep.subr.mxu0 0.0
      %4483 = vmatpush1.msra.mxu0 0.0
      %4484 = vmatprep.subr.mxu0 0.0
      %4485 = vmatpush1.msra.mxu0 0.0
      %4486 = vmatprep.subr.mxu0 0.0
      %4487 = vmatpush1.msra.mxu0 0.0
      %4488 = vmatprep.subr.mxu0 0.0
      %4489 = vmatpush1.msra.mxu0 0.0
      %4490 = vmatprep.mubr.f32.mxu0 0.0
      %4491 = vmatmul.mubr.f32.gmra.mrb[0].mxu0 %v4421
      %v4492 = vpop.f32.mrb[0].mxu0
      %v4493 = vadd.f32 0.0, %v4492
      %v4494 = vpop.f32.mrb[0].mxu0
      %4495 = vmatprep.mubr.f32.mxu0 0.0
      %4496 = vmatmul.mubr.f32.gmra.mrb[0].mxu0 %v4424
      %v4497 = vpop.f32.mrb[0].mxu0
      %v4498 = vadd.f32 0.0, %v4497
      %v4499 = vpop.f32.mrb[0].mxu0
      %4500 = vdwg.mxu0
      %v4501 = vld [vmem:[%s2] sm:$0xff]
      %v4502 = vld [vmem:[%s2 + $0x8] sm:$0xff]
      %v4503 = vld [vmem:[%s2 + $0x10] sm:$0xff]
      %v4504 = vld [vmem:[%s2 + $0x18] sm:$0xff]
      %v4505 = vld [vmem:[%s2 + $0x20] sm:$0xff]
      %v4506 = vld [vmem:[%s2 + $0x28] sm:$0xff]
      %v4507 = vld [vmem:[%s2 + $0x30] sm:$0xff]
      %v4508 = vld [vmem:[%s2 + $0x38] sm:$0xff]
      %v4509 = vld [vmem:[%s2 + $0x40] sm:$0xff]
      %v4510 = vld [vmem:[%s2 + $0x48] sm:$0xff]
      %v4511 = vld [vmem:[%s2 + $0x50] sm:$0xff]
      %v4512 = vld [vmem:[%s2 + $0x58] sm:$0xff]
      %v4513 = vld [vmem:[%s2 + $0x60] sm:$0xff]
      %v4514 = vld [vmem:[%s2 + $0x68] sm:$0xff]
      %v4515 = vld [vmem:[%s2 + $0x70] sm:$0xff]
      %v4516 = vld [vmem:[%s2 + $0x78] sm:$0xff]
      %4517 = vmatprep.subr.mxu0 0.0
      %4518 = vmatpush1.msra.mxu0 %v4501
      %4519 = vmatprep.subr.mxu0 0.0
      %4520 = vmatpush1.msra.mxu0 %v4502
      %4521 = vmatprep.subr.mxu0 0.0
      %4522 = vmatpush1.msra.mxu0 %v4503
      %4523 = vmatprep.subr.mxu0 0.0
      %4524 = vmatpush1.msra.mxu0 %v4504
      %4525 = vmatprep.subr.mxu0 0.0
      %4526 = vmatpush1.msra.mxu0 %v4505
      %4527 = vmatprep.subr.mxu0 0.0
      %4528 = vmatpush1.msra.mxu0 %v4506
      %4529 = vmatprep.subr.mxu0 0.0
      %4530 = vmatpush1.msra.mxu0 %v4507
      %4531 = vmatprep.subr.mxu0 0.0
      %4532 = vmatpush1.msra.mxu0 %v4508
      %4533 = vmatprep.subr.mxu0 0.0
      %4534 = vmatpush1.msra.mxu0 %v4509
      %4535 = vmatprep.subr.mxu0 0.0
      %4536 = vmatpush1.msra.mxu0 %v4510
      %4537 = vmatprep.subr.mxu0 0.0
      %4538 = vmatpush1.msra.mxu0 %v4511
      %4539 = vmatprep.subr.mxu0 0.0
      %4540 = vmatpush1.msra.mxu0 %v4512
      %4541 = vmatprep.subr.mxu0 0.0
      %4542 = vmatpush1.msra.mxu0 %v4513
      %4543 = vmatprep.subr.mxu0 0.0
      %4544 = vmatpush1.msra.mxu0 %v4514
      %4545 = vmatprep.subr.mxu0 0.0
      %4546 = vmatpush1.msra.mxu0 %v4515
      %4547 = vmatprep.subr.mxu0 0.0
      %4548 = vmatpush1.msra.mxu0 %v4516
      %4549 = vmatprep.subr.mxu0 0.0
      %4550 = vmatpush1.msra.mxu0 0.0
      %4551 = vmatprep.subr.mxu0 0.0
      %4552 = vmatpush1.msra.mxu0 0.0
      %4553 = vmatprep.subr.mxu0 0.0
      %4554 = vmatpush1.msra.mxu0 0.0
      %4555 = vmatprep.subr.mxu0 0.0
      %4556 = vmatpush1.msra.mxu0 0.0
      %4557 = vmatprep.subr.mxu0 0.0
      %4558 = vmatpush1.msra.mxu0 0.0
      %4559 = vmatprep.subr.mxu0 0.0
      %4560 = vmatpush1.msra.mxu0 0.0
      %4561 = vmatprep.subr.mxu0 0.0
      %4562 = vmatpush1.msra.mxu0 0.0
      %4563 = vmatprep.subr.mxu0 0.0
      %4564 = vmatpush1.msra.mxu0 0.0
      %4565 = vmatprep.subr.mxu0 0.0
      %4566 = vmatpush1.msra.mxu0 0.0
      %4567 = vmatprep.subr.mxu0 0.0
      %4568 = vmatpush1.msra.mxu0 0.0
      %4569 = vmatprep.subr.mxu0 0.0
      %4570 = vmatpush1.msra.mxu0 0.0
      %4571 = vmatprep.subr.mxu0 0.0
      %4572 = vmatpush1.msra.mxu0 0.0
      %4573 = vmatprep.subr.mxu0 0.0
      %4574 = vmatpush1.msra.mxu0 0.0
      %4575 = vmatprep.subr.mxu0 0.0
      %4576 = vmatpush1.msra.mxu0 0.0
      %4577 = vmatprep.subr.mxu0 0.0
      %4578 = vmatpush1.msra.mxu0 0.0
      %4579 = vmatprep.subr.mxu0 0.0
      %4580 = vmatpush1.msra.mxu0 0.0
      %4581 = vmatprep.mubr.f32.mxu0 0.0
      %4582 = vmatmul.mubr.f32.gmra.mrb[0].mxu0 %v4493
      %v4583 = vpop.f32.mrb[0].mxu0
      %v4584 = vadd.f32 0.0, %v4583
      %v4585 = vpop.f32.mrb[0].mxu0
      %4586 = vmatprep.mubr.f32.mxu0 0.0
      %4587 = vmatmul.mubr.f32.gmra.mrb[0].mxu0 %v4498
      %v4588 = vpop.f32.mrb[0].mxu0
      %v4589 = vadd.f32 0.0, %v4588
      %v4590 = vpop.f32.mrb[0].mxu0
      %4591 = vdwg.mxu0
      %v4592 = vmul.f32 %v4584, %v4584
      %v4593 = vmul.f32 %v4589, %v4589
      %v4594 = vadd.f32 %v4592, %v4593
      %4595 = vadd.xlane.f32.xlu0 %v4594
      %v4596 = vpop.xlane.xlu0 %4595
      %v4597 = vrot.slane %v4596, 4
      %v4598 = vadd.f32 %v4596, %v4597
      %v4599 = vrot.slane %v4598, 2
      %v4600 = vadd.f32 %v4598, %v4599
      %v4601 = vrot.slane %v4600, 1
      %v4602 = vadd.f32 %v4600, %v4601
      %s4603 = vtos %v4602
      %v4604 = vstv %s4603
      %v4605 = vrcp.pop %v4604
      %v4606 = vmul.f32 %v4417, %v4605
      %v4607 = vld [vmem:[#allocation5] sm:$0xff]
      %v4608 = vld [vmem:[#allocation5 + $0x8] sm:$0xff]
      %v4610 = vlaneseq
      %v4611 = vshrl.u32 %v4610, 7
      %v4612 = vsub.s32 0, %v4611
      %v4613 = vrot.slane %v4606, %v4612
      %4614 = vset.pattern.permute.xlu0 0
      %4615 = vperm.xlu0 %4614, %v4613
      %v4616 = vpop.permute.xlu0 %4615
      %v4618 = vmul.f32 %v4616, %v4415
      %v4619 = vmul.f32 %v4616, %v4416
      %v4620 = vadd.f32 %v4607, %v4618
      %v4621 = vadd.f32 %v4608, %v4619
      %4622 = vst [vmem:[#allocation5] sm:$0xff] %v4620
      %4623 = vst [vmem:[#allocation5 + $0x8] sm:$0xff] %v4621
      %v4624 = vld [vmem:[#allocation7] sm:$0xff]
      %v4625 = vld [vmem:[#allocation7 + $0x8] sm:$0xff]
      %v4626 = vmul.f32 %v4616, %v4584
      %v4627 = vmul.f32 %v4616, %v4589
      %v4628 = vsub.f32 %v4624, %v4626
      %v4629 = vsub.f32 %v4625, %v4627
      %4630 = vst [vmem:[#allocation7] sm:$0xff] %v4628
      %4631 = vst [vmem:[#allocation7 + $0x8] sm:$0xff] %v4629
      %v4632 = vld [vmem:[%s1] sm:$0xff]
      %v4633 = vld [vmem:[%s1 + $0x8] sm:$0xff]
      %v4635 = vsel %vm35, %v4632, 0
      %v4638 = vsel %vm35, %v4633, 0
      %4640 = vmatprep.subr.mxu0 0.0
      %4641 = vmatpush1.msra.mxu0 %v4628
      %4642 = vmatprep.subr.mxu0 0.0
      %4643 = vmatpush1.msra.mxu0 %v4629
      %4644 = vmatprep.subr.mxu0 0.0
      %4645 = vmatpush1.msra.mxu0 0.0
      %4646 = vmatprep.subr.mxu0 0.0
      %4647 = vmatpush1.msra.mxu0 0.0
      %4648 = vmatprep.subr.mxu0 0.0
      %4649 = vmatpush1.msra.mxu0 0.0
      %4650 = vmatprep.subr.mxu0 0.0
      %4651 = vmatpush1.msra.mxu0 0.0
      %4652 = vmatprep.subr.mxu0 0.0
      %4653 = vmatpush1.msra.mxu0 0.0
      %4654 = vmatprep.subr.mxu0 0.0
      %4655 = vmatpush1.msra.mxu0 0.0
      %4656 = vmatprep.subr.mxu0 0.0
      %4657 = vmatpush1.msra.mxu0 0.0
      %4658 = vmatprep.subr.mxu0 0.0
      %4659 = vmatpush1.msra.mxu0 0.0
      %4660 = vmatprep.subr.mxu0 0.0
      %4661 = vmatpush1.msra.mxu0 0.0
      %4662 = vmatprep.subr.mxu0 0.0
      %4663 = vmatpush1.msra.mxu0 0.0
      %4664 = vmatprep.subr.mxu0 0.0
      %4665 = vmatpush1.msra.mxu0 0.0
      %4666 = vmatprep.subr.mxu0 0.0
      %4667 = vmatpush1.msra.mxu0 0.0
      %4668 = vmatprep.subr.mxu0 0.0
      %4669 = vmatpush1.msra.mxu0 0.0
      %4670 = vmatprep.subr.mxu0 0.0
      %4671 = vmatpush1.msra.mxu0 0.0
      %4672 = vmatprep.subr.mxu0 0.0
      %4673 = vmatpush1.msra.mxu0 0.0
      %4674 = vmatprep.subr.mxu0 0.0
      %4675 = vmatpush1.msra.mxu0 0.0
      %4676 = vmatprep.subr.mxu0 0.0
      %4677 = vmatpush1.msra.mxu0 0.0
      %4678 = vmatprep.subr.mxu0 0.0
      %4679 = vmatpush1.msra.mxu0 0.0
      %4680 = vmatprep.subr.mxu0 0.0
      %4681 = vmatpush1.msra.mxu0 0.0
      %4682 = vmatprep.subr.mxu0 0.0
      %4683 = vmatpush1.msra.mxu0 0.0
      %4684 = vmatprep.subr.mxu0 0.0
      %4685 = vmatpush1.msra.mxu0 0.0
      %4686 = vmatprep.subr.mxu0 0.0
      %4687 = vmatpush1.msra.mxu0 0.0
      %4688 = vmatprep.subr.mxu0 0.0
      %4689 = vmatpush1.msra.mxu0 0.0
      %4690 = vmatprep.subr.mxu0 0.0
      %4691 = vmatpush1.msra.mxu0 0.0
      %4692 = vmatprep.subr.mxu0 0.0
      %4693 = vmatpush1.msra.mxu0 0.0
      %4694 = vmatprep.subr.mxu0 0.0
      %4695 = vmatpush1.msra.mxu0 0.0
      %4696 = vmatprep.subr.mxu0 0.0
      %4697 = vmatpush1.msra.mxu0 0.0
      %4698 = vmatprep.subr.mxu0 0.0
      %4699 = vmatpush1.msra.mxu0 0.0
      %4700 = vmatprep.subr.mxu0 0.0
      %4701 = vmatpush1.msra.mxu0 0.0
      %4702 = vmatprep.subr.mxu0 0.0
      %4703 = vmatpush1.msra.mxu0 0.0
      %4704 = vmatprep.mubr.f32.mxu0 0.0
      %4705 = vmatmul.mubr.f32.gmra.mrb[0].mxu0 %v4635
      %v4706 = vpop.f32.mrb[0].mxu0
      %v4707 = vadd.f32 0.0, %v4706
      %v4708 = vpop.f32.mrb[0].mxu0
      %4709 = vmatprep.mubr.f32.mxu0 0.0
      %4710 = vmatmul.mubr.f32.gmra.mrb[0].mxu0 %v4638
      %v4711 = vpop.f32.mrb[0].mxu0
      %v4712 = vadd.f32 0.0, %v4711
      %v4713 = vpop.f32.mrb[0].mxu0
      %4714 = vdwg.mxu0
      %v4715 = vld [vmem:[%s3] sm:$0xff]
      %v4716 = vld [vmem:[%s3 + $0x8] sm:$0xff]
      %v4717 = vld [vmem:[%s3 + $0x10] sm:$0xff]
      %v4718 = vld [vmem:[%s3 + $0x18] sm:$0xff]
      %v4719 = vld [vmem:[%s3 + $0x20] sm:$0xff]
      %v4720 = vld [vmem:[%s3 + $0x28] sm:$0xff]
      %v4721 = vld [vmem:[%s3 + $0x30] sm:$0xff]
      %v4722 = vld [vmem:[%s3 + $0x38] sm:$0xff]
      %v4723 = vld [vmem:[%s3 + $0x40] sm:$0xff]
      %v4724 = vld [vmem:[%s3 + $0x48] sm:$0xff]
      %v4725 = vld [vmem:[%s3 + $0x50] sm:$0xff]
      %v4726 = vld [vmem:[%s3 + $0x58] sm:$0xff]
      %v4727 = vld [vmem:[%s3 + $0x60] sm:$0xff]
      %v4728 = vld [vmem:[%s3 + $0x68] sm:$0xff]
      %v4729 = vld [vmem:[%s3 + $0x70] sm:$0xff]
      %v4730 = vld [vmem:[%s3 + $0x78] sm:$0xff]
      %4731 = vmatprep.subr.mxu0 0.0
      %4732 = vmatpush1.msra.mxu0 %v4715
      %4733 = vmatprep.subr.mxu0 0.0
      %4734 = vmatpush1.msra.mxu0 %v4716
      %4735 = vmatprep.subr.mxu0 0.0
      %4736 = vmatpush1.msra.mxu0 %v4717
      %4737 = vmatprep.subr.mxu0 0.0
      %4738 = vmatpush1.msra.mxu0 %v4718
      %4739 = vmatprep.subr.mxu0 0.0
      %4740 = vmatpush1.msra.mxu0 %v4719
      %4741 = vmatprep.subr.mxu0 0.0
      %4742 = vmatpush1.msra.mxu0 %v4720
      %4743 = vmatprep.subr.mxu0 0.0
      %4744 = vmatpush1.msra.mxu0 %v4721
      %4745 = vmatprep.subr.mxu0 0.0
      %4746 = vmatpush1.msra.mxu0 %v4722
      %4747 = vmatprep.subr.mxu0 0.0
      %4748 = vmatpush1.msra.mxu0 %v4723
      %4749 = vmatprep.subr.mxu0 0.0
      %4750 = vmatpush1.msra.mxu0 %v4724
      %4751 = vmatprep.subr.mxu0 0.0
      %4752 = vmatpush1.msra.mxu0 %v4725
      %4753 = vmatprep.subr.mxu0 0.0
      %4754 = vmatpush1.msra.mxu0 %v4726
      %4755 = vmatprep.subr.mxu0 0.0
      %4756 = vmatpush1.msra.mxu0 %v4727
      %4757 = vmatprep.subr.mxu0 0.0
      %4758 = vmatpush1.msra.mxu0 %v4728
      %4759 = vmatprep.subr.mxu0 0.0
      %4760 = vmatpush1.msra.mxu0 %v4729
      %4761 = vmatprep.subr.mxu0 0.0
      %4762 = vmatpush1.msra.mxu0 %v4730
      %4763 = vmatprep.subr.mxu0 0.0
      %4764 = vmatpush1.msra.mxu0 0.0
      %4765 = vmatprep.subr.mxu0 0.0
      %4766 = vmatpush1.msra.mxu0 0.0
      %4767 = vmatprep.subr.mxu0 0.0
      %4768 = vmatpush1.msra.mxu0 0.0
      %4769 = vmatprep.subr.mxu0 0.0
      %4770 = vmatpush1.msra.mxu0 0.0
      %4771 = vmatprep.subr.mxu0 0.0
      %4772 = vmatpush1.msra.mxu0 0.0
      %4773 = vmatprep.subr.mxu0 0.0
      %4774 = vmatpush1.msra.mxu0 0.0
      %4775 = vmatprep.subr.mxu0 0.0
      %4776 = vmatpush1.msra.mxu0 0.0
      %4777 = vmatprep.subr.mxu0 0.0
      %4778 = vmatpush1.msra.mxu0 0.0
      %4779 = vmatprep.subr.mxu0 0.0
      %4780 = vmatpush1.msra.mxu0 0.0
      %4781 = vmatprep.subr.mxu0 0.0
      %4782 = vmatpush1.msra.mxu0 0.0
      %4783 = vmatprep.subr.mxu0 0.0
      %4784 = vmatpush1.msra.mxu0 0.0
      %4785 = vmatprep.subr.mxu0 0.0
      %4786 = vmatpush1.msra.mxu0 0.0
      %4787 = vmatprep.subr.mxu0 0.0
      %4788 = vmatpush1.msra.mxu0 0.0
      %4789 = vmatprep.subr.mxu0 0.0
      %4790 = vmatpush1.msra.mxu0 0.0
      %4791 = vmatprep.subr.mxu0 0.0
      %4792 = vmatpush1.msra.mxu0 0.0
      %4793 = vmatprep.subr.mxu0 0.0
      %4794 = vmatpush1.msra.mxu0 0.0
      %4795 = vmatprep.mubr.f32.mxu0 0.0
      %4796 = vmatmul.mubr.f32.gmra.mrb[0].mxu0 %v4707
      %v4797 = vpop.f32.mrb[0].mxu0
      %v4798 = vadd.f32 0.0, %v4797
      %v4799 = vpop.f32.mrb[0].mxu0
      %4800 = vmatprep.mubr.f32.mxu0 0.0
      %4801 = vmatmul.mubr.f32.gmra.mrb[0].mxu0 %v4712
      %v4802 = vpop.f32.mrb[0].mxu0
      %v4803 = vadd.f32 0.0, %v4802
      %v4804 = vpop.f32.mrb[0].mxu0
      %4805 = vdwg.mxu0
      %v4806 = vmul.f32 %v4798, %v4798
      %v4807 = vmul.f32 %v4803, %v4803
      %v4808 = vadd.f32 %v4806, %v4807
      %4809 = vadd.xlane.f32.xlu0 %v4808
      %v4810 = vpop.xlane.xlu0 %4809
      %v4811 = vrot.slane %v4810, 4
      %v4812 = vadd.f32 %v4810, %v4811
      %v4813 = vrot.slane %v4812, 2
      %v4814 = vadd.f32 %v4812, %v4813
      %v4815 = vrot.slane %v4814, 1
      %v4816 = vadd.f32 %v4814, %v4815
      %s4817 = vtos %v4816
      %v4818 = vstv %s4817
      %v4819 = vrcp.pop %v4417
      %v4820 = vmul.f32 %v4818, %v4819
      %v4822 = vlaneseq
      %v4823 = vshrl.u32 %v4822, 7
      %v4824 = vsub.s32 0, %v4823
      %v4825 = vrot.slane %v4820, %v4824
      %4826 = vset.pattern.permute.xlu0 0
      %4827 = vperm.xlu0 %4826, %v4825
      %v4828 = vpop.permute.xlu0 %4827
      %v4830 = vmul.f32 %v4828, %v4415
      %v4831 = vmul.f32 %v4828, %v4416
      %v4832 = vadd.f32 %v4798, %v4830
      %v4833 = vadd.f32 %v4803, %v4831
      %4834 = vst [vmem:[#allocation2] sm:$0xff] %v4832
      %4835 = vst [vmem:[#allocation2 + $0x8] sm:$0xff] %v4833
      %4836 = vst.msk [vmem:[#allocation3] sm:$0x1] %vm430, %v4818
      %v4837 = vmul.f32 %v4628, %v4628
      %v4838 = vmul.f32 %v4629, %v4629
      %v4839 = vadd.f32 %v4837, %v4838
      %4840 = vadd.xlane.f32.xlu0 %v4839
      %v4841 = vpop.xlane.xlu0 %4840
      %v4842 = vrot.slane %v4841, 4
      %v4843 = vadd.f32 %v4841, %v4842
      %v4844 = vrot.slane %v4843, 2
      %v4845 = vadd.f32 %v4843, %v4844
      %v4846 = vrot.slane %v4845, 1
      %v4847 = vadd.f32 %v4845, %v4846
      %s4848 = vtos %v4847
      %p4849 = scmp.lt.f32.partialorder %s4848, %s224
      %s4850 = scalar_select %p4849, 1, 0
      %4851 = sst [smem:[%s239]] %s4850
    $region65: #{graph_cgls_forward.1} parent=1 // pred_fallthru
      _
    // Predicated region
    $region66: #{graph_cgls_forward.1} parent=1 // pred_check
      _
    $region67: #{graph_cgls_forward.1} parent=1 // pred_check_branch
      %4853 = sbr.rel (0) target = $region69
    $region68: #{graph_cgls_forward.1} parent=1 // pred_region
      %s4855 = ssub.s32 256, 256
      %4856 = vsyncadd [#allocation6], %s4855
      %s4857 = sshll.u32 [#allocation5], 4
      %s4858 = int_to_ptr.vmem [resolvable:$true] %s4857
      %4863 = dma.vmem_to_hbm [thread:$0]  %s4858, 256, %s6, [#allocation6], 128, 128, 8
    $region69: #{graph_cgls_forward.1} parent=1 // pred_fallthru
      _
    // Predicated region
    $region70: #{graph_cgls_forward.1} parent=1 // pred_check
      _
    $region71: #{graph_cgls_forward.1} parent=1 // pred_check_branch
      %4865 = sbr.rel (0) target = $region73
    $region72: #{graph_cgls_forward.1} parent=1 // pred_region
      %s4867 = ssub.s32 256, 256
      %4868 = vsyncadd [#allocation8], %s4867
      %s4869 = sshll.u32 [#allocation7], 4
      %s4870 = int_to_ptr.vmem [resolvable:$true] %s4869
      %4875 = dma.vmem_to_hbm [thread:$0]  %s4870, 256, %s7, [#allocation8], 128, 128, 8
    $region73: #{graph_cgls_forward.1} parent=1 // pred_fallthru
      _
    // Predicated region
    $region74: #{graph_cgls_forward.1} parent=1 // pred_check
      _
    $region75: #{graph_cgls_forward.1} parent=1 // pred_check_branch
      %4877 = sbr.rel (0) target = $region77
    $region76: #{graph_cgls_forward.1} parent=1 // pred_region
      %4878 = dma.done [#allocation6], 256
    $region77: #{graph_cgls_forward.1} parent=1 // pred_fallthru
      _
    // Predicated region
    $region78: #{graph_cgls_forward.1} parent=1 // pred_check
      _
    $region79: #{graph_cgls_forward.1} parent=1 // pred_check_branch
      %4880 = sbr.rel (0) target = $region81
    $region80: #{graph_cgls_forward.1} parent=1 // pred_region
      %4881 = dma.done [#allocation8], 256
    $region81: #{graph_cgls_forward.1} parent=1 // pred_fallthru
      _
    %4882 = vsyncpa [#allocation6], 1
    %4883 = vsyncpa [#allocation8], 1

</llo_original>
